<compile_context>
chip_gen: v7x
topology: tpu7x:2x2x1
jax: 0.10.0
libtpu: 0.0.40
codegen_flags: <defaults>
</compile_context>

<pallas_src>
import functools

import jax
import jax.numpy as jnp
from jax.experimental import pallas as pl
from jax.experimental.pallas import tpu as pltpu


def _round_up(x, m):
    return (x + m - 1) // m * m


# -----------------------------------------------------------------------------
# Fused kernel: 3x3 conv (stride 1, pad 1) + ReLU + global-avg-pool + MLP head.
# TB images per grid step.
#
#   x_ref    : (TB, NPIX_PAD, CIN_PAD) f32   flattened zero-padded image pixels
#   pool_ref : (HWP, 1)                f32   {1/(H*W), 0} pool/mask vector
#   cw_ref   : (9*CIN_PAD, F_PAD)      bf16  K-stacked conv taps
#   cb_ref   : (1, F_PAD)              f32
#   w1_ref   : (F_PAD, F_PAD)          bf16
#   b1_ref   : (1, F_PAD)              f32
#   w2_ref   : (F_PAD, P_PAD)          bf16
#   b2_ref   : (1, P_PAD)              f32
#   h_ref    : (TB, F_PAD)             f32   encoder features (pre-projection)
#   z_ref    : (TB, P_PAD)             f32   projection-head output
# -----------------------------------------------------------------------------
def _simclr_fused_kernel(x_ref, pool_ref, cw_ref, cb_ref, w1_ref, b1_ref,
                         w2_ref, b2_ref, h_ref, z_ref, *, W, HWP, TB):
    wp = W + 2                           # padded image width
    cin = x_ref.shape[-1]
    f_pad = cw_ref.shape[-1]

    # ---- im2col: 9 shifted slabs -> one K-stacked slab, cast to bf16 once ---
    slabs = []
    for tap in range(9):
        dy, dx = tap // 3, tap % 3
        shift = dy * wp + dx                                 # static offset
        slabs.append(x_ref[:, shift:shift + HWP, :])         # (TB, HWP, cin)
    patches = jnp.concatenate(slabs, axis=-1)                # (TB, HWP, 9*cin)
    patches = patches.reshape(TB * HWP, 9 * cin).astype(jnp.bfloat16)

    # ---- conv as ONE K=9*cin matmul, f32 accumulation on the MXU ------------
    acc = jnp.dot(patches, cw_ref[...], preferred_element_type=jnp.float32)
    acc = jnp.maximum(acc + cb_ref[...], 0.0)                # bias + ReLU (f32)

    # ---- global average pool: precomputed mask/scale vector, sublane reduce -
    feats = jnp.sum(acc.reshape(TB, HWP, f_pad) * pool_ref[...][None], axis=1)

    # ---- projection head: Linear -> ReLU -> Linear, M = TB rows -------------
    a = jnp.dot(feats.astype(jnp.bfloat16), w1_ref[...],
                preferred_element_type=jnp.float32) + b1_ref[...]
    a = jnp.maximum(a, 0.0)
    z = jnp.dot(a.astype(jnp.bfloat16), w2_ref[...],
                preferred_element_type=jnp.float32) + b2_ref[...]

    h_ref[...] = feats
    z_ref[...] = z.astype(z_ref.dtype)


# -----------------------------------------------------------------------------
# Wrapper: layout glue (NCHW -> flattened padded NHWC pixels) + pallas_call.
# -----------------------------------------------------------------------------
def simclr_forward_fused(x_nchw, params, *, num_ftrs, projection_dim, tb=8):
    B, c_in, H, W = x_nchw.shape
    cw, cb = params["conv_w"], params["conv_b"]
    w1, b1 = params["w1"], params["b1"]
    w2, b2 = params["w2"], params["b2"]
    cin_pad, f_pad = cw.shape[1], cw.shape[2]
    p_pad = w2.shape[1]

    wp = W + 2
    hwp = H * wp                        # rows of the per-image conv matmul
    npix = (H + 2) * wp                 # flattened padded image length
    npix_pad = _round_up(npix + 2, 8)
    # Largest shifted slab (dy=2, dx=2) must stay in-bounds: VMEM reads are
    # NOT bounds-checked, so make the margin a hard static requirement.
    assert 2 * wp + 2 + hwp <= npix_pad

    TB = min(tb, B)                     # batch tile (M rows of the MLP matmuls)
    b_pad = _round_up(B, TB)
    n_steps = b_pad // TB

    # Plain-JAX glue: NCHW -> NHWC, zero-pad spatial by 1 and channels to
    # cin_pad, flatten the (H+2, W+2) pixels, pad pixel axis and batch axis.
    x = jnp.transpose(x_nchw, (0, 2, 3, 1))
    x = jnp.pad(x, ((0, 0), (1, 1), (1, 1), (0, cin_pad - c_in)))
    x = x.reshape(B, npix, cin_pad)
    x = jnp.pad(x, ((0, b_pad - B), (0, npix_pad - npix), (0, 0)))

    # K-stacked conv weight: (9, cin_pad, f_pad) -> (9*cin_pad, f_pad).
    cw_k = cw.reshape(9 * cin_pad, f_pad)

    # Pooling vector: 1/(H*W) on valid columns, 0 on wrapped columns.
    col = jnp.arange(hwp, dtype=jnp.int32) % wp
    pool = jnp.where(col < W, 1.0 / float(H * W), 0.0).astype(jnp.float32)
    pool = pool.reshape(hwp, 1)

    kernel = functools.partial(_simclr_fused_kernel, W=W, HWP=hwp, TB=TB)

    h_pad, z_pad = pl.pallas_call(
        kernel,
        out_shape=(
            jax.ShapeDtypeStruct((b_pad, f_pad), jnp.float32),
            jax.ShapeDtypeStruct((b_pad, p_pad), jnp.float32),
        ),
        grid_spec=pltpu.PrefetchScalarGridSpec(
            num_scalar_prefetch=0,
            grid=(n_steps,),
            in_specs=[
                pl.BlockSpec((TB, npix_pad, cin_pad), lambda b: (b, 0, 0)),
                pl.BlockSpec((hwp, 1), lambda b: (0, 0)),
                pl.BlockSpec((9 * cin_pad, f_pad), lambda b: (0, 0)),
                pl.BlockSpec((1, f_pad), lambda b: (0, 0)),
                pl.BlockSpec((f_pad, f_pad), lambda b: (0, 0)),
                pl.BlockSpec((1, f_pad), lambda b: (0, 0)),
                pl.BlockSpec((f_pad, p_pad), lambda b: (0, 0)),
                pl.BlockSpec((1, p_pad), lambda b: (0, 0)),
            ],
            out_specs=(
                pl.BlockSpec((TB, f_pad), lambda b: (b, 0)),
                pl.BlockSpec((TB, p_pad), lambda b: (b, 0)),
            ),
        ),
        compiler_params=pltpu.CompilerParams(
            dimension_semantics=("parallel",),
            vmem_limit_bytes=32 * 1024 * 1024,
        ),
    )(x, pool, cw_k, cb, w1, b1, w2, b2)

    h = h_pad[:B, :num_ftrs]
    z = z_pad[:B, :projection_dim]
    return h, z


# -----------------------------------------------------------------------------
# Parameters: padded to lane-dense shapes, matmul weights stored in bf16.
# TODO(synk): the arbitrary torchvision base_model backbone (e.g. ResNet) is
# represented by this single-conv synthetic stem, not a full residual network.
# -----------------------------------------------------------------------------
def init_params(key, c_in, num_ftrs, projection_dim):
    cin_pad = _round_up(max(c_in, 8), 8)
    f_pad = _round_up(num_ftrs, 128)
    p_pad = _round_up(projection_dim, 128)
    k1, k2, k3, k4, k5, k6 = jax.random.split(key, 6)

    conv_w = jnp.zeros((9, cin_pad, f_pad), jnp.float32).at[:, :c_in, :num_ftrs].set(
        0.05 * jax.random.normal(k1, (9, c_in, num_ftrs), jnp.float32))
    conv_b = jnp.zeros((1, f_pad), jnp.float32).at[:, :num_ftrs].set(
        0.01 * jax.random.normal(k2, (1, num_ftrs), jnp.float32))
    w1 = jnp.zeros((f_pad, f_pad), jnp.float32).at[:num_ftrs, :num_ftrs].set(
        0.05 * jax.random.normal(k3, (num_ftrs, num_ftrs), jnp.float32))
    b1 = jnp.zeros((1, f_pad), jnp.float32).at[:, :num_ftrs].set(
        0.01 * jax.random.normal(k4, (1, num_ftrs), jnp.float32))
    w2 = jnp.zeros((f_pad, p_pad), jnp.float32).at[:num_ftrs, :projection_dim].set(
        0.05 * jax.random.normal(k5, (num_ftrs, projection_dim), jnp.float32))
    b2 = jnp.zeros((1, p_pad), jnp.float32).at[:, :projection_dim].set(
        0.01 * jax.random.normal(k6, (1, projection_dim), jnp.float32))

    return dict(conv_w=conv_w.astype(jnp.bfloat16), conv_b=conv_b,
                w1=w1.astype(jnp.bfloat16), b1=b1,
                w2=w2.astype(jnp.bfloat16), b2=b2)


# -----------------------------------------------------------------------------
# Pure-JAX reference (mirrors the kernel's bf16 operand quantization).
# -----------------------------------------------------------------------------
def simclr_reference(x_nchw, params, *, num_ftrs, projection_dim):
    B, c_in, H, W = x_nchw.shape
    cw = params["conv_w"].astype(jnp.float32)
    cin_pad, f_pad = cw.shape[1], cw.shape[2]

    x = jnp.transpose(x_nchw, (0, 2, 3, 1))
    x = x.astype(jnp.bfloat16).astype(jnp.float32)
    x = jnp.pad(x, ((0, 0), (1, 1), (1, 1), (0, cin_pad - c_in)))

    acc = jnp.zeros((B, H, W, f_pad), jnp.float32)
    for dy in range(3):
        for dx in range(3):
            acc = acc + jnp.einsum("bhwc,cf->bhwf",
                                   x[:, dy:dy + H, dx:dx + W, :],
                                   cw[dy * 3 + dx])
    acc = jnp.maximum(acc + params["conv_b"][0], 0.0)
    h = jnp.mean(acc, axis=(1, 2))                                  # (B, f_pad)

    a = jnp.maximum(h.astype(jnp.bfloat16).astype(jnp.float32)
                    @ params["w1"].astype(jnp.float32) + params["b1"], 0.0)
    z = (a.astype(jnp.bfloat16).astype(jnp.float32)
         @ params["w2"].astype(jnp.float32) + params["b2"])
    return h[:, :num_ftrs], z[:, :projection_dim]


if __name__ == "__main__":
    key = jax.random.PRNGKey(0)
    k_x, k_p = jax.random.split(key)

    B, C_IN, H, W = 2, 4, 16, 16       # small synthetic image batch (NCHW)
    NUM_FTRS = 128                     # encoder feature width (num_ftrs)
    PROJECTION_DIM = 128               # Config.projection_dim

    x = jax.random.normal(k_x, (B, C_IN, H, W), jnp.float32)
    params = init_params(k_p, C_IN, NUM_FTRS, PROJECTION_DIM)

    fwd = jax.jit(functools.partial(simclr_forward_fused,
                                    num_ftrs=NUM_FTRS,
                                    projection_dim=PROJECTION_DIM))
    h_out, z_out = fwd(x, params)
    jax.block_until_ready((h_out, z_out))

    assert h_out.shape == (B, NUM_FTRS)
    assert z_out.shape == (B, PROJECTION_DIM)

    h_ref, z_ref = simclr_reference(x, params, num_ftrs=NUM_FTRS,
                                    projection_dim=PROJECTION_DIM)
    assert jnp.allclose(h_out, h_ref, atol=1e-2, rtol=1e-2)
    assert jnp.allclose(z_out, z_ref, atol=1e-2, rtol=1e-2)

    print("KERNEL_OK")
</pallas_src>

<mosaic_0001>
module attributes {stable_mosaic.version = 11 : i64} {
  func.func @_simclr_fused_kernel(%arg0: i32, %arg1: memref<2x328x8xf32, #tpu.memory_space<vmem>>, %arg2: memref<288x1xf32, #tpu.memory_space<vmem>>, %arg3: memref<72x128xbf16, #tpu.memory_space<vmem>>, %arg4: memref<1x128xf32, #tpu.memory_space<vmem>>, %arg5: memref<128x128xbf16, #tpu.memory_space<vmem>>, %arg6: memref<1x128xf32, #tpu.memory_space<vmem>>, %arg7: memref<128x128xbf16, #tpu.memory_space<vmem>>, %arg8: memref<1x128xf32, #tpu.memory_space<vmem>>, %arg9: memref<2x128xf32, #tpu.memory_space<vmem>>, %arg10: memref<2x128xf32, #tpu.memory_space<vmem>>) attributes {dimension_semantics = [#tpu.dimension_semantics<parallel>], iteration_bounds = array<i64: 1>, scalar_prefetch = 0 : i64, scratch_operands = 0 : i64, tpu.core_type = #tpu.core_type<tc>, window_params = [{transform_indices = @transform_0, window_bounds = array<i64: 2, 328, 8>}, {pipeline_mode = #tpu.pipeline_mode<synchronous>, transform_indices = @transform_1, window_bounds = array<i64: 288, 1>}, {pipeline_mode = #tpu.pipeline_mode<synchronous>, transform_indices = @transform_2, window_bounds = array<i64: 72, 128>}, {pipeline_mode = #tpu.pipeline_mode<synchronous>, transform_indices = @transform_3, window_bounds = array<i64: 1, 128>}, {pipeline_mode = #tpu.pipeline_mode<synchronous>, transform_indices = @transform_4, window_bounds = array<i64: 128, 128>}, {pipeline_mode = #tpu.pipeline_mode<synchronous>, transform_indices = @transform_5, window_bounds = array<i64: 1, 128>}, {pipeline_mode = #tpu.pipeline_mode<synchronous>, transform_indices = @transform_6, window_bounds = array<i64: 128, 128>}, {pipeline_mode = #tpu.pipeline_mode<synchronous>, transform_indices = @transform_7, window_bounds = array<i64: 1, 128>}, {transform_indices = @transform_8, window_bounds = array<i64: 2, 128>}, {transform_indices = @transform_9, window_bounds = array<i64: 2, 128>}]} {
    %c0 = arith.constant 0 : index
    %c0_0 = arith.constant 0 : index
    %c0_1 = arith.constant 0 : index
    %0 = vector.load %arg1[%c0, %c0_0, %c0_1] : memref<2x328x8xf32, #tpu.memory_space<vmem>>, vector<2x288x8xf32>
    %c0_2 = arith.constant 0 : index
    %c1 = arith.constant 1 : index
    %c0_3 = arith.constant 0 : index
    %1 = vector.load %arg1[%c0_2, %c1, %c0_3] : memref<2x328x8xf32, #tpu.memory_space<vmem>>, vector<2x288x8xf32>
    %c0_4 = arith.constant 0 : index
    %c2 = arith.constant 2 : index
    %c0_5 = arith.constant 0 : index
    %2 = vector.load %arg1[%c0_4, %c2, %c0_5] : memref<2x328x8xf32, #tpu.memory_space<vmem>>, vector<2x288x8xf32>
    %c0_6 = arith.constant 0 : index
    %c18 = arith.constant 18 : index
    %c0_7 = arith.constant 0 : index
    %3 = vector.load %arg1[%c0_6, %c18, %c0_7] : memref<2x328x8xf32, #tpu.memory_space<vmem>>, vector<2x288x8xf32>
    %c0_8 = arith.constant 0 : index
    %c19 = arith.constant 19 : index
    %c0_9 = arith.constant 0 : index
    %4 = vector.load %arg1[%c0_8, %c19, %c0_9] : memref<2x328x8xf32, #tpu.memory_space<vmem>>, vector<2x288x8xf32>
    %c0_10 = arith.constant 0 : index
    %c20 = arith.constant 20 : index
    %c0_11 = arith.constant 0 : index
    %5 = vector.load %arg1[%c0_10, %c20, %c0_11] : memref<2x328x8xf32, #tpu.memory_space<vmem>>, vector<2x288x8xf32>
    %c0_12 = arith.constant 0 : index
    %c36 = arith.constant 36 : index
    %c0_13 = arith.constant 0 : index
    %6 = vector.load %arg1[%c0_12, %c36, %c0_13] : memref<2x328x8xf32, #tpu.memory_space<vmem>>, vector<2x288x8xf32>
    %c0_14 = arith.constant 0 : index
    %c37 = arith.constant 37 : index
    %c0_15 = arith.constant 0 : index
    %7 = vector.load %arg1[%c0_14, %c37, %c0_15] : memref<2x328x8xf32, #tpu.memory_space<vmem>>, vector<2x288x8xf32>
    %c0_16 = arith.constant 0 : index
    %c38 = arith.constant 38 : index
    %c0_17 = arith.constant 0 : index
    %8 = vector.load %arg1[%c0_16, %c38, %c0_17] : memref<2x328x8xf32, #tpu.memory_space<vmem>>, vector<2x288x8xf32>
    %9 = tpu.concatenate %0, %1, %2, %3, %4, %5, %6, %7, %8 in 2 : vector<2x288x8xf32>, vector<2x288x8xf32>, vector<2x288x8xf32>, vector<2x288x8xf32>, vector<2x288x8xf32>, vector<2x288x8xf32>, vector<2x288x8xf32>, vector<2x288x8xf32>, vector<2x288x8xf32> -> vector<2x288x72xf32>
    %10 = vector.shape_cast %9 : vector<2x288x72xf32> to vector<576x72xf32>
    %11 = arith.truncf %10 : vector<576x72xf32> to vector<576x72xbf16>
    %c0_18 = arith.constant 0 : index
    %c0_19 = arith.constant 0 : index
    %12 = vector.load %arg3[%c0_18, %c0_19] : memref<72x128xbf16, #tpu.memory_space<vmem>>, vector<72x128xbf16>
    %cst = arith.constant dense<0.000000e+00> : vector<576x128xf32>
    %13 = tpu.matmul %11, %12, %cst {dimension_numbers = #tpu.dot_dimension_numbers<[1], [0], [0], [1], [0, 0, 1, 1], [], []>} : vector<576x72xbf16>, vector<72x128xbf16>, vector<576x128xf32> -> vector<576x128xf32>
    %c0_20 = arith.constant 0 : index
    %c0_21 = arith.constant 0 : index
    %14 = vector.load %arg4[%c0_20, %c0_21] : memref<1x128xf32, #tpu.memory_space<vmem>>, vector<1x128xf32>
    %15 = vector.broadcast %14 : vector<1x128xf32> to vector<576x128xf32>
    %16 = arith.addf %13, %15 : vector<576x128xf32>
    %cst_22 = arith.constant 0.000000e+00 : f32
    %17 = vector.broadcast %cst_22 : f32 to vector<576x128xf32>
    %18 = arith.maximumf %16, %17 : vector<576x128xf32>
    %19 = vector.shape_cast %18 : vector<576x128xf32> to vector<2x288x128xf32>
    %c0_23 = arith.constant 0 : index
    %c0_24 = arith.constant 0 : index
    %20 = vector.load %arg2[%c0_23, %c0_24] : memref<288x1xf32, #tpu.memory_space<vmem>>, vector<288x1xf32>
    %21 = vector.shape_cast %20 : vector<288x1xf32> to vector<1x288x1xf32>
    %22 = vector.broadcast %21 : vector<1x288x1xf32> to vector<2x288x128xf32>
    %23 = arith.mulf %19, %22 : vector<2x288x128xf32>
    %cst_25 = arith.constant dense<0.000000e+00> : vector<2x128xf32>
    %24 = vector.multi_reduction <add>, %23, %cst_25 [1] : vector<2x288x128xf32> to vector<2x128xf32>
    %25 = arith.truncf %24 : vector<2x128xf32> to vector<2x128xbf16>
    %c0_26 = arith.constant 0 : index
    %c0_27 = arith.constant 0 : index
    %26 = vector.load %arg5[%c0_26, %c0_27] : memref<128x128xbf16, #tpu.memory_space<vmem>>, vector<128x128xbf16>
    %cst_28 = arith.constant dense<0.000000e+00> : vector<2x128xf32>
    %27 = tpu.matmul %25, %26, %cst_28 {dimension_numbers = #tpu.dot_dimension_numbers<[1], [0], [0], [1], [0, 0, 1, 1], [], []>} : vector<2x128xbf16>, vector<128x128xbf16>, vector<2x128xf32> -> vector<2x128xf32>
    %c0_29 = arith.constant 0 : index
    %c0_30 = arith.constant 0 : index
    %28 = vector.load %arg6[%c0_29, %c0_30] : memref<1x128xf32, #tpu.memory_space<vmem>>, vector<1x128xf32>
    %29 = vector.broadcast %28 : vector<1x128xf32> to vector<2x128xf32>
    %30 = arith.addf %27, %29 : vector<2x128xf32>
    %cst_31 = arith.constant 0.000000e+00 : f32
    %31 = vector.broadcast %cst_31 : f32 to vector<2x128xf32>
    %32 = arith.maximumf %30, %31 : vector<2x128xf32>
    %33 = arith.truncf %32 : vector<2x128xf32> to vector<2x128xbf16>
    %c0_32 = arith.constant 0 : index
    %c0_33 = arith.constant 0 : index
    %34 = vector.load %arg7[%c0_32, %c0_33] : memref<128x128xbf16, #tpu.memory_space<vmem>>, vector<128x128xbf16>
    %cst_34 = arith.constant dense<0.000000e+00> : vector<2x128xf32>
    %35 = tpu.matmul %33, %34, %cst_34 {dimension_numbers = #tpu.dot_dimension_numbers<[1], [0], [0], [1], [0, 0, 1, 1], [], []>} : vector<2x128xbf16>, vector<128x128xbf16>, vector<2x128xf32> -> vector<2x128xf32>
    %c0_35 = arith.constant 0 : index
    %c0_36 = arith.constant 0 : index
    %36 = vector.load %arg8[%c0_35, %c0_36] : memref<1x128xf32, #tpu.memory_space<vmem>>, vector<1x128xf32>
    %37 = vector.broadcast %36 : vector<1x128xf32> to vector<2x128xf32>
    %38 = arith.addf %35, %37 : vector<2x128xf32>
    %c0_37 = arith.constant 0 : index
    %c0_38 = arith.constant 0 : index
    %39 = vector.load %arg9[%c0_37, %c0_38] : memref<2x128xf32, #tpu.memory_space<vmem>>, vector<2x128xf32>
    tpu.vector_store %arg9[%c0_37, %c0_38], %24 {strides = array<i32>} : memref<2x128xf32, #tpu.memory_space<vmem>>, vector<2x128xf32>,
    %c0_39 = arith.constant 0 : index
    %c0_40 = arith.constant 0 : index
    %40 = vector.load %arg10[%c0_39, %c0_40] : memref<2x128xf32, #tpu.memory_space<vmem>>, vector<2x128xf32>
    tpu.vector_store %arg10[%c0_39, %c0_40], %38 {strides = array<i32>} : memref<2x128xf32, #tpu.memory_space<vmem>>, vector<2x128xf32>,
    return
  }
  func.func @transform_0(%arg0: i32) -> (i32, i32, i32) {
    %c0_i32 = arith.constant 0 : i32
    %c0_i32_0 = arith.constant 0 : i32
    %c0_i32_1 = arith.constant 0 : i32
    return %arg0, %c0_i32, %c0_i32_0 : i32, i32, i32
  }
  func.func @transform_1(%arg0: i32) -> (i32, i32) {
    %c0_i32 = arith.constant 0 : i32
    %c0_i32_0 = arith.constant 0 : i32
    %c0_i32_1 = arith.constant 0 : i32
    return %c0_i32, %c0_i32_0 : i32, i32
  }
  func.func @transform_2(%arg0: i32) -> (i32, i32) {
    %c0_i32 = arith.constant 0 : i32
    %c0_i32_0 = arith.constant 0 : i32
    %c0_i32_1 = arith.constant 0 : i32
    return %c0_i32, %c0_i32_0 : i32, i32
  }
  func.func @transform_3(%arg0: i32) -> (i32, i32) {
    %c0_i32 = arith.constant 0 : i32
    %c0_i32_0 = arith.constant 0 : i32
    %c0_i32_1 = arith.constant 0 : i32
    return %c0_i32, %c0_i32_0 : i32, i32
  }
  func.func @transform_4(%arg0: i32) -> (i32, i32) {
    %c0_i32 = arith.constant 0 : i32
    %c0_i32_0 = arith.constant 0 : i32
    %c0_i32_1 = arith.constant 0 : i32
    return %c0_i32, %c0_i32_0 : i32, i32
  }
  func.func @transform_5(%arg0: i32) -> (i32, i32) {
    %c0_i32 = arith.constant 0 : i32
    %c0_i32_0 = arith.constant 0 : i32
    %c0_i32_1 = arith.constant 0 : i32
    return %c0_i32, %c0_i32_0 : i32, i32
  }
  func.func @transform_6(%arg0: i32) -> (i32, i32) {
    %c0_i32 = arith.constant 0 : i32
    %c0_i32_0 = arith.constant 0 : i32
    %c0_i32_1 = arith.constant 0 : i32
    return %c0_i32, %c0_i32_0 : i32, i32
  }
  func.func @transform_7(%arg0: i32) -> (i32, i32) {
    %c0_i32 = arith.constant 0 : i32
    %c0_i32_0 = arith.constant 0 : i32
    %c0_i32_1 = arith.constant 0 : i32
    return %c0_i32, %c0_i32_0 : i32, i32
  }
  func.func @transform_8(%arg0: i32) -> (i32, i32) {
    %c0_i32 = arith.constant 0 : i32
    %c0_i32_0 = arith.constant 0 : i32
    return %arg0, %c0_i32 : i32, i32
  }
  func.func @transform_9(%arg0: i32) -> (i32, i32) {
    %c0_i32 = arith.constant 0 : i32
    %c0_i32_0 = arith.constant 0 : i32
    return %arg0, %c0_i32 : i32, i32
  }
}

</mosaic_0001>

<llo_original>
// kernel: simclr_forward_fused.1
$region0: #{simclr_forward_fused.1}
  #allocation0 [shape = 'u32[]', space=smem, size = 0x4, offset = 0x4, fixed_abs, tag = 'smem constant byte address 0x4 - core index']
  #allocation1 [shape = 'u32[144,128]{1,0:T(1,128)}', space=vmem, size = 0x12000, scoped, tag = 'internal scratch']
  %s0 = inlined_call_operand.vmem [shape: f32[2,328,8], index: 0, kind: input, shape index: {}]
  %s1 = inlined_call_operand.vmem [shape: f32[288,1], index: 1, kind: input, shape index: {}]
  %s2 = inlined_call_operand.vmem [shape: bf16[72,128], index: 2, kind: input, shape index: {}]
  %s3 = inlined_call_operand.vmem [shape: f32[1,128], index: 3, kind: input, shape index: {}]
  %s4 = inlined_call_operand.vmem [shape: bf16[128,128], index: 4, kind: input, shape index: {}]
  %s5 = inlined_call_operand.vmem [shape: f32[1,128], index: 5, kind: input, shape index: {}]
  %s6 = inlined_call_operand.vmem [shape: bf16[128,128], index: 6, kind: input, shape index: {}]
  %s7 = inlined_call_operand.vmem [shape: f32[1,128], index: 7, kind: input, shape index: {}]
  %s8 = inlined_call_operand.hbm [shape: f32[2,128], index: 8, kind: output, shape index: {0}]
  %s9 = inlined_call_operand.hbm [shape: f32[2,128], index: 9, kind: output, shape index: {1}]
  %10 = xla_tuple %s8, %s9
  %s11 = sld [smem:[#allocation0]]
  $region50: #{simclr_forward_fused.1} parent=0
    _
  %s13 = ssub.s32 1, %s11
  %s14 = scalar_select 0, %s13, %s11
  $region1: #{simclr_forward_fused.1} parent=0
    #allocation2 [shape = 'u8[1024]{0}', space=vmem, size = 0x400, scoped, tag = 'output window, operand 0, single buffered']
    #allocation3 [shape = 's32[1]{0}', space=sflag, size = 0x4, scoped, tag = 'scoped memory for simclr_forward_fused.1']
    #allocation4 [shape = 'u8[1024]{0}', space=vmem, size = 0x400, scoped, tag = 'output window, operand 1, single buffered']
    #allocation5 [shape = 's32[1]{0}', space=sflag, size = 0x4, scoped, tag = 'scoped memory for simclr_forward_fused.1']
    %15 = vsyncpa [#allocation3], 0
    %16 = vsyncpa [#allocation5], 0
    // Predicated region
    $region2: #{simclr_forward_fused.1} parent=1 // pred_check
      _
    $region3: #{simclr_forward_fused.1} parent=1 // pred_check_branch
      %18 = sbr.rel (0) target = $region5
    $region4: #{simclr_forward_fused.1} parent=1 // pred_region
      _
    $region5: #{simclr_forward_fused.1} parent=1 // pred_fallthru
      _
    // Predicated region
    $region6: #{simclr_forward_fused.1} parent=1 // pred_check
      _
    $region7: #{simclr_forward_fused.1} parent=1 // pred_check_branch
      %20 = sbr.rel (0) target = $region9
    $region8: #{simclr_forward_fused.1} parent=1 // pred_region
      _
    $region9: #{simclr_forward_fused.1} parent=1 // pred_fallthru
      _
    // Predicated region
    $region10: #{simclr_forward_fused.1} parent=1 // pred_check
      _
    $region11: #{simclr_forward_fused.1} parent=1 // pred_check_branch
      %22 = sbr.rel (0) target = $region13
    $region12: #{simclr_forward_fused.1} parent=1 // pred_region
      _
    $region13: #{simclr_forward_fused.1} parent=1 // pred_fallthru
      _
    // Predicated region
    $region14: #{simclr_forward_fused.1} parent=1 // pred_check
      _
    $region15: #{simclr_forward_fused.1} parent=1 // pred_check_branch
      %24 = sbr.rel (0) target = $region17
    $region16: #{simclr_forward_fused.1} parent=1 // pred_region
      _
    $region17: #{simclr_forward_fused.1} parent=1 // pred_fallthru
      _
    // Predicated region
    $region18: #{simclr_forward_fused.1} parent=1 // pred_check
      _
    $region19: #{simclr_forward_fused.1} parent=1 // pred_check_branch
      %26 = sbr.rel (0) target = $region21
    $region20: #{simclr_forward_fused.1} parent=1 // pred_region
      _
    $region21: #{simclr_forward_fused.1} parent=1 // pred_fallthru
      _
    // Predicated region
    $region22: #{simclr_forward_fused.1} parent=1 // pred_check
      _
    $region23: #{simclr_forward_fused.1} parent=1 // pred_check_branch
      %28 = sbr.rel (0) target = $region25
    $region24: #{simclr_forward_fused.1} parent=1 // pred_region
      _
    $region25: #{simclr_forward_fused.1} parent=1 // pred_fallthru
      _
    // Predicated region
    $region26: #{simclr_forward_fused.1} parent=1 // pred_check
      _
    $region27: #{simclr_forward_fused.1} parent=1 // pred_check_branch
      %30 = sbr.rel (0) target = $region29
    $region28: #{simclr_forward_fused.1} parent=1 // pred_region
      _
    $region29: #{simclr_forward_fused.1} parent=1 // pred_fallthru
      _
    // Predicated region
    $region30: #{simclr_forward_fused.1} parent=1 // pred_check
      _
    $region31: #{simclr_forward_fused.1} parent=1 // pred_check_branch
      %32 = sbr.rel (0) target = $region33
    $region32: #{simclr_forward_fused.1} parent=1 // pred_region
      _
    $region33: #{simclr_forward_fused.1} parent=1 // pred_fallthru
      _
    %v34 = vld [vmem:[%s0] sm:$0xff]
    %v35 = vld [vmem:[%s0 + $0x8] sm:$0xff]
    %v36 = vld [vmem:[%s0 + $0x10] sm:$0xff]
    %v37 = vld [vmem:[%s0 + $0x18] sm:$0xff]
    %v38 = vld [vmem:[%s0 + $0x20] sm:$0xff]
    %v39 = vld [vmem:[%s0 + $0x28] sm:$0xff]
    %v40 = vld [vmem:[%s0 + $0x30] sm:$0xff]
    %v41 = vld [vmem:[%s0 + $0x38] sm:$0xff]
    %v42 = vld [vmem:[%s0 + $0x40] sm:$0xff]
    %v43 = vld [vmem:[%s0 + $0x48] sm:$0xff]
    %v44 = vld [vmem:[%s0 + $0x50] sm:$0xff]
    %v45 = vld [vmem:[%s0 + $0x58] sm:$0xff]
    %v46 = vld [vmem:[%s0 + $0x60] sm:$0xff]
    %v47 = vld [vmem:[%s0 + $0x68] sm:$0xff]
    %v48 = vld [vmem:[%s0 + $0x70] sm:$0xff]
    %v49 = vld [vmem:[%s0 + $0x78] sm:$0xff]
    %v50 = vld [vmem:[%s0 + $0x80] sm:$0xff]
    %v51 = vld [vmem:[%s0 + $0x88] sm:$0xff]
    %v52 = vld [vmem:[%s0 + $0x90] sm:$0xff]
    %v53 = vld [vmem:[%s0 + $0x98] sm:$0xff]
    %v54 = vld [vmem:[%s0 + $0xa0] sm:$0xff]
    %v55 = vld [vmem:[%s0 + $0xa8] sm:$0xff]
    %v56 = vld [vmem:[%s0 + $0xb0] sm:$0xff]
    %v57 = vld [vmem:[%s0 + $0xb8] sm:$0xff]
    %v58 = vld [vmem:[%s0 + $0xc0] sm:$0xff]
    %v59 = vld [vmem:[%s0 + $0xc8] sm:$0xff]
    %v60 = vld [vmem:[%s0 + $0xd0] sm:$0xff]
    %v61 = vld [vmem:[%s0 + $0xd8] sm:$0xff]
    %v62 = vld [vmem:[%s0 + $0xe0] sm:$0xff]
    %v63 = vld [vmem:[%s0 + $0xe8] sm:$0xff]
    %v64 = vld [vmem:[%s0 + $0xf0] sm:$0xff]
    %v65 = vld [vmem:[%s0 + $0xf8] sm:$0xff]
    %v66 = vld [vmem:[%s0 + $0x100] sm:$0xff]
    %v67 = vld [vmem:[%s0 + $0x108] sm:$0xff]
    %v68 = vld [vmem:[%s0 + $0x110] sm:$0xff]
    %v69 = vld [vmem:[%s0 + $0x118] sm:$0xff]
    %v70 = vld [vmem:[%s0 + $0x148] sm:$0xff]
    %v71 = vld [vmem:[%s0 + $0x150] sm:$0xff]
    %v72 = vld [vmem:[%s0 + $0x158] sm:$0xff]
    %v73 = vld [vmem:[%s0 + $0x160] sm:$0xff]
    %v74 = vld [vmem:[%s0 + $0x168] sm:$0xff]
    %v75 = vld [vmem:[%s0 + $0x170] sm:$0xff]
    %v76 = vld [vmem:[%s0 + $0x178] sm:$0xff]
    %v77 = vld [vmem:[%s0 + $0x180] sm:$0xff]
    %v78 = vld [vmem:[%s0 + $0x188] sm:$0xff]
    %v79 = vld [vmem:[%s0 + $0x190] sm:$0xff]
    %v80 = vld [vmem:[%s0 + $0x198] sm:$0xff]
    %v81 = vld [vmem:[%s0 + $0x1a0] sm:$0xff]
    %v82 = vld [vmem:[%s0 + $0x1a8] sm:$0xff]
    %v83 = vld [vmem:[%s0 + $0x1b0] sm:$0xff]
    %v84 = vld [vmem:[%s0 + $0x1b8] sm:$0xff]
    %v85 = vld [vmem:[%s0 + $0x1c0] sm:$0xff]
    %v86 = vld [vmem:[%s0 + $0x1c8] sm:$0xff]
    %v87 = vld [vmem:[%s0 + $0x1d0] sm:$0xff]
    %v88 = vld [vmem:[%s0 + $0x1d8] sm:$0xff]
    %v89 = vld [vmem:[%s0 + $0x1e0] sm:$0xff]
    %v90 = vld [vmem:[%s0 + $0x1e8] sm:$0xff]
    %v91 = vld [vmem:[%s0 + $0x1f0] sm:$0xff]
    %v92 = vld [vmem:[%s0 + $0x1f8] sm:$0xff]
    %v93 = vld [vmem:[%s0 + $0x200] sm:$0xff]
    %v94 = vld [vmem:[%s0 + $0x208] sm:$0xff]
    %v95 = vld [vmem:[%s0 + $0x210] sm:$0xff]
    %v96 = vld [vmem:[%s0 + $0x218] sm:$0xff]
    %v97 = vld [vmem:[%s0 + $0x220] sm:$0xff]
    %v98 = vld [vmem:[%s0 + $0x228] sm:$0xff]
    %v99 = vld [vmem:[%s0 + $0x230] sm:$0xff]
    %v100 = vld [vmem:[%s0 + $0x238] sm:$0xff]
    %v101 = vld [vmem:[%s0 + $0x240] sm:$0xff]
    %v102 = vld [vmem:[%s0 + $0x248] sm:$0xff]
    %v103 = vld [vmem:[%s0 + $0x250] sm:$0xff]
    %v104 = vld [vmem:[%s0 + $0x258] sm:$0xff]
    %v105 = vld [vmem:[%s0 + $0x260] sm:$0xff]
    %v106 = vld [vmem:[%s0 + $0x1] sm:$0xff]
    %v107 = vld [vmem:[%s0 + $0x9] sm:$0xff]
    %v108 = vld [vmem:[%s0 + $0x11] sm:$0xff]
    %v109 = vld [vmem:[%s0 + $0x19] sm:$0xff]
    %v110 = vld [vmem:[%s0 + $0x21] sm:$0xff]
    %v111 = vld [vmem:[%s0 + $0x29] sm:$0xff]
    %v112 = vld [vmem:[%s0 + $0x31] sm:$0xff]
    %v113 = vld [vmem:[%s0 + $0x39] sm:$0xff]
    %v114 = vld [vmem:[%s0 + $0x41] sm:$0xff]
    %v115 = vld [vmem:[%s0 + $0x49] sm:$0xff]
    %v116 = vld [vmem:[%s0 + $0x51] sm:$0xff]
    %v117 = vld [vmem:[%s0 + $0x59] sm:$0xff]
    %v118 = vld [vmem:[%s0 + $0x61] sm:$0xff]
    %v119 = vld [vmem:[%s0 + $0x69] sm:$0xff]
    %v120 = vld [vmem:[%s0 + $0x71] sm:$0xff]
    %v121 = vld [vmem:[%s0 + $0x79] sm:$0xff]
    %v122 = vld [vmem:[%s0 + $0x81] sm:$0xff]
    %v123 = vld [vmem:[%s0 + $0x89] sm:$0xff]
    %v124 = vld [vmem:[%s0 + $0x91] sm:$0xff]
    %v125 = vld [vmem:[%s0 + $0x99] sm:$0xff]
    %v126 = vld [vmem:[%s0 + $0xa1] sm:$0xff]
    %v127 = vld [vmem:[%s0 + $0xa9] sm:$0xff]
    %v128 = vld [vmem:[%s0 + $0xb1] sm:$0xff]
    %v129 = vld [vmem:[%s0 + $0xb9] sm:$0xff]
    %v130 = vld [vmem:[%s0 + $0xc1] sm:$0xff]
    %v131 = vld [vmem:[%s0 + $0xc9] sm:$0xff]
    %v132 = vld [vmem:[%s0 + $0xd1] sm:$0xff]
    %v133 = vld [vmem:[%s0 + $0xd9] sm:$0xff]
    %v134 = vld [vmem:[%s0 + $0xe1] sm:$0xff]
    %v135 = vld [vmem:[%s0 + $0xe9] sm:$0xff]
    %v136 = vld [vmem:[%s0 + $0xf1] sm:$0xff]
    %v137 = vld [vmem:[%s0 + $0xf9] sm:$0xff]
    %v138 = vld [vmem:[%s0 + $0x101] sm:$0xff]
    %v139 = vld [vmem:[%s0 + $0x109] sm:$0xff]
    %v140 = vld [vmem:[%s0 + $0x111] sm:$0xff]
    %v141 = vld [vmem:[%s0 + $0x119] sm:$0xff]
    %v142 = vld [vmem:[%s0 + $0x149] sm:$0xff]
    %v143 = vld [vmem:[%s0 + $0x151] sm:$0xff]
    %v144 = vld [vmem:[%s0 + $0x159] sm:$0xff]
    %v145 = vld [vmem:[%s0 + $0x161] sm:$0xff]
    %v146 = vld [vmem:[%s0 + $0x169] sm:$0xff]
    %v147 = vld [vmem:[%s0 + $0x171] sm:$0xff]
    %v148 = vld [vmem:[%s0 + $0x179] sm:$0xff]
    %v149 = vld [vmem:[%s0 + $0x181] sm:$0xff]
    %v150 = vld [vmem:[%s0 + $0x189] sm:$0xff]
    %v151 = vld [vmem:[%s0 + $0x191] sm:$0xff]
    %v152 = vld [vmem:[%s0 + $0x199] sm:$0xff]
    %v153 = vld [vmem:[%s0 + $0x1a1] sm:$0xff]
    %v154 = vld [vmem:[%s0 + $0x1a9] sm:$0xff]
    %v155 = vld [vmem:[%s0 + $0x1b1] sm:$0xff]
    %v156 = vld [vmem:[%s0 + $0x1b9] sm:$0xff]
    %v157 = vld [vmem:[%s0 + $0x1c1] sm:$0xff]
    %v158 = vld [vmem:[%s0 + $0x1c9] sm:$0xff]
    %v159 = vld [vmem:[%s0 + $0x1d1] sm:$0xff]
    %v160 = vld [vmem:[%s0 + $0x1d9] sm:$0xff]
    %v161 = vld [vmem:[%s0 + $0x1e1] sm:$0xff]
    %v162 = vld [vmem:[%s0 + $0x1e9] sm:$0xff]
    %v163 = vld [vmem:[%s0 + $0x1f1] sm:$0xff]
    %v164 = vld [vmem:[%s0 + $0x1f9] sm:$0xff]
    %v165 = vld [vmem:[%s0 + $0x201] sm:$0xff]
    %v166 = vld [vmem:[%s0 + $0x209] sm:$0xff]
    %v167 = vld [vmem:[%s0 + $0x211] sm:$0xff]
    %v168 = vld [vmem:[%s0 + $0x219] sm:$0xff]
    %v169 = vld [vmem:[%s0 + $0x221] sm:$0xff]
    %v170 = vld [vmem:[%s0 + $0x229] sm:$0xff]
    %v171 = vld [vmem:[%s0 + $0x231] sm:$0xff]
    %v172 = vld [vmem:[%s0 + $0x239] sm:$0xff]
    %v173 = vld [vmem:[%s0 + $0x241] sm:$0xff]
    %v174 = vld [vmem:[%s0 + $0x249] sm:$0xff]
    %v175 = vld [vmem:[%s0 + $0x251] sm:$0xff]
    %v176 = vld [vmem:[%s0 + $0x259] sm:$0xff]
    %v177 = vld [vmem:[%s0 + $0x261] sm:$0xff]
    %v178 = vld [vmem:[%s0 + $0x2] sm:$0xff]
    %v179 = vld [vmem:[%s0 + $0xa] sm:$0xff]
    %v180 = vld [vmem:[%s0 + $0x12] sm:$0xff]
    %v181 = vld [vmem:[%s0 + $0x1a] sm:$0xff]
    %v182 = vld [vmem:[%s0 + $0x22] sm:$0xff]
    %v183 = vld [vmem:[%s0 + $0x2a] sm:$0xff]
    %v184 = vld [vmem:[%s0 + $0x32] sm:$0xff]
    %v185 = vld [vmem:[%s0 + $0x3a] sm:$0xff]
    %v186 = vld [vmem:[%s0 + $0x42] sm:$0xff]
    %v187 = vld [vmem:[%s0 + $0x4a] sm:$0xff]
    %v188 = vld [vmem:[%s0 + $0x52] sm:$0xff]
    %v189 = vld [vmem:[%s0 + $0x5a] sm:$0xff]
    %v190 = vld [vmem:[%s0 + $0x62] sm:$0xff]
    %v191 = vld [vmem:[%s0 + $0x6a] sm:$0xff]
    %v192 = vld [vmem:[%s0 + $0x72] sm:$0xff]
    %v193 = vld [vmem:[%s0 + $0x7a] sm:$0xff]
    %v194 = vld [vmem:[%s0 + $0x82] sm:$0xff]
    %v195 = vld [vmem:[%s0 + $0x8a] sm:$0xff]
    %v196 = vld [vmem:[%s0 + $0x92] sm:$0xff]
    %v197 = vld [vmem:[%s0 + $0x9a] sm:$0xff]
    %v198 = vld [vmem:[%s0 + $0xa2] sm:$0xff]
    %v199 = vld [vmem:[%s0 + $0xaa] sm:$0xff]
    %v200 = vld [vmem:[%s0 + $0xb2] sm:$0xff]
    %v201 = vld [vmem:[%s0 + $0xba] sm:$0xff]
    %v202 = vld [vmem:[%s0 + $0xc2] sm:$0xff]
    %v203 = vld [vmem:[%s0 + $0xca] sm:$0xff]
    %v204 = vld [vmem:[%s0 + $0xd2] sm:$0xff]
    %v205 = vld [vmem:[%s0 + $0xda] sm:$0xff]
    %v206 = vld [vmem:[%s0 + $0xe2] sm:$0xff]
    %v207 = vld [vmem:[%s0 + $0xea] sm:$0xff]
    %v208 = vld [vmem:[%s0 + $0xf2] sm:$0xff]
    %v209 = vld [vmem:[%s0 + $0xfa] sm:$0xff]
    %v210 = vld [vmem:[%s0 + $0x102] sm:$0xff]
    %v211 = vld [vmem:[%s0 + $0x10a] sm:$0xff]
    %v212 = vld [vmem:[%s0 + $0x112] sm:$0xff]
    %v213 = vld [vmem:[%s0 + $0x11a] sm:$0xff]
    %v214 = vld [vmem:[%s0 + $0x14a] sm:$0xff]
    %v215 = vld [vmem:[%s0 + $0x152] sm:$0xff]
    %v216 = vld [vmem:[%s0 + $0x15a] sm:$0xff]
    %v217 = vld [vmem:[%s0 + $0x162] sm:$0xff]
    %v218 = vld [vmem:[%s0 + $0x16a] sm:$0xff]
    %v219 = vld [vmem:[%s0 + $0x172] sm:$0xff]
    %v220 = vld [vmem:[%s0 + $0x17a] sm:$0xff]
    %v221 = vld [vmem:[%s0 + $0x182] sm:$0xff]
    %v222 = vld [vmem:[%s0 + $0x18a] sm:$0xff]
    %v223 = vld [vmem:[%s0 + $0x192] sm:$0xff]
    %v224 = vld [vmem:[%s0 + $0x19a] sm:$0xff]
    %v225 = vld [vmem:[%s0 + $0x1a2] sm:$0xff]
    %v226 = vld [vmem:[%s0 + $0x1aa] sm:$0xff]
    %v227 = vld [vmem:[%s0 + $0x1b2] sm:$0xff]
    %v228 = vld [vmem:[%s0 + $0x1ba] sm:$0xff]
    %v229 = vld [vmem:[%s0 + $0x1c2] sm:$0xff]
    %v230 = vld [vmem:[%s0 + $0x1ca] sm:$0xff]
    %v231 = vld [vmem:[%s0 + $0x1d2] sm:$0xff]
    %v232 = vld [vmem:[%s0 + $0x1da] sm:$0xff]
    %v233 = vld [vmem:[%s0 + $0x1e2] sm:$0xff]
    %v234 = vld [vmem:[%s0 + $0x1ea] sm:$0xff]
    %v235 = vld [vmem:[%s0 + $0x1f2] sm:$0xff]
    %v236 = vld [vmem:[%s0 + $0x1fa] sm:$0xff]
    %v237 = vld [vmem:[%s0 + $0x202] sm:$0xff]
    %v238 = vld [vmem:[%s0 + $0x20a] sm:$0xff]
    %v239 = vld [vmem:[%s0 + $0x212] sm:$0xff]
    %v240 = vld [vmem:[%s0 + $0x21a] sm:$0xff]
    %v241 = vld [vmem:[%s0 + $0x222] sm:$0xff]
    %v242 = vld [vmem:[%s0 + $0x22a] sm:$0xff]
    %v243 = vld [vmem:[%s0 + $0x232] sm:$0xff]
    %v244 = vld [vmem:[%s0 + $0x23a] sm:$0xff]
    %v245 = vld [vmem:[%s0 + $0x242] sm:$0xff]
    %v246 = vld [vmem:[%s0 + $0x24a] sm:$0xff]
    %v247 = vld [vmem:[%s0 + $0x252] sm:$0xff]
    %v248 = vld [vmem:[%s0 + $0x25a] sm:$0xff]
    %v249 = vld [vmem:[%s0 + $0x262] sm:$0xff]
    %v250 = vld [vmem:[%s0 + $0x122] sm:$0xff]
    %v251 = vld [vmem:[%s0 + $0x12a] sm:$0xff]
    %v252 = vld [vmem:[%s0 + $0x26a] sm:$0xff]
    %v253 = vld [vmem:[%s0 + $0x272] sm:$0xff]
    %v254 = vld [vmem:[%s0 + $0x13] sm:$0xff]
    %v255 = vld [vmem:[%s0 + $0x1b] sm:$0xff]
    %v256 = vld [vmem:[%s0 + $0x23] sm:$0xff]
    %v257 = vld [vmem:[%s0 + $0x2b] sm:$0xff]
    %v258 = vld [vmem:[%s0 + $0x33] sm:$0xff]
    %v259 = vld [vmem:[%s0 + $0x3b] sm:$0xff]
    %v260 = vld [vmem:[%s0 + $0x43] sm:$0xff]
    %v261 = vld [vmem:[%s0 + $0x4b] sm:$0xff]
    %v262 = vld [vmem:[%s0 + $0x53] sm:$0xff]
    %v263 = vld [vmem:[%s0 + $0x5b] sm:$0xff]
    %v264 = vld [vmem:[%s0 + $0x63] sm:$0xff]
    %v265 = vld [vmem:[%s0 + $0x6b] sm:$0xff]
    %v266 = vld [vmem:[%s0 + $0x73] sm:$0xff]
    %v267 = vld [vmem:[%s0 + $0x7b] sm:$0xff]
    %v268 = vld [vmem:[%s0 + $0x83] sm:$0xff]
    %v269 = vld [vmem:[%s0 + $0x8b] sm:$0xff]
    %v270 = vld [vmem:[%s0 + $0x93] sm:$0xff]
    %v271 = vld [vmem:[%s0 + $0x9b] sm:$0xff]
    %v272 = vld [vmem:[%s0 + $0xa3] sm:$0xff]
    %v273 = vld [vmem:[%s0 + $0xab] sm:$0xff]
    %v274 = vld [vmem:[%s0 + $0xb3] sm:$0xff]
    %v275 = vld [vmem:[%s0 + $0xbb] sm:$0xff]
    %v276 = vld [vmem:[%s0 + $0xc3] sm:$0xff]
    %v277 = vld [vmem:[%s0 + $0xcb] sm:$0xff]
    %v278 = vld [vmem:[%s0 + $0xd3] sm:$0xff]
    %v279 = vld [vmem:[%s0 + $0xdb] sm:$0xff]
    %v280 = vld [vmem:[%s0 + $0xe3] sm:$0xff]
    %v281 = vld [vmem:[%s0 + $0xeb] sm:$0xff]
    %v282 = vld [vmem:[%s0 + $0xf3] sm:$0xff]
    %v283 = vld [vmem:[%s0 + $0xfb] sm:$0xff]
    %v284 = vld [vmem:[%s0 + $0x103] sm:$0xff]
    %v285 = vld [vmem:[%s0 + $0x10b] sm:$0xff]
    %v286 = vld [vmem:[%s0 + $0x113] sm:$0xff]
    %v287 = vld [vmem:[%s0 + $0x11b] sm:$0xff]
    %v288 = vld [vmem:[%s0 + $0x123] sm:$0xff]
    %v289 = vld [vmem:[%s0 + $0x12b] sm:$0xff]
    %v290 = vld [vmem:[%s0 + $0x15b] sm:$0xff]
    %v291 = vld [vmem:[%s0 + $0x163] sm:$0xff]
    %v292 = vld [vmem:[%s0 + $0x16b] sm:$0xff]
    %v293 = vld [vmem:[%s0 + $0x173] sm:$0xff]
    %v294 = vld [vmem:[%s0 + $0x17b] sm:$0xff]
    %v295 = vld [vmem:[%s0 + $0x183] sm:$0xff]
    %v296 = vld [vmem:[%s0 + $0x18b] sm:$0xff]
    %v297 = vld [vmem:[%s0 + $0x193] sm:$0xff]
    %v298 = vld [vmem:[%s0 + $0x19b] sm:$0xff]
    %v299 = vld [vmem:[%s0 + $0x1a3] sm:$0xff]
    %v300 = vld [vmem:[%s0 + $0x1ab] sm:$0xff]
    %v301 = vld [vmem:[%s0 + $0x1b3] sm:$0xff]
    %v302 = vld [vmem:[%s0 + $0x1bb] sm:$0xff]
    %v303 = vld [vmem:[%s0 + $0x1c3] sm:$0xff]
    %v304 = vld [vmem:[%s0 + $0x1cb] sm:$0xff]
    %v305 = vld [vmem:[%s0 + $0x1d3] sm:$0xff]
    %v306 = vld [vmem:[%s0 + $0x1db] sm:$0xff]
    %v307 = vld [vmem:[%s0 + $0x1e3] sm:$0xff]
    %v308 = vld [vmem:[%s0 + $0x1eb] sm:$0xff]
    %v309 = vld [vmem:[%s0 + $0x1f3] sm:$0xff]
    %v310 = vld [vmem:[%s0 + $0x1fb] sm:$0xff]
    %v311 = vld [vmem:[%s0 + $0x203] sm:$0xff]
    %v312 = vld [vmem:[%s0 + $0x20b] sm:$0xff]
    %v313 = vld [vmem:[%s0 + $0x213] sm:$0xff]
    %v314 = vld [vmem:[%s0 + $0x21b] sm:$0xff]
    %v315 = vld [vmem:[%s0 + $0x223] sm:$0xff]
    %v316 = vld [vmem:[%s0 + $0x22b] sm:$0xff]
    %v317 = vld [vmem:[%s0 + $0x233] sm:$0xff]
    %v318 = vld [vmem:[%s0 + $0x23b] sm:$0xff]
    %v319 = vld [vmem:[%s0 + $0x243] sm:$0xff]
    %v320 = vld [vmem:[%s0 + $0x24b] sm:$0xff]
    %v321 = vld [vmem:[%s0 + $0x253] sm:$0xff]
    %v322 = vld [vmem:[%s0 + $0x25b] sm:$0xff]
    %v323 = vld [vmem:[%s0 + $0x263] sm:$0xff]
    %v324 = vld [vmem:[%s0 + $0x26b] sm:$0xff]
    %v325 = vld [vmem:[%s0 + $0x273] sm:$0xff]
    %v326 = vld [vmem:[%s0 + $0x14] sm:$0xff]
    %v327 = vld [vmem:[%s0 + $0x1c] sm:$0xff]
    %v328 = vld [vmem:[%s0 + $0x24] sm:$0xff]
    %v329 = vld [vmem:[%s0 + $0x2c] sm:$0xff]
    %v330 = vld [vmem:[%s0 + $0x34] sm:$0xff]
    %v331 = vld [vmem:[%s0 + $0x3c] sm:$0xff]
    %v332 = vld [vmem:[%s0 + $0x44] sm:$0xff]
    %v333 = vld [vmem:[%s0 + $0x4c] sm:$0xff]
    %v334 = vld [vmem:[%s0 + $0x54] sm:$0xff]
    %v335 = vld [vmem:[%s0 + $0x5c] sm:$0xff]
    %v336 = vld [vmem:[%s0 + $0x64] sm:$0xff]
    %v337 = vld [vmem:[%s0 + $0x6c] sm:$0xff]
    %v338 = vld [vmem:[%s0 + $0x74] sm:$0xff]
    %v339 = vld [vmem:[%s0 + $0x7c] sm:$0xff]
    %v340 = vld [vmem:[%s0 + $0x84] sm:$0xff]
    %v341 = vld [vmem:[%s0 + $0x8c] sm:$0xff]
    %v342 = vld [vmem:[%s0 + $0x94] sm:$0xff]
    %v343 = vld [vmem:[%s0 + $0x9c] sm:$0xff]
    %v344 = vld [vmem:[%s0 + $0xa4] sm:$0xff]
    %v345 = vld [vmem:[%s0 + $0xac] sm:$0xff]
    %v346 = vld [vmem:[%s0 + $0xb4] sm:$0xff]
    %v347 = vld [vmem:[%s0 + $0xbc] sm:$0xff]
    %v348 = vld [vmem:[%s0 + $0xc4] sm:$0xff]
    %v349 = vld [vmem:[%s0 + $0xcc] sm:$0xff]
    %v350 = vld [vmem:[%s0 + $0xd4] sm:$0xff]
    %v351 = vld [vmem:[%s0 + $0xdc] sm:$0xff]
    %v352 = vld [vmem:[%s0 + $0xe4] sm:$0xff]
    %v353 = vld [vmem:[%s0 + $0xec] sm:$0xff]
    %v354 = vld [vmem:[%s0 + $0xf4] sm:$0xff]
    %v355 = vld [vmem:[%s0 + $0xfc] sm:$0xff]
    %v356 = vld [vmem:[%s0 + $0x104] sm:$0xff]
    %v357 = vld [vmem:[%s0 + $0x10c] sm:$0xff]
    %v358 = vld [vmem:[%s0 + $0x114] sm:$0xff]
    %v359 = vld [vmem:[%s0 + $0x11c] sm:$0xff]
    %v360 = vld [vmem:[%s0 + $0x124] sm:$0xff]
    %v361 = vld [vmem:[%s0 + $0x12c] sm:$0xff]
    %v362 = vld [vmem:[%s0 + $0x15c] sm:$0xff]
    %v363 = vld [vmem:[%s0 + $0x164] sm:$0xff]
    %v364 = vld [vmem:[%s0 + $0x16c] sm:$0xff]
    %v365 = vld [vmem:[%s0 + $0x174] sm:$0xff]
    %v366 = vld [vmem:[%s0 + $0x17c] sm:$0xff]
    %v367 = vld [vmem:[%s0 + $0x184] sm:$0xff]
    %v368 = vld [vmem:[%s0 + $0x18c] sm:$0xff]
    %v369 = vld [vmem:[%s0 + $0x194] sm:$0xff]
    %v370 = vld [vmem:[%s0 + $0x19c] sm:$0xff]
    %v371 = vld [vmem:[%s0 + $0x1a4] sm:$0xff]
    %v372 = vld [vmem:[%s0 + $0x1ac] sm:$0xff]
    %v373 = vld [vmem:[%s0 + $0x1b4] sm:$0xff]
    %v374 = vld [vmem:[%s0 + $0x1bc] sm:$0xff]
    %v375 = vld [vmem:[%s0 + $0x1c4] sm:$0xff]
    %v376 = vld [vmem:[%s0 + $0x1cc] sm:$0xff]
    %v377 = vld [vmem:[%s0 + $0x1d4] sm:$0xff]
    %v378 = vld [vmem:[%s0 + $0x1dc] sm:$0xff]
    %v379 = vld [vmem:[%s0 + $0x1e4] sm:$0xff]
    %v380 = vld [vmem:[%s0 + $0x1ec] sm:$0xff]
    %v381 = vld [vmem:[%s0 + $0x1f4] sm:$0xff]
    %v382 = vld [vmem:[%s0 + $0x1fc] sm:$0xff]
    %v383 = vld [vmem:[%s0 + $0x204] sm:$0xff]
    %v384 = vld [vmem:[%s0 + $0x20c] sm:$0xff]
    %v385 = vld [vmem:[%s0 + $0x214] sm:$0xff]
    %v386 = vld [vmem:[%s0 + $0x21c] sm:$0xff]
    %v387 = vld [vmem:[%s0 + $0x224] sm:$0xff]
    %v388 = vld [vmem:[%s0 + $0x22c] sm:$0xff]
    %v389 = vld [vmem:[%s0 + $0x234] sm:$0xff]
    %v390 = vld [vmem:[%s0 + $0x23c] sm:$0xff]
    %v391 = vld [vmem:[%s0 + $0x244] sm:$0xff]
    %v392 = vld [vmem:[%s0 + $0x24c] sm:$0xff]
    %v393 = vld [vmem:[%s0 + $0x254] sm:$0xff]
    %v394 = vld [vmem:[%s0 + $0x25c] sm:$0xff]
    %v395 = vld [vmem:[%s0 + $0x264] sm:$0xff]
    %v396 = vld [vmem:[%s0 + $0x26c] sm:$0xff]
    %v397 = vld [vmem:[%s0 + $0x274] sm:$0xff]
    %v398 = vld [vmem:[%s0 + $0x134] sm:$0xff]
    %v399 = vld [vmem:[%s0 + $0x13c] sm:$0xff]
    %v400 = vld [vmem:[%s0 + $0x27c] sm:$0xff]
    %v401 = vld [vmem:[%s0 + $0x284] sm:$0xff]
    %v402 = vld [vmem:[%s0 + $0x25] sm:$0xff]
    %v403 = vld [vmem:[%s0 + $0x2d] sm:$0xff]
    %v404 = vld [vmem:[%s0 + $0x35] sm:$0xff]
    %v405 = vld [vmem:[%s0 + $0x3d] sm:$0xff]
    %v406 = vld [vmem:[%s0 + $0x45] sm:$0xff]
    %v407 = vld [vmem:[%s0 + $0x4d] sm:$0xff]
    %v408 = vld [vmem:[%s0 + $0x55] sm:$0xff]
    %v409 = vld [vmem:[%s0 + $0x5d] sm:$0xff]
    %v410 = vld [vmem:[%s0 + $0x65] sm:$0xff]
    %v411 = vld [vmem:[%s0 + $0x6d] sm:$0xff]
    %v412 = vld [vmem:[%s0 + $0x75] sm:$0xff]
    %v413 = vld [vmem:[%s0 + $0x7d] sm:$0xff]
    %v414 = vld [vmem:[%s0 + $0x85] sm:$0xff]
    %v415 = vld [vmem:[%s0 + $0x8d] sm:$0xff]
    %v416 = vld [vmem:[%s0 + $0x95] sm:$0xff]
    %v417 = vld [vmem:[%s0 + $0x9d] sm:$0xff]
    %v418 = vld [vmem:[%s0 + $0xa5] sm:$0xff]
    %v419 = vld [vmem:[%s0 + $0xad] sm:$0xff]
    %v420 = vld [vmem:[%s0 + $0xb5] sm:$0xff]
    %v421 = vld [vmem:[%s0 + $0xbd] sm:$0xff]
    %v422 = vld [vmem:[%s0 + $0xc5] sm:$0xff]
    %v423 = vld [vmem:[%s0 + $0xcd] sm:$0xff]
    %v424 = vld [vmem:[%s0 + $0xd5] sm:$0xff]
    %v425 = vld [vmem:[%s0 + $0xdd] sm:$0xff]
    %v426 = vld [vmem:[%s0 + $0xe5] sm:$0xff]
    %v427 = vld [vmem:[%s0 + $0xed] sm:$0xff]
    %v428 = vld [vmem:[%s0 + $0xf5] sm:$0xff]
    %v429 = vld [vmem:[%s0 + $0xfd] sm:$0xff]
    %v430 = vld [vmem:[%s0 + $0x105] sm:$0xff]
    %v431 = vld [vmem:[%s0 + $0x10d] sm:$0xff]
    %v432 = vld [vmem:[%s0 + $0x115] sm:$0xff]
    %v433 = vld [vmem:[%s0 + $0x11d] sm:$0xff]
    %v434 = vld [vmem:[%s0 + $0x125] sm:$0xff]
    %v435 = vld [vmem:[%s0 + $0x12d] sm:$0xff]
    %v436 = vld [vmem:[%s0 + $0x135] sm:$0xff]
    %v437 = vld [vmem:[%s0 + $0x13d] sm:$0xff]
    %v438 = vld [vmem:[%s0 + $0x16d] sm:$0xff]
    %v439 = vld [vmem:[%s0 + $0x175] sm:$0xff]
    %v440 = vld [vmem:[%s0 + $0x17d] sm:$0xff]
    %v441 = vld [vmem:[%s0 + $0x185] sm:$0xff]
    %v442 = vld [vmem:[%s0 + $0x18d] sm:$0xff]
    %v443 = vld [vmem:[%s0 + $0x195] sm:$0xff]
    %v444 = vld [vmem:[%s0 + $0x19d] sm:$0xff]
    %v445 = vld [vmem:[%s0 + $0x1a5] sm:$0xff]
    %v446 = vld [vmem:[%s0 + $0x1ad] sm:$0xff]
    %v447 = vld [vmem:[%s0 + $0x1b5] sm:$0xff]
    %v448 = vld [vmem:[%s0 + $0x1bd] sm:$0xff]
    %v449 = vld [vmem:[%s0 + $0x1c5] sm:$0xff]
    %v450 = vld [vmem:[%s0 + $0x1cd] sm:$0xff]
    %v451 = vld [vmem:[%s0 + $0x1d5] sm:$0xff]
    %v452 = vld [vmem:[%s0 + $0x1dd] sm:$0xff]
    %v453 = vld [vmem:[%s0 + $0x1e5] sm:$0xff]
    %v454 = vld [vmem:[%s0 + $0x1ed] sm:$0xff]
    %v455 = vld [vmem:[%s0 + $0x1f5] sm:$0xff]
    %v456 = vld [vmem:[%s0 + $0x1fd] sm:$0xff]
    %v457 = vld [vmem:[%s0 + $0x205] sm:$0xff]
    %v458 = vld [vmem:[%s0 + $0x20d] sm:$0xff]
    %v459 = vld [vmem:[%s0 + $0x215] sm:$0xff]
    %v460 = vld [vmem:[%s0 + $0x21d] sm:$0xff]
    %v461 = vld [vmem:[%s0 + $0x225] sm:$0xff]
    %v462 = vld [vmem:[%s0 + $0x22d] sm:$0xff]
    %v463 = vld [vmem:[%s0 + $0x235] sm:$0xff]
    %v464 = vld [vmem:[%s0 + $0x23d] sm:$0xff]
    %v465 = vld [vmem:[%s0 + $0x245] sm:$0xff]
    %v466 = vld [vmem:[%s0 + $0x24d] sm:$0xff]
    %v467 = vld [vmem:[%s0 + $0x255] sm:$0xff]
    %v468 = vld [vmem:[%s0 + $0x25d] sm:$0xff]
    %v469 = vld [vmem:[%s0 + $0x265] sm:$0xff]
    %v470 = vld [vmem:[%s0 + $0x26d] sm:$0xff]
    %v471 = vld [vmem:[%s0 + $0x275] sm:$0xff]
    %v472 = vld [vmem:[%s0 + $0x27d] sm:$0xff]
    %v473 = vld [vmem:[%s0 + $0x285] sm:$0xff]
    %v474 = vld [vmem:[%s0 + $0x26] sm:$0xff]
    %v475 = vld [vmem:[%s0 + $0x2e] sm:$0xff]
    %v476 = vld [vmem:[%s0 + $0x36] sm:$0xff]
    %v477 = vld [vmem:[%s0 + $0x3e] sm:$0xff]
    %v478 = vld [vmem:[%s0 + $0x46] sm:$0xff]
    %v479 = vld [vmem:[%s0 + $0x4e] sm:$0xff]
    %v480 = vld [vmem:[%s0 + $0x56] sm:$0xff]
    %v481 = vld [vmem:[%s0 + $0x5e] sm:$0xff]
    %v482 = vld [vmem:[%s0 + $0x66] sm:$0xff]
    %v483 = vld [vmem:[%s0 + $0x6e] sm:$0xff]
    %v484 = vld [vmem:[%s0 + $0x76] sm:$0xff]
    %v485 = vld [vmem:[%s0 + $0x7e] sm:$0xff]
    %v486 = vld [vmem:[%s0 + $0x86] sm:$0xff]
    %v487 = vld [vmem:[%s0 + $0x8e] sm:$0xff]
    %v488 = vld [vmem:[%s0 + $0x96] sm:$0xff]
    %v489 = vld [vmem:[%s0 + $0x9e] sm:$0xff]
    %v490 = vld [vmem:[%s0 + $0xa6] sm:$0xff]
    %v491 = vld [vmem:[%s0 + $0xae] sm:$0xff]
    %v492 = vld [vmem:[%s0 + $0xb6] sm:$0xff]
    %v493 = vld [vmem:[%s0 + $0xbe] sm:$0xff]
    %v494 = vld [vmem:[%s0 + $0xc6] sm:$0xff]
    %v495 = vld [vmem:[%s0 + $0xce] sm:$0xff]
    %v496 = vld [vmem:[%s0 + $0xd6] sm:$0xff]
    %v497 = vld [vmem:[%s0 + $0xde] sm:$0xff]
    %v498 = vld [vmem:[%s0 + $0xe6] sm:$0xff]
    %v499 = vld [vmem:[%s0 + $0xee] sm:$0xff]
    %v500 = vld [vmem:[%s0 + $0xf6] sm:$0xff]
    %v501 = vld [vmem:[%s0 + $0xfe] sm:$0xff]
    %v502 = vld [vmem:[%s0 + $0x106] sm:$0xff]
    %v503 = vld [vmem:[%s0 + $0x10e] sm:$0xff]
    %v504 = vld [vmem:[%s0 + $0x116] sm:$0xff]
    %v505 = vld [vmem:[%s0 + $0x11e] sm:$0xff]
    %v506 = vld [vmem:[%s0 + $0x126] sm:$0xff]
    %v507 = vld [vmem:[%s0 + $0x12e] sm:$0xff]
    %v508 = vld [vmem:[%s0 + $0x136] sm:$0xff]
    %v509 = vld [vmem:[%s0 + $0x13e] sm:$0xff]
    %v510 = vld [vmem:[%s0 + $0x16e] sm:$0xff]
    %v511 = vld [vmem:[%s0 + $0x176] sm:$0xff]
    %v512 = vld [vmem:[%s0 + $0x17e] sm:$0xff]
    %v513 = vld [vmem:[%s0 + $0x186] sm:$0xff]
    %v514 = vld [vmem:[%s0 + $0x18e] sm:$0xff]
    %v515 = vld [vmem:[%s0 + $0x196] sm:$0xff]
    %v516 = vld [vmem:[%s0 + $0x19e] sm:$0xff]
    %v517 = vld [vmem:[%s0 + $0x1a6] sm:$0xff]
    %v518 = vld [vmem:[%s0 + $0x1ae] sm:$0xff]
    %v519 = vld [vmem:[%s0 + $0x1b6] sm:$0xff]
    %v520 = vld [vmem:[%s0 + $0x1be] sm:$0xff]
    %v521 = vld [vmem:[%s0 + $0x1c6] sm:$0xff]
    %v522 = vld [vmem:[%s0 + $0x1ce] sm:$0xff]
    %v523 = vld [vmem:[%s0 + $0x1d6] sm:$0xff]
    %v524 = vld [vmem:[%s0 + $0x1de] sm:$0xff]
    %v525 = vld [vmem:[%s0 + $0x1e6] sm:$0xff]
    %v526 = vld [vmem:[%s0 + $0x1ee] sm:$0xff]
    %v527 = vld [vmem:[%s0 + $0x1f6] sm:$0xff]
    %v528 = vld [vmem:[%s0 + $0x1fe] sm:$0xff]
    %v529 = vld [vmem:[%s0 + $0x206] sm:$0xff]
    %v530 = vld [vmem:[%s0 + $0x20e] sm:$0xff]
    %v531 = vld [vmem:[%s0 + $0x216] sm:$0xff]
    %v532 = vld [vmem:[%s0 + $0x21e] sm:$0xff]
    %v533 = vld [vmem:[%s0 + $0x226] sm:$0xff]
    %v534 = vld [vmem:[%s0 + $0x22e] sm:$0xff]
    %v535 = vld [vmem:[%s0 + $0x236] sm:$0xff]
    %v536 = vld [vmem:[%s0 + $0x23e] sm:$0xff]
    %v537 = vld [vmem:[%s0 + $0x246] sm:$0xff]
    %v538 = vld [vmem:[%s0 + $0x24e] sm:$0xff]
    %v539 = vld [vmem:[%s0 + $0x256] sm:$0xff]
    %v540 = vld [vmem:[%s0 + $0x25e] sm:$0xff]
    %v541 = vld [vmem:[%s0 + $0x266] sm:$0xff]
    %v542 = vld [vmem:[%s0 + $0x26e] sm:$0xff]
    %v543 = vld [vmem:[%s0 + $0x276] sm:$0xff]
    %v544 = vld [vmem:[%s0 + $0x27e] sm:$0xff]
    %v545 = vld [vmem:[%s0 + $0x286] sm:$0xff]
    %618 = vrot.lane.b32.xlu0 %v106, 8
    %v619 = vpop.permute.xlu0 %618
    %620 = vrot.lane.b32.xlu0 %v107, 8
    %v621 = vpop.permute.xlu0 %620
    %622 = vrot.lane.b32.xlu0 %v108, 8
    %v623 = vpop.permute.xlu0 %622
    %624 = vrot.lane.b32.xlu0 %v109, 8
    %v625 = vpop.permute.xlu0 %624
    %626 = vrot.lane.b32.xlu0 %v110, 8
    %v627 = vpop.permute.xlu0 %626
    %628 = vrot.lane.b32.xlu0 %v111, 8
    %v629 = vpop.permute.xlu0 %628
    %630 = vrot.lane.b32.xlu0 %v112, 8
    %v631 = vpop.permute.xlu0 %630
    %632 = vrot.lane.b32.xlu0 %v113, 8
    %v633 = vpop.permute.xlu0 %632
    %634 = vrot.lane.b32.xlu0 %v114, 8
    %v635 = vpop.permute.xlu0 %634
    %636 = vrot.lane.b32.xlu0 %v115, 8
    %v637 = vpop.permute.xlu0 %636
    %638 = vrot.lane.b32.xlu0 %v116, 8
    %v639 = vpop.permute.xlu0 %638
    %640 = vrot.lane.b32.xlu0 %v117, 8
    %v641 = vpop.permute.xlu0 %640
    %642 = vrot.lane.b32.xlu0 %v118, 8
    %v643 = vpop.permute.xlu0 %642
    %644 = vrot.lane.b32.xlu0 %v119, 8
    %v645 = vpop.permute.xlu0 %644
    %646 = vrot.lane.b32.xlu0 %v120, 8
    %v647 = vpop.permute.xlu0 %646
    %648 = vrot.lane.b32.xlu0 %v121, 8
    %v649 = vpop.permute.xlu0 %648
    %650 = vrot.lane.b32.xlu0 %v122, 8
    %v651 = vpop.permute.xlu0 %650
    %652 = vrot.lane.b32.xlu0 %v123, 8
    %v653 = vpop.permute.xlu0 %652
    %654 = vrot.lane.b32.xlu0 %v124, 8
    %v655 = vpop.permute.xlu0 %654
    %656 = vrot.lane.b32.xlu0 %v125, 8
    %v657 = vpop.permute.xlu0 %656
    %658 = vrot.lane.b32.xlu0 %v126, 8
    %v659 = vpop.permute.xlu0 %658
    %660 = vrot.lane.b32.xlu0 %v127, 8
    %v661 = vpop.permute.xlu0 %660
    %662 = vrot.lane.b32.xlu0 %v128, 8
    %v663 = vpop.permute.xlu0 %662
    %664 = vrot.lane.b32.xlu0 %v129, 8
    %v665 = vpop.permute.xlu0 %664
    %666 = vrot.lane.b32.xlu0 %v130, 8
    %v667 = vpop.permute.xlu0 %666
    %668 = vrot.lane.b32.xlu0 %v131, 8
    %v669 = vpop.permute.xlu0 %668
    %670 = vrot.lane.b32.xlu0 %v132, 8
    %v671 = vpop.permute.xlu0 %670
    %672 = vrot.lane.b32.xlu0 %v133, 8
    %v673 = vpop.permute.xlu0 %672
    %674 = vrot.lane.b32.xlu0 %v134, 8
    %v675 = vpop.permute.xlu0 %674
    %676 = vrot.lane.b32.xlu0 %v135, 8
    %v677 = vpop.permute.xlu0 %676
    %678 = vrot.lane.b32.xlu0 %v136, 8
    %v679 = vpop.permute.xlu0 %678
    %680 = vrot.lane.b32.xlu0 %v137, 8
    %v681 = vpop.permute.xlu0 %680
    %682 = vrot.lane.b32.xlu0 %v138, 8
    %v683 = vpop.permute.xlu0 %682
    %684 = vrot.lane.b32.xlu0 %v139, 8
    %v685 = vpop.permute.xlu0 %684
    %686 = vrot.lane.b32.xlu0 %v140, 8
    %v687 = vpop.permute.xlu0 %686
    %688 = vrot.lane.b32.xlu0 %v141, 8
    %v689 = vpop.permute.xlu0 %688
    %690 = vrot.lane.b32.xlu0 %v142, 8
    %v691 = vpop.permute.xlu0 %690
    %692 = vrot.lane.b32.xlu0 %v143, 8
    %v693 = vpop.permute.xlu0 %692
    %694 = vrot.lane.b32.xlu0 %v144, 8
    %v695 = vpop.permute.xlu0 %694
    %696 = vrot.lane.b32.xlu0 %v145, 8
    %v697 = vpop.permute.xlu0 %696
    %698 = vrot.lane.b32.xlu0 %v146, 8
    %v699 = vpop.permute.xlu0 %698
    %700 = vrot.lane.b32.xlu0 %v147, 8
    %v701 = vpop.permute.xlu0 %700
    %702 = vrot.lane.b32.xlu0 %v148, 8
    %v703 = vpop.permute.xlu0 %702
    %704 = vrot.lane.b32.xlu0 %v149, 8
    %v705 = vpop.permute.xlu0 %704
    %706 = vrot.lane.b32.xlu0 %v150, 8
    %v707 = vpop.permute.xlu0 %706
    %708 = vrot.lane.b32.xlu0 %v151, 8
    %v709 = vpop.permute.xlu0 %708
    %710 = vrot.lane.b32.xlu0 %v152, 8
    %v711 = vpop.permute.xlu0 %710
    %712 = vrot.lane.b32.xlu0 %v153, 8
    %v713 = vpop.permute.xlu0 %712
    %714 = vrot.lane.b32.xlu0 %v154, 8
    %v715 = vpop.permute.xlu0 %714
    %716 = vrot.lane.b32.xlu0 %v155, 8
    %v717 = vpop.permute.xlu0 %716
    %718 = vrot.lane.b32.xlu0 %v156, 8
    %v719 = vpop.permute.xlu0 %718
    %720 = vrot.lane.b32.xlu0 %v157, 8
    %v721 = vpop.permute.xlu0 %720
    %722 = vrot.lane.b32.xlu0 %v158, 8
    %v723 = vpop.permute.xlu0 %722
    %724 = vrot.lane.b32.xlu0 %v159, 8
    %v725 = vpop.permute.xlu0 %724
    %726 = vrot.lane.b32.xlu0 %v160, 8
    %v727 = vpop.permute.xlu0 %726
    %728 = vrot.lane.b32.xlu0 %v161, 8
    %v729 = vpop.permute.xlu0 %728
    %730 = vrot.lane.b32.xlu0 %v162, 8
    %v731 = vpop.permute.xlu0 %730
    %732 = vrot.lane.b32.xlu0 %v163, 8
    %v733 = vpop.permute.xlu0 %732
    %734 = vrot.lane.b32.xlu0 %v164, 8
    %v735 = vpop.permute.xlu0 %734
    %736 = vrot.lane.b32.xlu0 %v165, 8
    %v737 = vpop.permute.xlu0 %736
    %738 = vrot.lane.b32.xlu0 %v166, 8
    %v739 = vpop.permute.xlu0 %738
    %740 = vrot.lane.b32.xlu0 %v167, 8
    %v741 = vpop.permute.xlu0 %740
    %742 = vrot.lane.b32.xlu0 %v168, 8
    %v743 = vpop.permute.xlu0 %742
    %744 = vrot.lane.b32.xlu0 %v169, 8
    %v745 = vpop.permute.xlu0 %744
    %746 = vrot.lane.b32.xlu0 %v170, 8
    %v747 = vpop.permute.xlu0 %746
    %748 = vrot.lane.b32.xlu0 %v171, 8
    %v749 = vpop.permute.xlu0 %748
    %750 = vrot.lane.b32.xlu0 %v172, 8
    %v751 = vpop.permute.xlu0 %750
    %752 = vrot.lane.b32.xlu0 %v173, 8
    %v753 = vpop.permute.xlu0 %752
    %754 = vrot.lane.b32.xlu0 %v174, 8
    %v755 = vpop.permute.xlu0 %754
    %756 = vrot.lane.b32.xlu0 %v175, 8
    %v757 = vpop.permute.xlu0 %756
    %758 = vrot.lane.b32.xlu0 %v176, 8
    %v759 = vpop.permute.xlu0 %758
    %760 = vrot.lane.b32.xlu0 %v177, 8
    %v761 = vpop.permute.xlu0 %760
    %906 = vrot.lane.b32.xlu0 %v178, 16
    %v907 = vpop.permute.xlu0 %906
    %908 = vrot.lane.b32.xlu0 %v179, 16
    %v909 = vpop.permute.xlu0 %908
    %910 = vrot.lane.b32.xlu0 %v180, 16
    %v911 = vpop.permute.xlu0 %910
    %912 = vrot.lane.b32.xlu0 %v181, 16
    %v913 = vpop.permute.xlu0 %912
    %914 = vrot.lane.b32.xlu0 %v182, 16
    %v915 = vpop.permute.xlu0 %914
    %916 = vrot.lane.b32.xlu0 %v183, 16
    %v917 = vpop.permute.xlu0 %916
    %918 = vrot.lane.b32.xlu0 %v184, 16
    %v919 = vpop.permute.xlu0 %918
    %920 = vrot.lane.b32.xlu0 %v185, 16
    %v921 = vpop.permute.xlu0 %920
    %922 = vrot.lane.b32.xlu0 %v186, 16
    %v923 = vpop.permute.xlu0 %922
    %924 = vrot.lane.b32.xlu0 %v187, 16
    %v925 = vpop.permute.xlu0 %924
    %926 = vrot.lane.b32.xlu0 %v188, 16
    %v927 = vpop.permute.xlu0 %926
    %928 = vrot.lane.b32.xlu0 %v189, 16
    %v929 = vpop.permute.xlu0 %928
    %930 = vrot.lane.b32.xlu0 %v190, 16
    %v931 = vpop.permute.xlu0 %930
    %932 = vrot.lane.b32.xlu0 %v191, 16
    %v933 = vpop.permute.xlu0 %932
    %934 = vrot.lane.b32.xlu0 %v192, 16
    %v935 = vpop.permute.xlu0 %934
    %936 = vrot.lane.b32.xlu0 %v193, 16
    %v937 = vpop.permute.xlu0 %936
    %938 = vrot.lane.b32.xlu0 %v194, 16
    %v939 = vpop.permute.xlu0 %938
    %940 = vrot.lane.b32.xlu0 %v195, 16
    %v941 = vpop.permute.xlu0 %940
    %942 = vrot.lane.b32.xlu0 %v196, 16
    %v943 = vpop.permute.xlu0 %942
    %944 = vrot.lane.b32.xlu0 %v197, 16
    %v945 = vpop.permute.xlu0 %944
    %946 = vrot.lane.b32.xlu0 %v198, 16
    %v947 = vpop.permute.xlu0 %946
    %948 = vrot.lane.b32.xlu0 %v199, 16
    %v949 = vpop.permute.xlu0 %948
    %950 = vrot.lane.b32.xlu0 %v200, 16
    %v951 = vpop.permute.xlu0 %950
    %952 = vrot.lane.b32.xlu0 %v201, 16
    %v953 = vpop.permute.xlu0 %952
    %954 = vrot.lane.b32.xlu0 %v202, 16
    %v955 = vpop.permute.xlu0 %954
    %956 = vrot.lane.b32.xlu0 %v203, 16
    %v957 = vpop.permute.xlu0 %956
    %958 = vrot.lane.b32.xlu0 %v204, 16
    %v959 = vpop.permute.xlu0 %958
    %960 = vrot.lane.b32.xlu0 %v205, 16
    %v961 = vpop.permute.xlu0 %960
    %962 = vrot.lane.b32.xlu0 %v206, 16
    %v963 = vpop.permute.xlu0 %962
    %964 = vrot.lane.b32.xlu0 %v207, 16
    %v965 = vpop.permute.xlu0 %964
    %966 = vrot.lane.b32.xlu0 %v208, 16
    %v967 = vpop.permute.xlu0 %966
    %968 = vrot.lane.b32.xlu0 %v209, 16
    %v969 = vpop.permute.xlu0 %968
    %970 = vrot.lane.b32.xlu0 %v210, 16
    %v971 = vpop.permute.xlu0 %970
    %972 = vrot.lane.b32.xlu0 %v211, 16
    %v973 = vpop.permute.xlu0 %972
    %974 = vrot.lane.b32.xlu0 %v212, 16
    %v975 = vpop.permute.xlu0 %974
    %976 = vrot.lane.b32.xlu0 %v213, 16
    %v977 = vpop.permute.xlu0 %976
    %978 = vrot.lane.b32.xlu0 %v214, 16
    %v979 = vpop.permute.xlu0 %978
    %980 = vrot.lane.b32.xlu0 %v215, 16
    %v981 = vpop.permute.xlu0 %980
    %982 = vrot.lane.b32.xlu0 %v216, 16
    %v983 = vpop.permute.xlu0 %982
    %984 = vrot.lane.b32.xlu0 %v217, 16
    %v985 = vpop.permute.xlu0 %984
    %986 = vrot.lane.b32.xlu0 %v218, 16
    %v987 = vpop.permute.xlu0 %986
    %988 = vrot.lane.b32.xlu0 %v219, 16
    %v989 = vpop.permute.xlu0 %988
    %990 = vrot.lane.b32.xlu0 %v220, 16
    %v991 = vpop.permute.xlu0 %990
    %992 = vrot.lane.b32.xlu0 %v221, 16
    %v993 = vpop.permute.xlu0 %992
    %994 = vrot.lane.b32.xlu0 %v222, 16
    %v995 = vpop.permute.xlu0 %994
    %996 = vrot.lane.b32.xlu0 %v223, 16
    %v997 = vpop.permute.xlu0 %996
    %998 = vrot.lane.b32.xlu0 %v224, 16
    %v999 = vpop.permute.xlu0 %998
    %1000 = vrot.lane.b32.xlu0 %v225, 16
    %v1001 = vpop.permute.xlu0 %1000
    %1002 = vrot.lane.b32.xlu0 %v226, 16
    %v1003 = vpop.permute.xlu0 %1002
    %1004 = vrot.lane.b32.xlu0 %v227, 16
    %v1005 = vpop.permute.xlu0 %1004
    %1006 = vrot.lane.b32.xlu0 %v228, 16
    %v1007 = vpop.permute.xlu0 %1006
    %1008 = vrot.lane.b32.xlu0 %v229, 16
    %v1009 = vpop.permute.xlu0 %1008
    %1010 = vrot.lane.b32.xlu0 %v230, 16
    %v1011 = vpop.permute.xlu0 %1010
    %1012 = vrot.lane.b32.xlu0 %v231, 16
    %v1013 = vpop.permute.xlu0 %1012
    %1014 = vrot.lane.b32.xlu0 %v232, 16
    %v1015 = vpop.permute.xlu0 %1014
    %1016 = vrot.lane.b32.xlu0 %v233, 16
    %v1017 = vpop.permute.xlu0 %1016
    %1018 = vrot.lane.b32.xlu0 %v234, 16
    %v1019 = vpop.permute.xlu0 %1018
    %1020 = vrot.lane.b32.xlu0 %v235, 16
    %v1021 = vpop.permute.xlu0 %1020
    %1022 = vrot.lane.b32.xlu0 %v236, 16
    %v1023 = vpop.permute.xlu0 %1022
    %1024 = vrot.lane.b32.xlu0 %v237, 16
    %v1025 = vpop.permute.xlu0 %1024
    %1026 = vrot.lane.b32.xlu0 %v238, 16
    %v1027 = vpop.permute.xlu0 %1026
    %1028 = vrot.lane.b32.xlu0 %v239, 16
    %v1029 = vpop.permute.xlu0 %1028
    %1030 = vrot.lane.b32.xlu0 %v240, 16
    %v1031 = vpop.permute.xlu0 %1030
    %1032 = vrot.lane.b32.xlu0 %v241, 16
    %v1033 = vpop.permute.xlu0 %1032
    %1034 = vrot.lane.b32.xlu0 %v242, 16
    %v1035 = vpop.permute.xlu0 %1034
    %1036 = vrot.lane.b32.xlu0 %v243, 16
    %v1037 = vpop.permute.xlu0 %1036
    %1038 = vrot.lane.b32.xlu0 %v244, 16
    %v1039 = vpop.permute.xlu0 %1038
    %1040 = vrot.lane.b32.xlu0 %v245, 16
    %v1041 = vpop.permute.xlu0 %1040
    %1042 = vrot.lane.b32.xlu0 %v246, 16
    %v1043 = vpop.permute.xlu0 %1042
    %1044 = vrot.lane.b32.xlu0 %v247, 16
    %v1045 = vpop.permute.xlu0 %1044
    %1046 = vrot.lane.b32.xlu0 %v248, 16
    %v1047 = vpop.permute.xlu0 %1046
    %1048 = vrot.lane.b32.xlu0 %v249, 16
    %v1049 = vpop.permute.xlu0 %1048
    %1126 = vrot.lane.b32.xlu0 %v180, 24
    %v1127 = vpop.permute.xlu0 %1126
    %1128 = vrot.lane.b32.xlu0 %v181, 24
    %v1129 = vpop.permute.xlu0 %1128
    %1130 = vrot.lane.b32.xlu0 %v182, 24
    %v1131 = vpop.permute.xlu0 %1130
    %1132 = vrot.lane.b32.xlu0 %v183, 24
    %v1133 = vpop.permute.xlu0 %1132
    %1134 = vrot.lane.b32.xlu0 %v184, 24
    %v1135 = vpop.permute.xlu0 %1134
    %1136 = vrot.lane.b32.xlu0 %v185, 24
    %v1137 = vpop.permute.xlu0 %1136
    %1138 = vrot.lane.b32.xlu0 %v186, 24
    %v1139 = vpop.permute.xlu0 %1138
    %1140 = vrot.lane.b32.xlu0 %v187, 24
    %v1141 = vpop.permute.xlu0 %1140
    %1142 = vrot.lane.b32.xlu0 %v188, 24
    %v1143 = vpop.permute.xlu0 %1142
    %1144 = vrot.lane.b32.xlu0 %v189, 24
    %v1145 = vpop.permute.xlu0 %1144
    %1146 = vrot.lane.b32.xlu0 %v190, 24
    %v1147 = vpop.permute.xlu0 %1146
    %1148 = vrot.lane.b32.xlu0 %v191, 24
    %v1149 = vpop.permute.xlu0 %1148
    %1150 = vrot.lane.b32.xlu0 %v192, 24
    %v1151 = vpop.permute.xlu0 %1150
    %1152 = vrot.lane.b32.xlu0 %v193, 24
    %v1153 = vpop.permute.xlu0 %1152
    %1154 = vrot.lane.b32.xlu0 %v194, 24
    %v1155 = vpop.permute.xlu0 %1154
    %1156 = vrot.lane.b32.xlu0 %v195, 24
    %v1157 = vpop.permute.xlu0 %1156
    %1158 = vrot.lane.b32.xlu0 %v196, 24
    %v1159 = vpop.permute.xlu0 %1158
    %1160 = vrot.lane.b32.xlu0 %v197, 24
    %v1161 = vpop.permute.xlu0 %1160
    %1162 = vrot.lane.b32.xlu0 %v198, 24
    %v1163 = vpop.permute.xlu0 %1162
    %1164 = vrot.lane.b32.xlu0 %v199, 24
    %v1165 = vpop.permute.xlu0 %1164
    %1166 = vrot.lane.b32.xlu0 %v200, 24
    %v1167 = vpop.permute.xlu0 %1166
    %1168 = vrot.lane.b32.xlu0 %v201, 24
    %v1169 = vpop.permute.xlu0 %1168
    %1170 = vrot.lane.b32.xlu0 %v202, 24
    %v1171 = vpop.permute.xlu0 %1170
    %1172 = vrot.lane.b32.xlu0 %v203, 24
    %v1173 = vpop.permute.xlu0 %1172
    %1174 = vrot.lane.b32.xlu0 %v204, 24
    %v1175 = vpop.permute.xlu0 %1174
    %1176 = vrot.lane.b32.xlu0 %v205, 24
    %v1177 = vpop.permute.xlu0 %1176
    %1178 = vrot.lane.b32.xlu0 %v206, 24
    %v1179 = vpop.permute.xlu0 %1178
    %1180 = vrot.lane.b32.xlu0 %v207, 24
    %v1181 = vpop.permute.xlu0 %1180
    %1182 = vrot.lane.b32.xlu0 %v208, 24
    %v1183 = vpop.permute.xlu0 %1182
    %1184 = vrot.lane.b32.xlu0 %v209, 24
    %v1185 = vpop.permute.xlu0 %1184
    %1186 = vrot.lane.b32.xlu0 %v210, 24
    %v1187 = vpop.permute.xlu0 %1186
    %1188 = vrot.lane.b32.xlu0 %v211, 24
    %v1189 = vpop.permute.xlu0 %1188
    %1190 = vrot.lane.b32.xlu0 %v212, 24
    %v1191 = vpop.permute.xlu0 %1190
    %1192 = vrot.lane.b32.xlu0 %v213, 24
    %v1193 = vpop.permute.xlu0 %1192
    %1194 = vrot.lane.b32.xlu0 %v250, 24
    %v1195 = vpop.permute.xlu0 %1194
    %1196 = vrot.lane.b32.xlu0 %v251, 24
    %v1197 = vpop.permute.xlu0 %1196
    %1198 = vrot.lane.b32.xlu0 %v216, 24
    %v1199 = vpop.permute.xlu0 %1198
    %1200 = vrot.lane.b32.xlu0 %v217, 24
    %v1201 = vpop.permute.xlu0 %1200
    %1202 = vrot.lane.b32.xlu0 %v218, 24
    %v1203 = vpop.permute.xlu0 %1202
    %1204 = vrot.lane.b32.xlu0 %v219, 24
    %v1205 = vpop.permute.xlu0 %1204
    %1206 = vrot.lane.b32.xlu0 %v220, 24
    %v1207 = vpop.permute.xlu0 %1206
    %1208 = vrot.lane.b32.xlu0 %v221, 24
    %v1209 = vpop.permute.xlu0 %1208
    %1210 = vrot.lane.b32.xlu0 %v222, 24
    %v1211 = vpop.permute.xlu0 %1210
    %1212 = vrot.lane.b32.xlu0 %v223, 24
    %v1213 = vpop.permute.xlu0 %1212
    %1214 = vrot.lane.b32.xlu0 %v224, 24
    %v1215 = vpop.permute.xlu0 %1214
    %1216 = vrot.lane.b32.xlu0 %v225, 24
    %v1217 = vpop.permute.xlu0 %1216
    %1218 = vrot.lane.b32.xlu0 %v226, 24
    %v1219 = vpop.permute.xlu0 %1218
    %1220 = vrot.lane.b32.xlu0 %v227, 24
    %v1221 = vpop.permute.xlu0 %1220
    %1222 = vrot.lane.b32.xlu0 %v228, 24
    %v1223 = vpop.permute.xlu0 %1222
    %1224 = vrot.lane.b32.xlu0 %v229, 24
    %v1225 = vpop.permute.xlu0 %1224
    %1226 = vrot.lane.b32.xlu0 %v230, 24
    %v1227 = vpop.permute.xlu0 %1226
    %1228 = vrot.lane.b32.xlu0 %v231, 24
    %v1229 = vpop.permute.xlu0 %1228
    %1230 = vrot.lane.b32.xlu0 %v232, 24
    %v1231 = vpop.permute.xlu0 %1230
    %1232 = vrot.lane.b32.xlu0 %v233, 24
    %v1233 = vpop.permute.xlu0 %1232
    %1234 = vrot.lane.b32.xlu0 %v234, 24
    %v1235 = vpop.permute.xlu0 %1234
    %1236 = vrot.lane.b32.xlu0 %v235, 24
    %v1237 = vpop.permute.xlu0 %1236
    %1238 = vrot.lane.b32.xlu0 %v236, 24
    %v1239 = vpop.permute.xlu0 %1238
    %1240 = vrot.lane.b32.xlu0 %v237, 24
    %v1241 = vpop.permute.xlu0 %1240
    %1242 = vrot.lane.b32.xlu0 %v238, 24
    %v1243 = vpop.permute.xlu0 %1242
    %1244 = vrot.lane.b32.xlu0 %v239, 24
    %v1245 = vpop.permute.xlu0 %1244
    %1246 = vrot.lane.b32.xlu0 %v240, 24
    %v1247 = vpop.permute.xlu0 %1246
    %1248 = vrot.lane.b32.xlu0 %v241, 24
    %v1249 = vpop.permute.xlu0 %1248
    %1250 = vrot.lane.b32.xlu0 %v242, 24
    %v1251 = vpop.permute.xlu0 %1250
    %1252 = vrot.lane.b32.xlu0 %v243, 24
    %v1253 = vpop.permute.xlu0 %1252
    %1254 = vrot.lane.b32.xlu0 %v244, 24
    %v1255 = vpop.permute.xlu0 %1254
    %1256 = vrot.lane.b32.xlu0 %v245, 24
    %v1257 = vpop.permute.xlu0 %1256
    %1258 = vrot.lane.b32.xlu0 %v246, 24
    %v1259 = vpop.permute.xlu0 %1258
    %1260 = vrot.lane.b32.xlu0 %v247, 24
    %v1261 = vpop.permute.xlu0 %1260
    %1262 = vrot.lane.b32.xlu0 %v248, 24
    %v1263 = vpop.permute.xlu0 %1262
    %1264 = vrot.lane.b32.xlu0 %v249, 24
    %v1265 = vpop.permute.xlu0 %1264
    %1266 = vrot.lane.b32.xlu0 %v252, 24
    %v1267 = vpop.permute.xlu0 %1266
    %1268 = vrot.lane.b32.xlu0 %v253, 24
    %v1269 = vpop.permute.xlu0 %1268
    %1414 = vrot.lane.b32.xlu0 %v254, 32
    %v1415 = vpop.permute.xlu0 %1414
    %1416 = vrot.lane.b32.xlu0 %v255, 32
    %v1417 = vpop.permute.xlu0 %1416
    %1418 = vrot.lane.b32.xlu0 %v256, 32
    %v1419 = vpop.permute.xlu0 %1418
    %1420 = vrot.lane.b32.xlu0 %v257, 32
    %v1421 = vpop.permute.xlu0 %1420
    %1422 = vrot.lane.b32.xlu0 %v258, 32
    %v1423 = vpop.permute.xlu0 %1422
    %1424 = vrot.lane.b32.xlu0 %v259, 32
    %v1425 = vpop.permute.xlu0 %1424
    %1426 = vrot.lane.b32.xlu0 %v260, 32
    %v1427 = vpop.permute.xlu0 %1426
    %1428 = vrot.lane.b32.xlu0 %v261, 32
    %v1429 = vpop.permute.xlu0 %1428
    %1430 = vrot.lane.b32.xlu0 %v262, 32
    %v1431 = vpop.permute.xlu0 %1430
    %1432 = vrot.lane.b32.xlu0 %v263, 32
    %v1433 = vpop.permute.xlu0 %1432
    %1434 = vrot.lane.b32.xlu0 %v264, 32
    %v1435 = vpop.permute.xlu0 %1434
    %1436 = vrot.lane.b32.xlu0 %v265, 32
    %v1437 = vpop.permute.xlu0 %1436
    %1438 = vrot.lane.b32.xlu0 %v266, 32
    %v1439 = vpop.permute.xlu0 %1438
    %1440 = vrot.lane.b32.xlu0 %v267, 32
    %v1441 = vpop.permute.xlu0 %1440
    %1442 = vrot.lane.b32.xlu0 %v268, 32
    %v1443 = vpop.permute.xlu0 %1442
    %1444 = vrot.lane.b32.xlu0 %v269, 32
    %v1445 = vpop.permute.xlu0 %1444
    %1446 = vrot.lane.b32.xlu0 %v270, 32
    %v1447 = vpop.permute.xlu0 %1446
    %1448 = vrot.lane.b32.xlu0 %v271, 32
    %v1449 = vpop.permute.xlu0 %1448
    %1450 = vrot.lane.b32.xlu0 %v272, 32
    %v1451 = vpop.permute.xlu0 %1450
    %1452 = vrot.lane.b32.xlu0 %v273, 32
    %v1453 = vpop.permute.xlu0 %1452
    %1454 = vrot.lane.b32.xlu0 %v274, 32
    %v1455 = vpop.permute.xlu0 %1454
    %1456 = vrot.lane.b32.xlu0 %v275, 32
    %v1457 = vpop.permute.xlu0 %1456
    %1458 = vrot.lane.b32.xlu0 %v276, 32
    %v1459 = vpop.permute.xlu0 %1458
    %1460 = vrot.lane.b32.xlu0 %v277, 32
    %v1461 = vpop.permute.xlu0 %1460
    %1462 = vrot.lane.b32.xlu0 %v278, 32
    %v1463 = vpop.permute.xlu0 %1462
    %1464 = vrot.lane.b32.xlu0 %v279, 32
    %v1465 = vpop.permute.xlu0 %1464
    %1466 = vrot.lane.b32.xlu0 %v280, 32
    %v1467 = vpop.permute.xlu0 %1466
    %1468 = vrot.lane.b32.xlu0 %v281, 32
    %v1469 = vpop.permute.xlu0 %1468
    %1470 = vrot.lane.b32.xlu0 %v282, 32
    %v1471 = vpop.permute.xlu0 %1470
    %1472 = vrot.lane.b32.xlu0 %v283, 32
    %v1473 = vpop.permute.xlu0 %1472
    %1474 = vrot.lane.b32.xlu0 %v284, 32
    %v1475 = vpop.permute.xlu0 %1474
    %1476 = vrot.lane.b32.xlu0 %v285, 32
    %v1477 = vpop.permute.xlu0 %1476
    %1478 = vrot.lane.b32.xlu0 %v286, 32
    %v1479 = vpop.permute.xlu0 %1478
    %1480 = vrot.lane.b32.xlu0 %v287, 32
    %v1481 = vpop.permute.xlu0 %1480
    %1482 = vrot.lane.b32.xlu0 %v288, 32
    %v1483 = vpop.permute.xlu0 %1482
    %1484 = vrot.lane.b32.xlu0 %v289, 32
    %v1485 = vpop.permute.xlu0 %1484
    %1486 = vrot.lane.b32.xlu0 %v290, 32
    %v1487 = vpop.permute.xlu0 %1486
    %1488 = vrot.lane.b32.xlu0 %v291, 32
    %v1489 = vpop.permute.xlu0 %1488
    %1490 = vrot.lane.b32.xlu0 %v292, 32
    %v1491 = vpop.permute.xlu0 %1490
    %1492 = vrot.lane.b32.xlu0 %v293, 32
    %v1493 = vpop.permute.xlu0 %1492
    %1494 = vrot.lane.b32.xlu0 %v294, 32
    %v1495 = vpop.permute.xlu0 %1494
    %1496 = vrot.lane.b32.xlu0 %v295, 32
    %v1497 = vpop.permute.xlu0 %1496
    %1498 = vrot.lane.b32.xlu0 %v296, 32
    %v1499 = vpop.permute.xlu0 %1498
    %1500 = vrot.lane.b32.xlu0 %v297, 32
    %v1501 = vpop.permute.xlu0 %1500
    %1502 = vrot.lane.b32.xlu0 %v298, 32
    %v1503 = vpop.permute.xlu0 %1502
    %1504 = vrot.lane.b32.xlu0 %v299, 32
    %v1505 = vpop.permute.xlu0 %1504
    %1506 = vrot.lane.b32.xlu0 %v300, 32
    %v1507 = vpop.permute.xlu0 %1506
    %1508 = vrot.lane.b32.xlu0 %v301, 32
    %v1509 = vpop.permute.xlu0 %1508
    %1510 = vrot.lane.b32.xlu0 %v302, 32
    %v1511 = vpop.permute.xlu0 %1510
    %1512 = vrot.lane.b32.xlu0 %v303, 32
    %v1513 = vpop.permute.xlu0 %1512
    %1514 = vrot.lane.b32.xlu0 %v304, 32
    %v1515 = vpop.permute.xlu0 %1514
    %1516 = vrot.lane.b32.xlu0 %v305, 32
    %v1517 = vpop.permute.xlu0 %1516
    %1518 = vrot.lane.b32.xlu0 %v306, 32
    %v1519 = vpop.permute.xlu0 %1518
    %1520 = vrot.lane.b32.xlu0 %v307, 32
    %v1521 = vpop.permute.xlu0 %1520
    %1522 = vrot.lane.b32.xlu0 %v308, 32
    %v1523 = vpop.permute.xlu0 %1522
    %1524 = vrot.lane.b32.xlu0 %v309, 32
    %v1525 = vpop.permute.xlu0 %1524
    %1526 = vrot.lane.b32.xlu0 %v310, 32
    %v1527 = vpop.permute.xlu0 %1526
    %1528 = vrot.lane.b32.xlu0 %v311, 32
    %v1529 = vpop.permute.xlu0 %1528
    %1530 = vrot.lane.b32.xlu0 %v312, 32
    %v1531 = vpop.permute.xlu0 %1530
    %1532 = vrot.lane.b32.xlu0 %v313, 32
    %v1533 = vpop.permute.xlu0 %1532
    %1534 = vrot.lane.b32.xlu0 %v314, 32
    %v1535 = vpop.permute.xlu0 %1534
    %1536 = vrot.lane.b32.xlu0 %v315, 32
    %v1537 = vpop.permute.xlu0 %1536
    %1538 = vrot.lane.b32.xlu0 %v316, 32
    %v1539 = vpop.permute.xlu0 %1538
    %1540 = vrot.lane.b32.xlu0 %v317, 32
    %v1541 = vpop.permute.xlu0 %1540
    %1542 = vrot.lane.b32.xlu0 %v318, 32
    %v1543 = vpop.permute.xlu0 %1542
    %1544 = vrot.lane.b32.xlu0 %v319, 32
    %v1545 = vpop.permute.xlu0 %1544
    %1546 = vrot.lane.b32.xlu0 %v320, 32
    %v1547 = vpop.permute.xlu0 %1546
    %1548 = vrot.lane.b32.xlu0 %v321, 32
    %v1549 = vpop.permute.xlu0 %1548
    %1550 = vrot.lane.b32.xlu0 %v322, 32
    %v1551 = vpop.permute.xlu0 %1550
    %1552 = vrot.lane.b32.xlu0 %v323, 32
    %v1553 = vpop.permute.xlu0 %1552
    %1554 = vrot.lane.b32.xlu0 %v324, 32
    %v1555 = vpop.permute.xlu0 %1554
    %1556 = vrot.lane.b32.xlu0 %v325, 32
    %v1557 = vpop.permute.xlu0 %1556
    %1702 = vrot.lane.b32.xlu0 %v326, 40
    %v1703 = vpop.permute.xlu0 %1702
    %1704 = vrot.lane.b32.xlu0 %v327, 40
    %v1705 = vpop.permute.xlu0 %1704
    %1706 = vrot.lane.b32.xlu0 %v328, 40
    %v1707 = vpop.permute.xlu0 %1706
    %1708 = vrot.lane.b32.xlu0 %v329, 40
    %v1709 = vpop.permute.xlu0 %1708
    %1710 = vrot.lane.b32.xlu0 %v330, 40
    %v1711 = vpop.permute.xlu0 %1710
    %1712 = vrot.lane.b32.xlu0 %v331, 40
    %v1713 = vpop.permute.xlu0 %1712
    %1714 = vrot.lane.b32.xlu0 %v332, 40
    %v1715 = vpop.permute.xlu0 %1714
    %1716 = vrot.lane.b32.xlu0 %v333, 40
    %v1717 = vpop.permute.xlu0 %1716
    %1718 = vrot.lane.b32.xlu0 %v334, 40
    %v1719 = vpop.permute.xlu0 %1718
    %1720 = vrot.lane.b32.xlu0 %v335, 40
    %v1721 = vpop.permute.xlu0 %1720
    %1722 = vrot.lane.b32.xlu0 %v336, 40
    %v1723 = vpop.permute.xlu0 %1722
    %1724 = vrot.lane.b32.xlu0 %v337, 40
    %v1725 = vpop.permute.xlu0 %1724
    %1726 = vrot.lane.b32.xlu0 %v338, 40
    %v1727 = vpop.permute.xlu0 %1726
    %1728 = vrot.lane.b32.xlu0 %v339, 40
    %v1729 = vpop.permute.xlu0 %1728
    %1730 = vrot.lane.b32.xlu0 %v340, 40
    %v1731 = vpop.permute.xlu0 %1730
    %1732 = vrot.lane.b32.xlu0 %v341, 40
    %v1733 = vpop.permute.xlu0 %1732
    %1734 = vrot.lane.b32.xlu0 %v342, 40
    %v1735 = vpop.permute.xlu0 %1734
    %1736 = vrot.lane.b32.xlu0 %v343, 40
    %v1737 = vpop.permute.xlu0 %1736
    %1738 = vrot.lane.b32.xlu0 %v344, 40
    %v1739 = vpop.permute.xlu0 %1738
    %1740 = vrot.lane.b32.xlu0 %v345, 40
    %v1741 = vpop.permute.xlu0 %1740
    %1742 = vrot.lane.b32.xlu0 %v346, 40
    %v1743 = vpop.permute.xlu0 %1742
    %1744 = vrot.lane.b32.xlu0 %v347, 40
    %v1745 = vpop.permute.xlu0 %1744
    %1746 = vrot.lane.b32.xlu0 %v348, 40
    %v1747 = vpop.permute.xlu0 %1746
    %1748 = vrot.lane.b32.xlu0 %v349, 40
    %v1749 = vpop.permute.xlu0 %1748
    %1750 = vrot.lane.b32.xlu0 %v350, 40
    %v1751 = vpop.permute.xlu0 %1750
    %1752 = vrot.lane.b32.xlu0 %v351, 40
    %v1753 = vpop.permute.xlu0 %1752
    %1754 = vrot.lane.b32.xlu0 %v352, 40
    %v1755 = vpop.permute.xlu0 %1754
    %1756 = vrot.lane.b32.xlu0 %v353, 40
    %v1757 = vpop.permute.xlu0 %1756
    %1758 = vrot.lane.b32.xlu0 %v354, 40
    %v1759 = vpop.permute.xlu0 %1758
    %1760 = vrot.lane.b32.xlu0 %v355, 40
    %v1761 = vpop.permute.xlu0 %1760
    %1762 = vrot.lane.b32.xlu0 %v356, 40
    %v1763 = vpop.permute.xlu0 %1762
    %1764 = vrot.lane.b32.xlu0 %v357, 40
    %v1765 = vpop.permute.xlu0 %1764
    %1766 = vrot.lane.b32.xlu0 %v358, 40
    %v1767 = vpop.permute.xlu0 %1766
    %1768 = vrot.lane.b32.xlu0 %v359, 40
    %v1769 = vpop.permute.xlu0 %1768
    %1770 = vrot.lane.b32.xlu0 %v360, 40
    %v1771 = vpop.permute.xlu0 %1770
    %1772 = vrot.lane.b32.xlu0 %v361, 40
    %v1773 = vpop.permute.xlu0 %1772
    %1774 = vrot.lane.b32.xlu0 %v362, 40
    %v1775 = vpop.permute.xlu0 %1774
    %1776 = vrot.lane.b32.xlu0 %v363, 40
    %v1777 = vpop.permute.xlu0 %1776
    %1778 = vrot.lane.b32.xlu0 %v364, 40
    %v1779 = vpop.permute.xlu0 %1778
    %1780 = vrot.lane.b32.xlu0 %v365, 40
    %v1781 = vpop.permute.xlu0 %1780
    %1782 = vrot.lane.b32.xlu0 %v366, 40
    %v1783 = vpop.permute.xlu0 %1782
    %1784 = vrot.lane.b32.xlu0 %v367, 40
    %v1785 = vpop.permute.xlu0 %1784
    %1786 = vrot.lane.b32.xlu0 %v368, 40
    %v1787 = vpop.permute.xlu0 %1786
    %1788 = vrot.lane.b32.xlu0 %v369, 40
    %v1789 = vpop.permute.xlu0 %1788
    %1790 = vrot.lane.b32.xlu0 %v370, 40
    %v1791 = vpop.permute.xlu0 %1790
    %1792 = vrot.lane.b32.xlu0 %v371, 40
    %v1793 = vpop.permute.xlu0 %1792
    %1794 = vrot.lane.b32.xlu0 %v372, 40
    %v1795 = vpop.permute.xlu0 %1794
    %1796 = vrot.lane.b32.xlu0 %v373, 40
    %v1797 = vpop.permute.xlu0 %1796
    %1798 = vrot.lane.b32.xlu0 %v374, 40
    %v1799 = vpop.permute.xlu0 %1798
    %1800 = vrot.lane.b32.xlu0 %v375, 40
    %v1801 = vpop.permute.xlu0 %1800
    %1802 = vrot.lane.b32.xlu0 %v376, 40
    %v1803 = vpop.permute.xlu0 %1802
    %1804 = vrot.lane.b32.xlu0 %v377, 40
    %v1805 = vpop.permute.xlu0 %1804
    %1806 = vrot.lane.b32.xlu0 %v378, 40
    %v1807 = vpop.permute.xlu0 %1806
    %1808 = vrot.lane.b32.xlu0 %v379, 40
    %v1809 = vpop.permute.xlu0 %1808
    %1810 = vrot.lane.b32.xlu0 %v380, 40
    %v1811 = vpop.permute.xlu0 %1810
    %1812 = vrot.lane.b32.xlu0 %v381, 40
    %v1813 = vpop.permute.xlu0 %1812
    %1814 = vrot.lane.b32.xlu0 %v382, 40
    %v1815 = vpop.permute.xlu0 %1814
    %1816 = vrot.lane.b32.xlu0 %v383, 40
    %v1817 = vpop.permute.xlu0 %1816
    %1818 = vrot.lane.b32.xlu0 %v384, 40
    %v1819 = vpop.permute.xlu0 %1818
    %1820 = vrot.lane.b32.xlu0 %v385, 40
    %v1821 = vpop.permute.xlu0 %1820
    %1822 = vrot.lane.b32.xlu0 %v386, 40
    %v1823 = vpop.permute.xlu0 %1822
    %1824 = vrot.lane.b32.xlu0 %v387, 40
    %v1825 = vpop.permute.xlu0 %1824
    %1826 = vrot.lane.b32.xlu0 %v388, 40
    %v1827 = vpop.permute.xlu0 %1826
    %1828 = vrot.lane.b32.xlu0 %v389, 40
    %v1829 = vpop.permute.xlu0 %1828
    %1830 = vrot.lane.b32.xlu0 %v390, 40
    %v1831 = vpop.permute.xlu0 %1830
    %1832 = vrot.lane.b32.xlu0 %v391, 40
    %v1833 = vpop.permute.xlu0 %1832
    %1834 = vrot.lane.b32.xlu0 %v392, 40
    %v1835 = vpop.permute.xlu0 %1834
    %1836 = vrot.lane.b32.xlu0 %v393, 40
    %v1837 = vpop.permute.xlu0 %1836
    %1838 = vrot.lane.b32.xlu0 %v394, 40
    %v1839 = vpop.permute.xlu0 %1838
    %1840 = vrot.lane.b32.xlu0 %v395, 40
    %v1841 = vpop.permute.xlu0 %1840
    %1842 = vrot.lane.b32.xlu0 %v396, 40
    %v1843 = vpop.permute.xlu0 %1842
    %1844 = vrot.lane.b32.xlu0 %v397, 40
    %v1845 = vpop.permute.xlu0 %1844
    %1922 = vrot.lane.b32.xlu0 %v328, 48
    %v1923 = vpop.permute.xlu0 %1922
    %1924 = vrot.lane.b32.xlu0 %v329, 48
    %v1925 = vpop.permute.xlu0 %1924
    %1926 = vrot.lane.b32.xlu0 %v330, 48
    %v1927 = vpop.permute.xlu0 %1926
    %1928 = vrot.lane.b32.xlu0 %v331, 48
    %v1929 = vpop.permute.xlu0 %1928
    %1930 = vrot.lane.b32.xlu0 %v332, 48
    %v1931 = vpop.permute.xlu0 %1930
    %1932 = vrot.lane.b32.xlu0 %v333, 48
    %v1933 = vpop.permute.xlu0 %1932
    %1934 = vrot.lane.b32.xlu0 %v334, 48
    %v1935 = vpop.permute.xlu0 %1934
    %1936 = vrot.lane.b32.xlu0 %v335, 48
    %v1937 = vpop.permute.xlu0 %1936
    %1938 = vrot.lane.b32.xlu0 %v336, 48
    %v1939 = vpop.permute.xlu0 %1938
    %1940 = vrot.lane.b32.xlu0 %v337, 48
    %v1941 = vpop.permute.xlu0 %1940
    %1942 = vrot.lane.b32.xlu0 %v338, 48
    %v1943 = vpop.permute.xlu0 %1942
    %1944 = vrot.lane.b32.xlu0 %v339, 48
    %v1945 = vpop.permute.xlu0 %1944
    %1946 = vrot.lane.b32.xlu0 %v340, 48
    %v1947 = vpop.permute.xlu0 %1946
    %1948 = vrot.lane.b32.xlu0 %v341, 48
    %v1949 = vpop.permute.xlu0 %1948
    %1950 = vrot.lane.b32.xlu0 %v342, 48
    %v1951 = vpop.permute.xlu0 %1950
    %1952 = vrot.lane.b32.xlu0 %v343, 48
    %v1953 = vpop.permute.xlu0 %1952
    %1954 = vrot.lane.b32.xlu0 %v344, 48
    %v1955 = vpop.permute.xlu0 %1954
    %1956 = vrot.lane.b32.xlu0 %v345, 48
    %v1957 = vpop.permute.xlu0 %1956
    %1958 = vrot.lane.b32.xlu0 %v346, 48
    %v1959 = vpop.permute.xlu0 %1958
    %1960 = vrot.lane.b32.xlu0 %v347, 48
    %v1961 = vpop.permute.xlu0 %1960
    %1962 = vrot.lane.b32.xlu0 %v348, 48
    %v1963 = vpop.permute.xlu0 %1962
    %1964 = vrot.lane.b32.xlu0 %v349, 48
    %v1965 = vpop.permute.xlu0 %1964
    %1966 = vrot.lane.b32.xlu0 %v350, 48
    %v1967 = vpop.permute.xlu0 %1966
    %1968 = vrot.lane.b32.xlu0 %v351, 48
    %v1969 = vpop.permute.xlu0 %1968
    %1970 = vrot.lane.b32.xlu0 %v352, 48
    %v1971 = vpop.permute.xlu0 %1970
    %1972 = vrot.lane.b32.xlu0 %v353, 48
    %v1973 = vpop.permute.xlu0 %1972
    %1974 = vrot.lane.b32.xlu0 %v354, 48
    %v1975 = vpop.permute.xlu0 %1974
    %1976 = vrot.lane.b32.xlu0 %v355, 48
    %v1977 = vpop.permute.xlu0 %1976
    %1978 = vrot.lane.b32.xlu0 %v356, 48
    %v1979 = vpop.permute.xlu0 %1978
    %1980 = vrot.lane.b32.xlu0 %v357, 48
    %v1981 = vpop.permute.xlu0 %1980
    %1982 = vrot.lane.b32.xlu0 %v358, 48
    %v1983 = vpop.permute.xlu0 %1982
    %1984 = vrot.lane.b32.xlu0 %v359, 48
    %v1985 = vpop.permute.xlu0 %1984
    %1986 = vrot.lane.b32.xlu0 %v360, 48
    %v1987 = vpop.permute.xlu0 %1986
    %1988 = vrot.lane.b32.xlu0 %v361, 48
    %v1989 = vpop.permute.xlu0 %1988
    %1990 = vrot.lane.b32.xlu0 %v398, 48
    %v1991 = vpop.permute.xlu0 %1990
    %1992 = vrot.lane.b32.xlu0 %v399, 48
    %v1993 = vpop.permute.xlu0 %1992
    %1994 = vrot.lane.b32.xlu0 %v364, 48
    %v1995 = vpop.permute.xlu0 %1994
    %1996 = vrot.lane.b32.xlu0 %v365, 48
    %v1997 = vpop.permute.xlu0 %1996
    %1998 = vrot.lane.b32.xlu0 %v366, 48
    %v1999 = vpop.permute.xlu0 %1998
    %2000 = vrot.lane.b32.xlu0 %v367, 48
    %v2001 = vpop.permute.xlu0 %2000
    %2002 = vrot.lane.b32.xlu0 %v368, 48
    %v2003 = vpop.permute.xlu0 %2002
    %2004 = vrot.lane.b32.xlu0 %v369, 48
    %v2005 = vpop.permute.xlu0 %2004
    %2006 = vrot.lane.b32.xlu0 %v370, 48
    %v2007 = vpop.permute.xlu0 %2006
    %2008 = vrot.lane.b32.xlu0 %v371, 48
    %v2009 = vpop.permute.xlu0 %2008
    %2010 = vrot.lane.b32.xlu0 %v372, 48
    %v2011 = vpop.permute.xlu0 %2010
    %2012 = vrot.lane.b32.xlu0 %v373, 48
    %v2013 = vpop.permute.xlu0 %2012
    %2014 = vrot.lane.b32.xlu0 %v374, 48
    %v2015 = vpop.permute.xlu0 %2014
    %2016 = vrot.lane.b32.xlu0 %v375, 48
    %v2017 = vpop.permute.xlu0 %2016
    %2018 = vrot.lane.b32.xlu0 %v376, 48
    %v2019 = vpop.permute.xlu0 %2018
    %2020 = vrot.lane.b32.xlu0 %v377, 48
    %v2021 = vpop.permute.xlu0 %2020
    %2022 = vrot.lane.b32.xlu0 %v378, 48
    %v2023 = vpop.permute.xlu0 %2022
    %2024 = vrot.lane.b32.xlu0 %v379, 48
    %v2025 = vpop.permute.xlu0 %2024
    %2026 = vrot.lane.b32.xlu0 %v380, 48
    %v2027 = vpop.permute.xlu0 %2026
    %2028 = vrot.lane.b32.xlu0 %v381, 48
    %v2029 = vpop.permute.xlu0 %2028
    %2030 = vrot.lane.b32.xlu0 %v382, 48
    %v2031 = vpop.permute.xlu0 %2030
    %2032 = vrot.lane.b32.xlu0 %v383, 48
    %v2033 = vpop.permute.xlu0 %2032
    %2034 = vrot.lane.b32.xlu0 %v384, 48
    %v2035 = vpop.permute.xlu0 %2034
    %2036 = vrot.lane.b32.xlu0 %v385, 48
    %v2037 = vpop.permute.xlu0 %2036
    %2038 = vrot.lane.b32.xlu0 %v386, 48
    %v2039 = vpop.permute.xlu0 %2038
    %2040 = vrot.lane.b32.xlu0 %v387, 48
    %v2041 = vpop.permute.xlu0 %2040
    %2042 = vrot.lane.b32.xlu0 %v388, 48
    %v2043 = vpop.permute.xlu0 %2042
    %2044 = vrot.lane.b32.xlu0 %v389, 48
    %v2045 = vpop.permute.xlu0 %2044
    %2046 = vrot.lane.b32.xlu0 %v390, 48
    %v2047 = vpop.permute.xlu0 %2046
    %2048 = vrot.lane.b32.xlu0 %v391, 48
    %v2049 = vpop.permute.xlu0 %2048
    %2050 = vrot.lane.b32.xlu0 %v392, 48
    %v2051 = vpop.permute.xlu0 %2050
    %2052 = vrot.lane.b32.xlu0 %v393, 48
    %v2053 = vpop.permute.xlu0 %2052
    %2054 = vrot.lane.b32.xlu0 %v394, 48
    %v2055 = vpop.permute.xlu0 %2054
    %2056 = vrot.lane.b32.xlu0 %v395, 48
    %v2057 = vpop.permute.xlu0 %2056
    %2058 = vrot.lane.b32.xlu0 %v396, 48
    %v2059 = vpop.permute.xlu0 %2058
    %2060 = vrot.lane.b32.xlu0 %v397, 48
    %v2061 = vpop.permute.xlu0 %2060
    %2062 = vrot.lane.b32.xlu0 %v400, 48
    %v2063 = vpop.permute.xlu0 %2062
    %2064 = vrot.lane.b32.xlu0 %v401, 48
    %v2065 = vpop.permute.xlu0 %2064
    %2210 = vrot.lane.b32.xlu0 %v402, 56
    %v2211 = vpop.permute.xlu0 %2210
    %2212 = vrot.lane.b32.xlu0 %v403, 56
    %v2213 = vpop.permute.xlu0 %2212
    %2214 = vrot.lane.b32.xlu0 %v404, 56
    %v2215 = vpop.permute.xlu0 %2214
    %2216 = vrot.lane.b32.xlu0 %v405, 56
    %v2217 = vpop.permute.xlu0 %2216
    %2218 = vrot.lane.b32.xlu0 %v406, 56
    %v2219 = vpop.permute.xlu0 %2218
    %2220 = vrot.lane.b32.xlu0 %v407, 56
    %v2221 = vpop.permute.xlu0 %2220
    %2222 = vrot.lane.b32.xlu0 %v408, 56
    %v2223 = vpop.permute.xlu0 %2222
    %2224 = vrot.lane.b32.xlu0 %v409, 56
    %v2225 = vpop.permute.xlu0 %2224
    %2226 = vrot.lane.b32.xlu0 %v410, 56
    %v2227 = vpop.permute.xlu0 %2226
    %2228 = vrot.lane.b32.xlu0 %v411, 56
    %v2229 = vpop.permute.xlu0 %2228
    %2230 = vrot.lane.b32.xlu0 %v412, 56
    %v2231 = vpop.permute.xlu0 %2230
    %2232 = vrot.lane.b32.xlu0 %v413, 56
    %v2233 = vpop.permute.xlu0 %2232
    %2234 = vrot.lane.b32.xlu0 %v414, 56
    %v2235 = vpop.permute.xlu0 %2234
    %2236 = vrot.lane.b32.xlu0 %v415, 56
    %v2237 = vpop.permute.xlu0 %2236
    %2238 = vrot.lane.b32.xlu0 %v416, 56
    %v2239 = vpop.permute.xlu0 %2238
    %2240 = vrot.lane.b32.xlu0 %v417, 56
    %v2241 = vpop.permute.xlu0 %2240
    %2242 = vrot.lane.b32.xlu0 %v418, 56
    %v2243 = vpop.permute.xlu0 %2242
    %2244 = vrot.lane.b32.xlu0 %v419, 56
    %v2245 = vpop.permute.xlu0 %2244
    %2246 = vrot.lane.b32.xlu0 %v420, 56
    %v2247 = vpop.permute.xlu0 %2246
    %2248 = vrot.lane.b32.xlu0 %v421, 56
    %v2249 = vpop.permute.xlu0 %2248
    %2250 = vrot.lane.b32.xlu0 %v422, 56
    %v2251 = vpop.permute.xlu0 %2250
    %2252 = vrot.lane.b32.xlu0 %v423, 56
    %v2253 = vpop.permute.xlu0 %2252
    %2254 = vrot.lane.b32.xlu0 %v424, 56
    %v2255 = vpop.permute.xlu0 %2254
    %2256 = vrot.lane.b32.xlu0 %v425, 56
    %v2257 = vpop.permute.xlu0 %2256
    %2258 = vrot.lane.b32.xlu0 %v426, 56
    %v2259 = vpop.permute.xlu0 %2258
    %2260 = vrot.lane.b32.xlu0 %v427, 56
    %v2261 = vpop.permute.xlu0 %2260
    %2262 = vrot.lane.b32.xlu0 %v428, 56
    %v2263 = vpop.permute.xlu0 %2262
    %2264 = vrot.lane.b32.xlu0 %v429, 56
    %v2265 = vpop.permute.xlu0 %2264
    %2266 = vrot.lane.b32.xlu0 %v430, 56
    %v2267 = vpop.permute.xlu0 %2266
    %2268 = vrot.lane.b32.xlu0 %v431, 56
    %v2269 = vpop.permute.xlu0 %2268
    %2270 = vrot.lane.b32.xlu0 %v432, 56
    %v2271 = vpop.permute.xlu0 %2270
    %2272 = vrot.lane.b32.xlu0 %v433, 56
    %v2273 = vpop.permute.xlu0 %2272
    %2274 = vrot.lane.b32.xlu0 %v434, 56
    %v2275 = vpop.permute.xlu0 %2274
    %2276 = vrot.lane.b32.xlu0 %v435, 56
    %v2277 = vpop.permute.xlu0 %2276
    %2278 = vrot.lane.b32.xlu0 %v436, 56
    %v2279 = vpop.permute.xlu0 %2278
    %2280 = vrot.lane.b32.xlu0 %v437, 56
    %v2281 = vpop.permute.xlu0 %2280
    %2282 = vrot.lane.b32.xlu0 %v438, 56
    %v2283 = vpop.permute.xlu0 %2282
    %2284 = vrot.lane.b32.xlu0 %v439, 56
    %v2285 = vpop.permute.xlu0 %2284
    %2286 = vrot.lane.b32.xlu0 %v440, 56
    %v2287 = vpop.permute.xlu0 %2286
    %2288 = vrot.lane.b32.xlu0 %v441, 56
    %v2289 = vpop.permute.xlu0 %2288
    %2290 = vrot.lane.b32.xlu0 %v442, 56
    %v2291 = vpop.permute.xlu0 %2290
    %2292 = vrot.lane.b32.xlu0 %v443, 56
    %v2293 = vpop.permute.xlu0 %2292
    %2294 = vrot.lane.b32.xlu0 %v444, 56
    %v2295 = vpop.permute.xlu0 %2294
    %2296 = vrot.lane.b32.xlu0 %v445, 56
    %v2297 = vpop.permute.xlu0 %2296
    %2298 = vrot.lane.b32.xlu0 %v446, 56
    %v2299 = vpop.permute.xlu0 %2298
    %2300 = vrot.lane.b32.xlu0 %v447, 56
    %v2301 = vpop.permute.xlu0 %2300
    %2302 = vrot.lane.b32.xlu0 %v448, 56
    %v2303 = vpop.permute.xlu0 %2302
    %2304 = vrot.lane.b32.xlu0 %v449, 56
    %v2305 = vpop.permute.xlu0 %2304
    %2306 = vrot.lane.b32.xlu0 %v450, 56
    %v2307 = vpop.permute.xlu0 %2306
    %2308 = vrot.lane.b32.xlu0 %v451, 56
    %v2309 = vpop.permute.xlu0 %2308
    %2310 = vrot.lane.b32.xlu0 %v452, 56
    %v2311 = vpop.permute.xlu0 %2310
    %2312 = vrot.lane.b32.xlu0 %v453, 56
    %v2313 = vpop.permute.xlu0 %2312
    %2314 = vrot.lane.b32.xlu0 %v454, 56
    %v2315 = vpop.permute.xlu0 %2314
    %2316 = vrot.lane.b32.xlu0 %v455, 56
    %v2317 = vpop.permute.xlu0 %2316
    %2318 = vrot.lane.b32.xlu0 %v456, 56
    %v2319 = vpop.permute.xlu0 %2318
    %2320 = vrot.lane.b32.xlu0 %v457, 56
    %v2321 = vpop.permute.xlu0 %2320
    %2322 = vrot.lane.b32.xlu0 %v458, 56
    %v2323 = vpop.permute.xlu0 %2322
    %2324 = vrot.lane.b32.xlu0 %v459, 56
    %v2325 = vpop.permute.xlu0 %2324
    %2326 = vrot.lane.b32.xlu0 %v460, 56
    %v2327 = vpop.permute.xlu0 %2326
    %2328 = vrot.lane.b32.xlu0 %v461, 56
    %v2329 = vpop.permute.xlu0 %2328
    %2330 = vrot.lane.b32.xlu0 %v462, 56
    %v2331 = vpop.permute.xlu0 %2330
    %2332 = vrot.lane.b32.xlu0 %v463, 56
    %v2333 = vpop.permute.xlu0 %2332
    %2334 = vrot.lane.b32.xlu0 %v464, 56
    %v2335 = vpop.permute.xlu0 %2334
    %2336 = vrot.lane.b32.xlu0 %v465, 56
    %v2337 = vpop.permute.xlu0 %2336
    %2338 = vrot.lane.b32.xlu0 %v466, 56
    %v2339 = vpop.permute.xlu0 %2338
    %2340 = vrot.lane.b32.xlu0 %v467, 56
    %v2341 = vpop.permute.xlu0 %2340
    %2342 = vrot.lane.b32.xlu0 %v468, 56
    %v2343 = vpop.permute.xlu0 %2342
    %2344 = vrot.lane.b32.xlu0 %v469, 56
    %v2345 = vpop.permute.xlu0 %2344
    %2346 = vrot.lane.b32.xlu0 %v470, 56
    %v2347 = vpop.permute.xlu0 %2346
    %2348 = vrot.lane.b32.xlu0 %v471, 56
    %v2349 = vpop.permute.xlu0 %2348
    %2350 = vrot.lane.b32.xlu0 %v472, 56
    %v2351 = vpop.permute.xlu0 %2350
    %2352 = vrot.lane.b32.xlu0 %v473, 56
    %v2353 = vpop.permute.xlu0 %2352
    %2498 = vrot.lane.b32.xlu0 %v474, 64
    %v2499 = vpop.permute.xlu0 %2498
    %2500 = vrot.lane.b32.xlu0 %v475, 64
    %v2501 = vpop.permute.xlu0 %2500
    %2502 = vrot.lane.b32.xlu0 %v476, 64
    %v2503 = vpop.permute.xlu0 %2502
    %2504 = vrot.lane.b32.xlu0 %v477, 64
    %v2505 = vpop.permute.xlu0 %2504
    %2506 = vrot.lane.b32.xlu0 %v478, 64
    %v2507 = vpop.permute.xlu0 %2506
    %2508 = vrot.lane.b32.xlu0 %v479, 64
    %v2509 = vpop.permute.xlu0 %2508
    %2510 = vrot.lane.b32.xlu0 %v480, 64
    %v2511 = vpop.permute.xlu0 %2510
    %2512 = vrot.lane.b32.xlu0 %v481, 64
    %v2513 = vpop.permute.xlu0 %2512
    %2514 = vrot.lane.b32.xlu0 %v482, 64
    %v2515 = vpop.permute.xlu0 %2514
    %2516 = vrot.lane.b32.xlu0 %v483, 64
    %v2517 = vpop.permute.xlu0 %2516
    %2518 = vrot.lane.b32.xlu0 %v484, 64
    %v2519 = vpop.permute.xlu0 %2518
    %2520 = vrot.lane.b32.xlu0 %v485, 64
    %v2521 = vpop.permute.xlu0 %2520
    %2522 = vrot.lane.b32.xlu0 %v486, 64
    %v2523 = vpop.permute.xlu0 %2522
    %2524 = vrot.lane.b32.xlu0 %v487, 64
    %v2525 = vpop.permute.xlu0 %2524
    %2526 = vrot.lane.b32.xlu0 %v488, 64
    %v2527 = vpop.permute.xlu0 %2526
    %2528 = vrot.lane.b32.xlu0 %v489, 64
    %v2529 = vpop.permute.xlu0 %2528
    %2530 = vrot.lane.b32.xlu0 %v490, 64
    %v2531 = vpop.permute.xlu0 %2530
    %2532 = vrot.lane.b32.xlu0 %v491, 64
    %v2533 = vpop.permute.xlu0 %2532
    %2534 = vrot.lane.b32.xlu0 %v492, 64
    %v2535 = vpop.permute.xlu0 %2534
    %2536 = vrot.lane.b32.xlu0 %v493, 64
    %v2537 = vpop.permute.xlu0 %2536
    %2538 = vrot.lane.b32.xlu0 %v494, 64
    %v2539 = vpop.permute.xlu0 %2538
    %2540 = vrot.lane.b32.xlu0 %v495, 64
    %v2541 = vpop.permute.xlu0 %2540
    %2542 = vrot.lane.b32.xlu0 %v496, 64
    %v2543 = vpop.permute.xlu0 %2542
    %2544 = vrot.lane.b32.xlu0 %v497, 64
    %v2545 = vpop.permute.xlu0 %2544
    %2546 = vrot.lane.b32.xlu0 %v498, 64
    %v2547 = vpop.permute.xlu0 %2546
    %2548 = vrot.lane.b32.xlu0 %v499, 64
    %v2549 = vpop.permute.xlu0 %2548
    %2550 = vrot.lane.b32.xlu0 %v500, 64
    %v2551 = vpop.permute.xlu0 %2550
    %2552 = vrot.lane.b32.xlu0 %v501, 64
    %v2553 = vpop.permute.xlu0 %2552
    %2554 = vrot.lane.b32.xlu0 %v502, 64
    %v2555 = vpop.permute.xlu0 %2554
    %2556 = vrot.lane.b32.xlu0 %v503, 64
    %v2557 = vpop.permute.xlu0 %2556
    %2558 = vrot.lane.b32.xlu0 %v504, 64
    %v2559 = vpop.permute.xlu0 %2558
    %2560 = vrot.lane.b32.xlu0 %v505, 64
    %v2561 = vpop.permute.xlu0 %2560
    %2562 = vrot.lane.b32.xlu0 %v506, 64
    %v2563 = vpop.permute.xlu0 %2562
    %2564 = vrot.lane.b32.xlu0 %v507, 64
    %v2565 = vpop.permute.xlu0 %2564
    %2566 = vrot.lane.b32.xlu0 %v508, 64
    %v2567 = vpop.permute.xlu0 %2566
    %2568 = vrot.lane.b32.xlu0 %v509, 64
    %v2569 = vpop.permute.xlu0 %2568
    %2570 = vrot.lane.b32.xlu0 %v510, 64
    %v2571 = vpop.permute.xlu0 %2570
    %2572 = vrot.lane.b32.xlu0 %v511, 64
    %v2573 = vpop.permute.xlu0 %2572
    %2574 = vrot.lane.b32.xlu0 %v512, 64
    %v2575 = vpop.permute.xlu0 %2574
    %2576 = vrot.lane.b32.xlu0 %v513, 64
    %v2577 = vpop.permute.xlu0 %2576
    %2578 = vrot.lane.b32.xlu0 %v514, 64
    %v2579 = vpop.permute.xlu0 %2578
    %2580 = vrot.lane.b32.xlu0 %v515, 64
    %v2581 = vpop.permute.xlu0 %2580
    %2582 = vrot.lane.b32.xlu0 %v516, 64
    %v2583 = vpop.permute.xlu0 %2582
    %2584 = vrot.lane.b32.xlu0 %v517, 64
    %v2585 = vpop.permute.xlu0 %2584
    %2586 = vrot.lane.b32.xlu0 %v518, 64
    %v2587 = vpop.permute.xlu0 %2586
    %2588 = vrot.lane.b32.xlu0 %v519, 64
    %v2589 = vpop.permute.xlu0 %2588
    %2590 = vrot.lane.b32.xlu0 %v520, 64
    %v2591 = vpop.permute.xlu0 %2590
    %2592 = vrot.lane.b32.xlu0 %v521, 64
    %v2593 = vpop.permute.xlu0 %2592
    %2594 = vrot.lane.b32.xlu0 %v522, 64
    %v2595 = vpop.permute.xlu0 %2594
    %2596 = vrot.lane.b32.xlu0 %v523, 64
    %v2597 = vpop.permute.xlu0 %2596
    %2598 = vrot.lane.b32.xlu0 %v524, 64
    %v2599 = vpop.permute.xlu0 %2598
    %2600 = vrot.lane.b32.xlu0 %v525, 64
    %v2601 = vpop.permute.xlu0 %2600
    %2602 = vrot.lane.b32.xlu0 %v526, 64
    %v2603 = vpop.permute.xlu0 %2602
    %2604 = vrot.lane.b32.xlu0 %v527, 64
    %v2605 = vpop.permute.xlu0 %2604
    %2606 = vrot.lane.b32.xlu0 %v528, 64
    %v2607 = vpop.permute.xlu0 %2606
    %2608 = vrot.lane.b32.xlu0 %v529, 64
    %v2609 = vpop.permute.xlu0 %2608
    %2610 = vrot.lane.b32.xlu0 %v530, 64
    %v2611 = vpop.permute.xlu0 %2610
    %2612 = vrot.lane.b32.xlu0 %v531, 64
    %v2613 = vpop.permute.xlu0 %2612
    %2614 = vrot.lane.b32.xlu0 %v532, 64
    %v2615 = vpop.permute.xlu0 %2614
    %2616 = vrot.lane.b32.xlu0 %v533, 64
    %v2617 = vpop.permute.xlu0 %2616
    %2618 = vrot.lane.b32.xlu0 %v534, 64
    %v2619 = vpop.permute.xlu0 %2618
    %2620 = vrot.lane.b32.xlu0 %v535, 64
    %v2621 = vpop.permute.xlu0 %2620
    %2622 = vrot.lane.b32.xlu0 %v536, 64
    %v2623 = vpop.permute.xlu0 %2622
    %2624 = vrot.lane.b32.xlu0 %v537, 64
    %v2625 = vpop.permute.xlu0 %2624
    %2626 = vrot.lane.b32.xlu0 %v538, 64
    %v2627 = vpop.permute.xlu0 %2626
    %2628 = vrot.lane.b32.xlu0 %v539, 64
    %v2629 = vpop.permute.xlu0 %2628
    %2630 = vrot.lane.b32.xlu0 %v540, 64
    %v2631 = vpop.permute.xlu0 %2630
    %2632 = vrot.lane.b32.xlu0 %v541, 64
    %v2633 = vpop.permute.xlu0 %2632
    %2634 = vrot.lane.b32.xlu0 %v542, 64
    %v2635 = vpop.permute.xlu0 %2634
    %2636 = vrot.lane.b32.xlu0 %v543, 64
    %v2637 = vpop.permute.xlu0 %2636
    %2638 = vrot.lane.b32.xlu0 %v544, 64
    %v2639 = vpop.permute.xlu0 %2638
    %2640 = vrot.lane.b32.xlu0 %v545, 64
    %v2641 = vpop.permute.xlu0 %2640
    %vm2714 = vcmask 64512
    %v2715 = vsel %vm2714, %v34, %v619
    %v2716 = vsel %vm2714, %v35, %v621
    %v2717 = vsel %vm2714, %v36, %v623
    %v2718 = vsel %vm2714, %v37, %v625
    %v2719 = vsel %vm2714, %v38, %v627
    %v2720 = vsel %vm2714, %v39, %v629
    %v2721 = vsel %vm2714, %v40, %v631
    %v2722 = vsel %vm2714, %v41, %v633
    %v2723 = vsel %vm2714, %v42, %v635
    %v2724 = vsel %vm2714, %v43, %v637
    %v2725 = vsel %vm2714, %v44, %v639
    %v2726 = vsel %vm2714, %v45, %v641
    %v2727 = vsel %vm2714, %v46, %v643
    %v2728 = vsel %vm2714, %v47, %v645
    %v2729 = vsel %vm2714, %v48, %v647
    %v2730 = vsel %vm2714, %v49, %v649
    %v2731 = vsel %vm2714, %v50, %v651
    %v2732 = vsel %vm2714, %v51, %v653
    %v2733 = vsel %vm2714, %v52, %v655
    %v2734 = vsel %vm2714, %v53, %v657
    %v2735 = vsel %vm2714, %v54, %v659
    %v2736 = vsel %vm2714, %v55, %v661
    %v2737 = vsel %vm2714, %v56, %v663
    %v2738 = vsel %vm2714, %v57, %v665
    %v2739 = vsel %vm2714, %v58, %v667
    %v2740 = vsel %vm2714, %v59, %v669
    %v2741 = vsel %vm2714, %v60, %v671
    %v2742 = vsel %vm2714, %v61, %v673
    %v2743 = vsel %vm2714, %v62, %v675
    %v2744 = vsel %vm2714, %v63, %v677
    %v2745 = vsel %vm2714, %v64, %v679
    %v2746 = vsel %vm2714, %v65, %v681
    %v2747 = vsel %vm2714, %v66, %v683
    %v2748 = vsel %vm2714, %v67, %v685
    %v2749 = vsel %vm2714, %v68, %v687
    %v2750 = vsel %vm2714, %v69, %v689
    %v2751 = vsel %vm2714, %v70, %v691
    %v2752 = vsel %vm2714, %v71, %v693
    %v2753 = vsel %vm2714, %v72, %v695
    %v2754 = vsel %vm2714, %v73, %v697
    %v2755 = vsel %vm2714, %v74, %v699
    %v2756 = vsel %vm2714, %v75, %v701
    %v2757 = vsel %vm2714, %v76, %v703
    %v2758 = vsel %vm2714, %v77, %v705
    %v2759 = vsel %vm2714, %v78, %v707
    %v2760 = vsel %vm2714, %v79, %v709
    %v2761 = vsel %vm2714, %v80, %v711
    %v2762 = vsel %vm2714, %v81, %v713
    %v2763 = vsel %vm2714, %v82, %v715
    %v2764 = vsel %vm2714, %v83, %v717
    %v2765 = vsel %vm2714, %v84, %v719
    %v2766 = vsel %vm2714, %v85, %v721
    %v2767 = vsel %vm2714, %v86, %v723
    %v2768 = vsel %vm2714, %v87, %v725
    %v2769 = vsel %vm2714, %v88, %v727
    %v2770 = vsel %vm2714, %v89, %v729
    %v2771 = vsel %vm2714, %v90, %v731
    %v2772 = vsel %vm2714, %v91, %v733
    %v2773 = vsel %vm2714, %v92, %v735
    %v2774 = vsel %vm2714, %v93, %v737
    %v2775 = vsel %vm2714, %v94, %v739
    %v2776 = vsel %vm2714, %v95, %v741
    %v2777 = vsel %vm2714, %v96, %v743
    %v2778 = vsel %vm2714, %v97, %v745
    %v2779 = vsel %vm2714, %v98, %v747
    %v2780 = vsel %vm2714, %v99, %v749
    %v2781 = vsel %vm2714, %v100, %v751
    %v2782 = vsel %vm2714, %v101, %v753
    %v2783 = vsel %vm2714, %v102, %v755
    %v2784 = vsel %vm2714, %v103, %v757
    %v2785 = vsel %vm2714, %v104, %v759
    %v2786 = vsel %vm2714, %v105, %v761
    %vm2787 = vcmask 130048
    %v2788 = vsel %vm2787, %v2715, %v907
    %v2789 = vsel %vm2787, %v2716, %v909
    %v2790 = vsel %vm2787, %v2717, %v911
    %v2791 = vsel %vm2787, %v2718, %v913
    %v2792 = vsel %vm2787, %v2719, %v915
    %v2793 = vsel %vm2787, %v2720, %v917
    %v2794 = vsel %vm2787, %v2721, %v919
    %v2795 = vsel %vm2787, %v2722, %v921
    %v2796 = vsel %vm2787, %v2723, %v923
    %v2797 = vsel %vm2787, %v2724, %v925
    %v2798 = vsel %vm2787, %v2725, %v927
    %v2799 = vsel %vm2787, %v2726, %v929
    %v2800 = vsel %vm2787, %v2727, %v931
    %v2801 = vsel %vm2787, %v2728, %v933
    %v2802 = vsel %vm2787, %v2729, %v935
    %v2803 = vsel %vm2787, %v2730, %v937
    %v2804 = vsel %vm2787, %v2731, %v939
    %v2805 = vsel %vm2787, %v2732, %v941
    %v2806 = vsel %vm2787, %v2733, %v943
    %v2807 = vsel %vm2787, %v2734, %v945
    %v2808 = vsel %vm2787, %v2735, %v947
    %v2809 = vsel %vm2787, %v2736, %v949
    %v2810 = vsel %vm2787, %v2737, %v951
    %v2811 = vsel %vm2787, %v2738, %v953
    %v2812 = vsel %vm2787, %v2739, %v955
    %v2813 = vsel %vm2787, %v2740, %v957
    %v2814 = vsel %vm2787, %v2741, %v959
    %v2815 = vsel %vm2787, %v2742, %v961
    %v2816 = vsel %vm2787, %v2743, %v963
    %v2817 = vsel %vm2787, %v2744, %v965
    %v2818 = vsel %vm2787, %v2745, %v967
    %v2819 = vsel %vm2787, %v2746, %v969
    %v2820 = vsel %vm2787, %v2747, %v971
    %v2821 = vsel %vm2787, %v2748, %v973
    %v2822 = vsel %vm2787, %v2749, %v975
    %v2823 = vsel %vm2787, %v2750, %v977
    %v2824 = vsel %vm2787, %v2751, %v979
    %v2825 = vsel %vm2787, %v2752, %v981
    %v2826 = vsel %vm2787, %v2753, %v983
    %v2827 = vsel %vm2787, %v2754, %v985
    %v2828 = vsel %vm2787, %v2755, %v987
    %v2829 = vsel %vm2787, %v2756, %v989
    %v2830 = vsel %vm2787, %v2757, %v991
    %v2831 = vsel %vm2787, %v2758, %v993
    %v2832 = vsel %vm2787, %v2759, %v995
    %v2833 = vsel %vm2787, %v2760, %v997
    %v2834 = vsel %vm2787, %v2761, %v999
    %v2835 = vsel %vm2787, %v2762, %v1001
    %v2836 = vsel %vm2787, %v2763, %v1003
    %v2837 = vsel %vm2787, %v2764, %v1005
    %v2838 = vsel %vm2787, %v2765, %v1007
    %v2839 = vsel %vm2787, %v2766, %v1009
    %v2840 = vsel %vm2787, %v2767, %v1011
    %v2841 = vsel %vm2787, %v2768, %v1013
    %v2842 = vsel %vm2787, %v2769, %v1015
    %v2843 = vsel %vm2787, %v2770, %v1017
    %v2844 = vsel %vm2787, %v2771, %v1019
    %v2845 = vsel %vm2787, %v2772, %v1021
    %v2846 = vsel %vm2787, %v2773, %v1023
    %v2847 = vsel %vm2787, %v2774, %v1025
    %v2848 = vsel %vm2787, %v2775, %v1027
    %v2849 = vsel %vm2787, %v2776, %v1029
    %v2850 = vsel %vm2787, %v2777, %v1031
    %v2851 = vsel %vm2787, %v2778, %v1033
    %v2852 = vsel %vm2787, %v2779, %v1035
    %v2853 = vsel %vm2787, %v2780, %v1037
    %v2854 = vsel %vm2787, %v2781, %v1039
    %v2855 = vsel %vm2787, %v2782, %v1041
    %v2856 = vsel %vm2787, %v2783, %v1043
    %v2857 = vsel %vm2787, %v2784, %v1045
    %v2858 = vsel %vm2787, %v2785, %v1047
    %v2859 = vsel %vm2787, %v2786, %v1049
    %vm2860 = vcmask 195584
    %v2861 = vsel %vm2860, %v2788, %v1127
    %v2862 = vsel %vm2860, %v2789, %v1129
    %v2863 = vsel %vm2860, %v2790, %v1131
    %v2864 = vsel %vm2860, %v2791, %v1133
    %v2865 = vsel %vm2860, %v2792, %v1135
    %v2866 = vsel %vm2860, %v2793, %v1137
    %v2867 = vsel %vm2860, %v2794, %v1139
    %v2868 = vsel %vm2860, %v2795, %v1141
    %v2869 = vsel %vm2860, %v2796, %v1143
    %v2870 = vsel %vm2860, %v2797, %v1145
    %v2871 = vsel %vm2860, %v2798, %v1147
    %v2872 = vsel %vm2860, %v2799, %v1149
    %v2873 = vsel %vm2860, %v2800, %v1151
    %v2874 = vsel %vm2860, %v2801, %v1153
    %v2875 = vsel %vm2860, %v2802, %v1155
    %v2876 = vsel %vm2860, %v2803, %v1157
    %v2877 = vsel %vm2860, %v2804, %v1159
    %v2878 = vsel %vm2860, %v2805, %v1161
    %v2879 = vsel %vm2860, %v2806, %v1163
    %v2880 = vsel %vm2860, %v2807, %v1165
    %v2881 = vsel %vm2860, %v2808, %v1167
    %v2882 = vsel %vm2860, %v2809, %v1169
    %v2883 = vsel %vm2860, %v2810, %v1171
    %v2884 = vsel %vm2860, %v2811, %v1173
    %v2885 = vsel %vm2860, %v2812, %v1175
    %v2886 = vsel %vm2860, %v2813, %v1177
    %v2887 = vsel %vm2860, %v2814, %v1179
    %v2888 = vsel %vm2860, %v2815, %v1181
    %v2889 = vsel %vm2860, %v2816, %v1183
    %v2890 = vsel %vm2860, %v2817, %v1185
    %v2891 = vsel %vm2860, %v2818, %v1187
    %v2892 = vsel %vm2860, %v2819, %v1189
    %v2893 = vsel %vm2860, %v2820, %v1191
    %v2894 = vsel %vm2860, %v2821, %v1193
    %v2895 = vsel %vm2860, %v2822, %v1195
    %v2896 = vsel %vm2860, %v2823, %v1197
    %v2897 = vsel %vm2860, %v2824, %v1199
    %v2898 = vsel %vm2860, %v2825, %v1201
    %v2899 = vsel %vm2860, %v2826, %v1203
    %v2900 = vsel %vm2860, %v2827, %v1205
    %v2901 = vsel %vm2860, %v2828, %v1207
    %v2902 = vsel %vm2860, %v2829, %v1209
    %v2903 = vsel %vm2860, %v2830, %v1211
    %v2904 = vsel %vm2860, %v2831, %v1213
    %v2905 = vsel %vm2860, %v2832, %v1215
    %v2906 = vsel %vm2860, %v2833, %v1217
    %v2907 = vsel %vm2860, %v2834, %v1219
    %v2908 = vsel %vm2860, %v2835, %v1221
    %v2909 = vsel %vm2860, %v2836, %v1223
    %v2910 = vsel %vm2860, %v2837, %v1225
    %v2911 = vsel %vm2860, %v2838, %v1227
    %v2912 = vsel %vm2860, %v2839, %v1229
    %v2913 = vsel %vm2860, %v2840, %v1231
    %v2914 = vsel %vm2860, %v2841, %v1233
    %v2915 = vsel %vm2860, %v2842, %v1235
    %v2916 = vsel %vm2860, %v2843, %v1237
    %v2917 = vsel %vm2860, %v2844, %v1239
    %v2918 = vsel %vm2860, %v2845, %v1241
    %v2919 = vsel %vm2860, %v2846, %v1243
    %v2920 = vsel %vm2860, %v2847, %v1245
    %v2921 = vsel %vm2860, %v2848, %v1247
    %v2922 = vsel %vm2860, %v2849, %v1249
    %v2923 = vsel %vm2860, %v2850, %v1251
    %v2924 = vsel %vm2860, %v2851, %v1253
    %v2925 = vsel %vm2860, %v2852, %v1255
    %v2926 = vsel %vm2860, %v2853, %v1257
    %v2927 = vsel %vm2860, %v2854, %v1259
    %v2928 = vsel %vm2860, %v2855, %v1261
    %v2929 = vsel %vm2860, %v2856, %v1263
    %v2930 = vsel %vm2860, %v2857, %v1265
    %v2931 = vsel %vm2860, %v2858, %v1267
    %v2932 = vsel %vm2860, %v2859, %v1269
    %vm2933 = vcmask 261120
    %v2934 = vsel %vm2933, %v2861, %v1415
    %v2935 = vsel %vm2933, %v2862, %v1417
    %v2936 = vsel %vm2933, %v2863, %v1419
    %v2937 = vsel %vm2933, %v2864, %v1421
    %v2938 = vsel %vm2933, %v2865, %v1423
    %v2939 = vsel %vm2933, %v2866, %v1425
    %v2940 = vsel %vm2933, %v2867, %v1427
    %v2941 = vsel %vm2933, %v2868, %v1429
    %v2942 = vsel %vm2933, %v2869, %v1431
    %v2943 = vsel %vm2933, %v2870, %v1433
    %v2944 = vsel %vm2933, %v2871, %v1435
    %v2945 = vsel %vm2933, %v2872, %v1437
    %v2946 = vsel %vm2933, %v2873, %v1439
    %v2947 = vsel %vm2933, %v2874, %v1441
    %v2948 = vsel %vm2933, %v2875, %v1443
    %v2949 = vsel %vm2933, %v2876, %v1445
    %v2950 = vsel %vm2933, %v2877, %v1447
    %v2951 = vsel %vm2933, %v2878, %v1449
    %v2952 = vsel %vm2933, %v2879, %v1451
    %v2953 = vsel %vm2933, %v2880, %v1453
    %v2954 = vsel %vm2933, %v2881, %v1455
    %v2955 = vsel %vm2933, %v2882, %v1457
    %v2956 = vsel %vm2933, %v2883, %v1459
    %v2957 = vsel %vm2933, %v2884, %v1461
    %v2958 = vsel %vm2933, %v2885, %v1463
    %v2959 = vsel %vm2933, %v2886, %v1465
    %v2960 = vsel %vm2933, %v2887, %v1467
    %v2961 = vsel %vm2933, %v2888, %v1469
    %v2962 = vsel %vm2933, %v2889, %v1471
    %v2963 = vsel %vm2933, %v2890, %v1473
    %v2964 = vsel %vm2933, %v2891, %v1475
    %v2965 = vsel %vm2933, %v2892, %v1477
    %v2966 = vsel %vm2933, %v2893, %v1479
    %v2967 = vsel %vm2933, %v2894, %v1481
    %v2968 = vsel %vm2933, %v2895, %v1483
    %v2969 = vsel %vm2933, %v2896, %v1485
    %v2970 = vsel %vm2933, %v2897, %v1487
    %v2971 = vsel %vm2933, %v2898, %v1489
    %v2972 = vsel %vm2933, %v2899, %v1491
    %v2973 = vsel %vm2933, %v2900, %v1493
    %v2974 = vsel %vm2933, %v2901, %v1495
    %v2975 = vsel %vm2933, %v2902, %v1497
    %v2976 = vsel %vm2933, %v2903, %v1499
    %v2977 = vsel %vm2933, %v2904, %v1501
    %v2978 = vsel %vm2933, %v2905, %v1503
    %v2979 = vsel %vm2933, %v2906, %v1505
    %v2980 = vsel %vm2933, %v2907, %v1507
    %v2981 = vsel %vm2933, %v2908, %v1509
    %v2982 = vsel %vm2933, %v2909, %v1511
    %v2983 = vsel %vm2933, %v2910, %v1513
    %v2984 = vsel %vm2933, %v2911, %v1515
    %v2985 = vsel %vm2933, %v2912, %v1517
    %v2986 = vsel %vm2933, %v2913, %v1519
    %v2987 = vsel %vm2933, %v2914, %v1521
    %v2988 = vsel %vm2933, %v2915, %v1523
    %v2989 = vsel %vm2933, %v2916, %v1525
    %v2990 = vsel %vm2933, %v2917, %v1527
    %v2991 = vsel %vm2933, %v2918, %v1529
    %v2992 = vsel %vm2933, %v2919, %v1531
    %v2993 = vsel %vm2933, %v2920, %v1533
    %v2994 = vsel %vm2933, %v2921, %v1535
    %v2995 = vsel %vm2933, %v2922, %v1537
    %v2996 = vsel %vm2933, %v2923, %v1539
    %v2997 = vsel %vm2933, %v2924, %v1541
    %v2998 = vsel %vm2933, %v2925, %v1543
    %v2999 = vsel %vm2933, %v2926, %v1545
    %v3000 = vsel %vm2933, %v2927, %v1547
    %v3001 = vsel %vm2933, %v2928, %v1549
    %v3002 = vsel %vm2933, %v2929, %v1551
    %v3003 = vsel %vm2933, %v2930, %v1553
    %v3004 = vsel %vm2933, %v2931, %v1555
    %v3005 = vsel %vm2933, %v2932, %v1557
    %vm3006 = vcmask 326656
    %v3007 = vsel %vm3006, %v2934, %v1703
    %v3008 = vsel %vm3006, %v2935, %v1705
    %v3009 = vsel %vm3006, %v2936, %v1707
    %v3010 = vsel %vm3006, %v2937, %v1709
    %v3011 = vsel %vm3006, %v2938, %v1711
    %v3012 = vsel %vm3006, %v2939, %v1713
    %v3013 = vsel %vm3006, %v2940, %v1715
    %v3014 = vsel %vm3006, %v2941, %v1717
    %v3015 = vsel %vm3006, %v2942, %v1719
    %v3016 = vsel %vm3006, %v2943, %v1721
    %v3017 = vsel %vm3006, %v2944, %v1723
    %v3018 = vsel %vm3006, %v2945, %v1725
    %v3019 = vsel %vm3006, %v2946, %v1727
    %v3020 = vsel %vm3006, %v2947, %v1729
    %v3021 = vsel %vm3006, %v2948, %v1731
    %v3022 = vsel %vm3006, %v2949, %v1733
    %v3023 = vsel %vm3006, %v2950, %v1735
    %v3024 = vsel %vm3006, %v2951, %v1737
    %v3025 = vsel %vm3006, %v2952, %v1739
    %v3026 = vsel %vm3006, %v2953, %v1741
    %v3027 = vsel %vm3006, %v2954, %v1743
    %v3028 = vsel %vm3006, %v2955, %v1745
    %v3029 = vsel %vm3006, %v2956, %v1747
    %v3030 = vsel %vm3006, %v2957, %v1749
    %v3031 = vsel %vm3006, %v2958, %v1751
    %v3032 = vsel %vm3006, %v2959, %v1753
    %v3033 = vsel %vm3006, %v2960, %v1755
    %v3034 = vsel %vm3006, %v2961, %v1757
    %v3035 = vsel %vm3006, %v2962, %v1759
    %v3036 = vsel %vm3006, %v2963, %v1761
    %v3037 = vsel %vm3006, %v2964, %v1763
    %v3038 = vsel %vm3006, %v2965, %v1765
    %v3039 = vsel %vm3006, %v2966, %v1767
    %v3040 = vsel %vm3006, %v2967, %v1769
    %v3041 = vsel %vm3006, %v2968, %v1771
    %v3042 = vsel %vm3006, %v2969, %v1773
    %v3043 = vsel %vm3006, %v2970, %v1775
    %v3044 = vsel %vm3006, %v2971, %v1777
    %v3045 = vsel %vm3006, %v2972, %v1779
    %v3046 = vsel %vm3006, %v2973, %v1781
    %v3047 = vsel %vm3006, %v2974, %v1783
    %v3048 = vsel %vm3006, %v2975, %v1785
    %v3049 = vsel %vm3006, %v2976, %v1787
    %v3050 = vsel %vm3006, %v2977, %v1789
    %v3051 = vsel %vm3006, %v2978, %v1791
    %v3052 = vsel %vm3006, %v2979, %v1793
    %v3053 = vsel %vm3006, %v2980, %v1795
    %v3054 = vsel %vm3006, %v2981, %v1797
    %v3055 = vsel %vm3006, %v2982, %v1799
    %v3056 = vsel %vm3006, %v2983, %v1801
    %v3057 = vsel %vm3006, %v2984, %v1803
    %v3058 = vsel %vm3006, %v2985, %v1805
    %v3059 = vsel %vm3006, %v2986, %v1807
    %v3060 = vsel %vm3006, %v2987, %v1809
    %v3061 = vsel %vm3006, %v2988, %v1811
    %v3062 = vsel %vm3006, %v2989, %v1813
    %v3063 = vsel %vm3006, %v2990, %v1815
    %v3064 = vsel %vm3006, %v2991, %v1817
    %v3065 = vsel %vm3006, %v2992, %v1819
    %v3066 = vsel %vm3006, %v2993, %v1821
    %v3067 = vsel %vm3006, %v2994, %v1823
    %v3068 = vsel %vm3006, %v2995, %v1825
    %v3069 = vsel %vm3006, %v2996, %v1827
    %v3070 = vsel %vm3006, %v2997, %v1829
    %v3071 = vsel %vm3006, %v2998, %v1831
    %v3072 = vsel %vm3006, %v2999, %v1833
    %v3073 = vsel %vm3006, %v3000, %v1835
    %v3074 = vsel %vm3006, %v3001, %v1837
    %v3075 = vsel %vm3006, %v3002, %v1839
    %v3076 = vsel %vm3006, %v3003, %v1841
    %v3077 = vsel %vm3006, %v3004, %v1843
    %v3078 = vsel %vm3006, %v3005, %v1845
    %vm3079 = vcmask 392192
    %v3080 = vsel %vm3079, %v3007, %v1923
    %v3081 = vsel %vm3079, %v3008, %v1925
    %v3082 = vsel %vm3079, %v3009, %v1927
    %v3083 = vsel %vm3079, %v3010, %v1929
    %v3084 = vsel %vm3079, %v3011, %v1931
    %v3085 = vsel %vm3079, %v3012, %v1933
    %v3086 = vsel %vm3079, %v3013, %v1935
    %v3087 = vsel %vm3079, %v3014, %v1937
    %v3088 = vsel %vm3079, %v3015, %v1939
    %v3089 = vsel %vm3079, %v3016, %v1941
    %v3090 = vsel %vm3079, %v3017, %v1943
    %v3091 = vsel %vm3079, %v3018, %v1945
    %v3092 = vsel %vm3079, %v3019, %v1947
    %v3093 = vsel %vm3079, %v3020, %v1949
    %v3094 = vsel %vm3079, %v3021, %v1951
    %v3095 = vsel %vm3079, %v3022, %v1953
    %v3096 = vsel %vm3079, %v3023, %v1955
    %v3097 = vsel %vm3079, %v3024, %v1957
    %v3098 = vsel %vm3079, %v3025, %v1959
    %v3099 = vsel %vm3079, %v3026, %v1961
    %v3100 = vsel %vm3079, %v3027, %v1963
    %v3101 = vsel %vm3079, %v3028, %v1965
    %v3102 = vsel %vm3079, %v3029, %v1967
    %v3103 = vsel %vm3079, %v3030, %v1969
    %v3104 = vsel %vm3079, %v3031, %v1971
    %v3105 = vsel %vm3079, %v3032, %v1973
    %v3106 = vsel %vm3079, %v3033, %v1975
    %v3107 = vsel %vm3079, %v3034, %v1977
    %v3108 = vsel %vm3079, %v3035, %v1979
    %v3109 = vsel %vm3079, %v3036, %v1981
    %v3110 = vsel %vm3079, %v3037, %v1983
    %v3111 = vsel %vm3079, %v3038, %v1985
    %v3112 = vsel %vm3079, %v3039, %v1987
    %v3113 = vsel %vm3079, %v3040, %v1989
    %v3114 = vsel %vm3079, %v3041, %v1991
    %v3115 = vsel %vm3079, %v3042, %v1993
    %v3116 = vsel %vm3079, %v3043, %v1995
    %v3117 = vsel %vm3079, %v3044, %v1997
    %v3118 = vsel %vm3079, %v3045, %v1999
    %v3119 = vsel %vm3079, %v3046, %v2001
    %v3120 = vsel %vm3079, %v3047, %v2003
    %v3121 = vsel %vm3079, %v3048, %v2005
    %v3122 = vsel %vm3079, %v3049, %v2007
    %v3123 = vsel %vm3079, %v3050, %v2009
    %v3124 = vsel %vm3079, %v3051, %v2011
    %v3125 = vsel %vm3079, %v3052, %v2013
    %v3126 = vsel %vm3079, %v3053, %v2015
    %v3127 = vsel %vm3079, %v3054, %v2017
    %v3128 = vsel %vm3079, %v3055, %v2019
    %v3129 = vsel %vm3079, %v3056, %v2021
    %v3130 = vsel %vm3079, %v3057, %v2023
    %v3131 = vsel %vm3079, %v3058, %v2025
    %v3132 = vsel %vm3079, %v3059, %v2027
    %v3133 = vsel %vm3079, %v3060, %v2029
    %v3134 = vsel %vm3079, %v3061, %v2031
    %v3135 = vsel %vm3079, %v3062, %v2033
    %v3136 = vsel %vm3079, %v3063, %v2035
    %v3137 = vsel %vm3079, %v3064, %v2037
    %v3138 = vsel %vm3079, %v3065, %v2039
    %v3139 = vsel %vm3079, %v3066, %v2041
    %v3140 = vsel %vm3079, %v3067, %v2043
    %v3141 = vsel %vm3079, %v3068, %v2045
    %v3142 = vsel %vm3079, %v3069, %v2047
    %v3143 = vsel %vm3079, %v3070, %v2049
    %v3144 = vsel %vm3079, %v3071, %v2051
    %v3145 = vsel %vm3079, %v3072, %v2053
    %v3146 = vsel %vm3079, %v3073, %v2055
    %v3147 = vsel %vm3079, %v3074, %v2057
    %v3148 = vsel %vm3079, %v3075, %v2059
    %v3149 = vsel %vm3079, %v3076, %v2061
    %v3150 = vsel %vm3079, %v3077, %v2063
    %v3151 = vsel %vm3079, %v3078, %v2065
    %vm3152 = vcmask 457728
    %v3153 = vsel %vm3152, %v3080, %v2211
    %v3154 = vsel %vm3152, %v3081, %v2213
    %v3155 = vsel %vm3152, %v3082, %v2215
    %v3156 = vsel %vm3152, %v3083, %v2217
    %v3157 = vsel %vm3152, %v3084, %v2219
    %v3158 = vsel %vm3152, %v3085, %v2221
    %v3159 = vsel %vm3152, %v3086, %v2223
    %v3160 = vsel %vm3152, %v3087, %v2225
    %v3161 = vsel %vm3152, %v3088, %v2227
    %v3162 = vsel %vm3152, %v3089, %v2229
    %v3163 = vsel %vm3152, %v3090, %v2231
    %v3164 = vsel %vm3152, %v3091, %v2233
    %v3165 = vsel %vm3152, %v3092, %v2235
    %v3166 = vsel %vm3152, %v3093, %v2237
    %v3167 = vsel %vm3152, %v3094, %v2239
    %v3168 = vsel %vm3152, %v3095, %v2241
    %v3169 = vsel %vm3152, %v3096, %v2243
    %v3170 = vsel %vm3152, %v3097, %v2245
    %v3171 = vsel %vm3152, %v3098, %v2247
    %v3172 = vsel %vm3152, %v3099, %v2249
    %v3173 = vsel %vm3152, %v3100, %v2251
    %v3174 = vsel %vm3152, %v3101, %v2253
    %v3175 = vsel %vm3152, %v3102, %v2255
    %v3176 = vsel %vm3152, %v3103, %v2257
    %v3177 = vsel %vm3152, %v3104, %v2259
    %v3178 = vsel %vm3152, %v3105, %v2261
    %v3179 = vsel %vm3152, %v3106, %v2263
    %v3180 = vsel %vm3152, %v3107, %v2265
    %v3181 = vsel %vm3152, %v3108, %v2267
    %v3182 = vsel %vm3152, %v3109, %v2269
    %v3183 = vsel %vm3152, %v3110, %v2271
    %v3184 = vsel %vm3152, %v3111, %v2273
    %v3185 = vsel %vm3152, %v3112, %v2275
    %v3186 = vsel %vm3152, %v3113, %v2277
    %v3187 = vsel %vm3152, %v3114, %v2279
    %v3188 = vsel %vm3152, %v3115, %v2281
    %v3189 = vsel %vm3152, %v3116, %v2283
    %v3190 = vsel %vm3152, %v3117, %v2285
    %v3191 = vsel %vm3152, %v3118, %v2287
    %v3192 = vsel %vm3152, %v3119, %v2289
    %v3193 = vsel %vm3152, %v3120, %v2291
    %v3194 = vsel %vm3152, %v3121, %v2293
    %v3195 = vsel %vm3152, %v3122, %v2295
    %v3196 = vsel %vm3152, %v3123, %v2297
    %v3197 = vsel %vm3152, %v3124, %v2299
    %v3198 = vsel %vm3152, %v3125, %v2301
    %v3199 = vsel %vm3152, %v3126, %v2303
    %v3200 = vsel %vm3152, %v3127, %v2305
    %v3201 = vsel %vm3152, %v3128, %v2307
    %v3202 = vsel %vm3152, %v3129, %v2309
    %v3203 = vsel %vm3152, %v3130, %v2311
    %v3204 = vsel %vm3152, %v3131, %v2313
    %v3205 = vsel %vm3152, %v3132, %v2315
    %v3206 = vsel %vm3152, %v3133, %v2317
    %v3207 = vsel %vm3152, %v3134, %v2319
    %v3208 = vsel %vm3152, %v3135, %v2321
    %v3209 = vsel %vm3152, %v3136, %v2323
    %v3210 = vsel %vm3152, %v3137, %v2325
    %v3211 = vsel %vm3152, %v3138, %v2327
    %v3212 = vsel %vm3152, %v3139, %v2329
    %v3213 = vsel %vm3152, %v3140, %v2331
    %v3214 = vsel %vm3152, %v3141, %v2333
    %v3215 = vsel %vm3152, %v3142, %v2335
    %v3216 = vsel %vm3152, %v3143, %v2337
    %v3217 = vsel %vm3152, %v3144, %v2339
    %v3218 = vsel %vm3152, %v3145, %v2341
    %v3219 = vsel %vm3152, %v3146, %v2343
    %v3220 = vsel %vm3152, %v3147, %v2345
    %v3221 = vsel %vm3152, %v3148, %v2347
    %v3222 = vsel %vm3152, %v3149, %v2349
    %v3223 = vsel %vm3152, %v3150, %v2351
    %v3224 = vsel %vm3152, %v3151, %v2353
    %vm3225 = vcmask 523264
    %v3226 = vsel %vm3225, %v3153, %v2499
    %v3227 = vsel %vm3225, %v3154, %v2501
    %v3228 = vsel %vm3225, %v3155, %v2503
    %v3229 = vsel %vm3225, %v3156, %v2505
    %v3230 = vsel %vm3225, %v3157, %v2507
    %v3231 = vsel %vm3225, %v3158, %v2509
    %v3232 = vsel %vm3225, %v3159, %v2511
    %v3233 = vsel %vm3225, %v3160, %v2513
    %v3234 = vsel %vm3225, %v3161, %v2515
    %v3235 = vsel %vm3225, %v3162, %v2517
    %v3236 = vsel %vm3225, %v3163, %v2519
    %v3237 = vsel %vm3225, %v3164, %v2521
    %v3238 = vsel %vm3225, %v3165, %v2523
    %v3239 = vsel %vm3225, %v3166, %v2525
    %v3240 = vsel %vm3225, %v3167, %v2527
    %v3241 = vsel %vm3225, %v3168, %v2529
    %v3242 = vsel %vm3225, %v3169, %v2531
    %v3243 = vsel %vm3225, %v3170, %v2533
    %v3244 = vsel %vm3225, %v3171, %v2535
    %v3245 = vsel %vm3225, %v3172, %v2537
    %v3246 = vsel %vm3225, %v3173, %v2539
    %v3247 = vsel %vm3225, %v3174, %v2541
    %v3248 = vsel %vm3225, %v3175, %v2543
    %v3249 = vsel %vm3225, %v3176, %v2545
    %v3250 = vsel %vm3225, %v3177, %v2547
    %v3251 = vsel %vm3225, %v3178, %v2549
    %v3252 = vsel %vm3225, %v3179, %v2551
    %v3253 = vsel %vm3225, %v3180, %v2553
    %v3254 = vsel %vm3225, %v3181, %v2555
    %v3255 = vsel %vm3225, %v3182, %v2557
    %v3256 = vsel %vm3225, %v3183, %v2559
    %v3257 = vsel %vm3225, %v3184, %v2561
    %v3258 = vsel %vm3225, %v3185, %v2563
    %v3259 = vsel %vm3225, %v3186, %v2565
    %v3260 = vsel %vm3225, %v3187, %v2567
    %v3261 = vsel %vm3225, %v3188, %v2569
    %v3262 = vsel %vm3225, %v3189, %v2571
    %v3263 = vsel %vm3225, %v3190, %v2573
    %v3264 = vsel %vm3225, %v3191, %v2575
    %v3265 = vsel %vm3225, %v3192, %v2577
    %v3266 = vsel %vm3225, %v3193, %v2579
    %v3267 = vsel %vm3225, %v3194, %v2581
    %v3268 = vsel %vm3225, %v3195, %v2583
    %v3269 = vsel %vm3225, %v3196, %v2585
    %v3270 = vsel %vm3225, %v3197, %v2587
    %v3271 = vsel %vm3225, %v3198, %v2589
    %v3272 = vsel %vm3225, %v3199, %v2591
    %v3273 = vsel %vm3225, %v3200, %v2593
    %v3274 = vsel %vm3225, %v3201, %v2595
    %v3275 = vsel %vm3225, %v3202, %v2597
    %v3276 = vsel %vm3225, %v3203, %v2599
    %v3277 = vsel %vm3225, %v3204, %v2601
    %v3278 = vsel %vm3225, %v3205, %v2603
    %v3279 = vsel %vm3225, %v3206, %v2605
    %v3280 = vsel %vm3225, %v3207, %v2607
    %v3281 = vsel %vm3225, %v3208, %v2609
    %v3282 = vsel %vm3225, %v3209, %v2611
    %v3283 = vsel %vm3225, %v3210, %v2613
    %v3284 = vsel %vm3225, %v3211, %v2615
    %v3285 = vsel %vm3225, %v3212, %v2617
    %v3286 = vsel %vm3225, %v3213, %v2619
    %v3287 = vsel %vm3225, %v3214, %v2621
    %v3288 = vsel %vm3225, %v3215, %v2623
    %v3289 = vsel %vm3225, %v3216, %v2625
    %v3290 = vsel %vm3225, %v3217, %v2627
    %v3291 = vsel %vm3225, %v3218, %v2629
    %v3292 = vsel %vm3225, %v3219, %v2631
    %v3293 = vsel %vm3225, %v3220, %v2633
    %v3294 = vsel %vm3225, %v3221, %v2635
    %v3295 = vsel %vm3225, %v3222, %v2637
    %v3296 = vsel %vm3225, %v3223, %v2639
    %v3297 = vsel %vm3225, %v3224, %v2641
    %v3298 = vpack.c.bf16 %v3227, %v3226
    %v3299 = vpack.c.bf16 %v3229, %v3228
    %v3300 = vpack.c.bf16 %v3231, %v3230
    %v3301 = vpack.c.bf16 %v3233, %v3232
    %v3302 = vpack.c.bf16 %v3235, %v3234
    %v3303 = vpack.c.bf16 %v3237, %v3236
    %v3304 = vpack.c.bf16 %v3239, %v3238
    %v3305 = vpack.c.bf16 %v3241, %v3240
    %v3306 = vpack.c.bf16 %v3243, %v3242
    %v3307 = vpack.c.bf16 %v3245, %v3244
    %v3308 = vpack.c.bf16 %v3247, %v3246
    %v3309 = vpack.c.bf16 %v3249, %v3248
    %v3310 = vpack.c.bf16 %v3251, %v3250
    %v3311 = vpack.c.bf16 %v3253, %v3252
    %v3312 = vpack.c.bf16 %v3255, %v3254
    %v3313 = vpack.c.bf16 %v3257, %v3256
    %v3314 = vpack.c.bf16 %v3259, %v3258
    %v3315 = vpack.c.bf16 %v3261, %v3260
    %v3316 = vpack.c.bf16 %v3263, %v3262
    %v3317 = vpack.c.bf16 %v3265, %v3264
    %v3318 = vpack.c.bf16 %v3267, %v3266
    %v3319 = vpack.c.bf16 %v3269, %v3268
    %v3320 = vpack.c.bf16 %v3271, %v3270
    %v3321 = vpack.c.bf16 %v3273, %v3272
    %v3322 = vpack.c.bf16 %v3275, %v3274
    %v3323 = vpack.c.bf16 %v3277, %v3276
    %v3324 = vpack.c.bf16 %v3279, %v3278
    %v3325 = vpack.c.bf16 %v3281, %v3280
    %v3326 = vpack.c.bf16 %v3283, %v3282
    %v3327 = vpack.c.bf16 %v3285, %v3284
    %v3328 = vpack.c.bf16 %v3287, %v3286
    %v3329 = vpack.c.bf16 %v3289, %v3288
    %v3330 = vpack.c.bf16 %v3291, %v3290
    %v3331 = vpack.c.bf16 %v3293, %v3292
    %v3332 = vpack.c.bf16 %v3295, %v3294
    %v3333 = vpack.c.bf16 %v3297, %v3296
    %v3334 = vld [vmem:[%s2] sm:$0xf]
    %v3335 = vld [vmem:[%s2 + $0x4] sm:$0xf]
    %v3336 = vld [vmem:[%s2 + $0x8] sm:$0xf]
    %v3337 = vld [vmem:[%s2 + $0xc] sm:$0xf]
    %v3338 = vld [vmem:[%s2 + $0x10] sm:$0xf]
    %v3339 = vld [vmem:[%s2 + $0x14] sm:$0xf]
    %v3340 = vld [vmem:[%s2 + $0x18] sm:$0xf]
    %v3341 = vld [vmem:[%s2 + $0x1c] sm:$0xf]
    %v3342 = vld [vmem:[%s2 + $0x20] sm:$0xf]
    %v3343 = vld [vmem:[%s3] sm:$0x1]
    %v3345 = vlaneseq
    %v3346 = vshrl.u32 %v3345, 7
    %v3347 = vsub.s32 0, %v3346
    %v3348 = vrot.slane %v3343, %v3347
    %v3359 = vunpack.c.l.b16 %v3334
    %v3360 = vunpack.c.l.b16 %v3335
    %v3361 = vunpack.c.l.b16 %v3336
    %v3362 = vunpack.c.l.b16 %v3337
    %v3363 = vunpack.c.l.b16 %v3338
    %v3364 = vunpack.c.l.b16 %v3339
    %v3365 = vunpack.c.l.b16 %v3340
    %v3366 = vunpack.c.l.b16 %v3341
    %v3367 = vunpack.c.l.b16 %v3342
    %v3368 = vpack.c.b16 %v3360, %v3359
    %v3369 = vpack.c.b16 %v3362, %v3361
    %v3370 = vpack.c.b16 %v3364, %v3363
    %v3371 = vpack.c.b16 %v3366, %v3365
    %v3372 = vpack.c.b16 %v3367, %v3367
    %vm3377 = vcmask 588800
    %v3379 = vsel %vm3377, %v3298, 0
    %v3382 = vsel %vm3377, %v3299, 0
    %v3385 = vsel %vm3377, %v3300, 0
    %v3388 = vsel %vm3377, %v3301, 0
    %v3391 = vsel %vm3377, %v3302, 0
    %v3394 = vsel %vm3377, %v3303, 0
    %v3397 = vsel %vm3377, %v3304, 0
    %v3400 = vsel %vm3377, %v3305, 0
    %v3403 = vsel %vm3377, %v3306, 0
    %v3406 = vsel %vm3377, %v3307, 0
    %v3409 = vsel %vm3377, %v3308, 0
    %v3412 = vsel %vm3377, %v3309, 0
    %v3415 = vsel %vm3377, %v3310, 0
    %v3418 = vsel %vm3377, %v3311, 0
    %v3421 = vsel %vm3377, %v3312, 0
    %v3424 = vsel %vm3377, %v3313, 0
    %v3427 = vsel %vm3377, %v3314, 0
    %v3430 = vsel %vm3377, %v3315, 0
    %v3433 = vsel %vm3377, %v3316, 0
    %v3436 = vsel %vm3377, %v3317, 0
    %v3439 = vsel %vm3377, %v3318, 0
    %v3442 = vsel %vm3377, %v3319, 0
    %v3445 = vsel %vm3377, %v3320, 0
    %v3448 = vsel %vm3377, %v3321, 0
    %v3451 = vsel %vm3377, %v3322, 0
    %v3454 = vsel %vm3377, %v3323, 0
    %v3457 = vsel %vm3377, %v3324, 0
    %v3460 = vsel %vm3377, %v3325, 0
    %v3463 = vsel %vm3377, %v3326, 0
    %v3466 = vsel %vm3377, %v3327, 0
    %v3469 = vsel %vm3377, %v3328, 0
    %v3472 = vsel %vm3377, %v3329, 0
    %v3475 = vsel %vm3377, %v3330, 0
    %v3478 = vsel %vm3377, %v3331, 0
    %v3481 = vsel %vm3377, %v3332, 0
    %v3484 = vsel %vm3377, %v3333, 0
    %vm3486 = vcmask 1043456
    %v3488 = vsel %vm3486, %v3372, 0
    %3490 = vmatprep.subr.bf16.mxu0 0
    %3491 = vmatpush1.bf16.msra.mxu0 %v3368
    %3492 = vmatprep.subr.bf16.mxu0 0
    %3493 = vmatpush1.bf16.msra.mxu0 %v3369
    %3494 = vmatprep.subr.bf16.mxu0 0
    %3495 = vmatpush1.bf16.msra.mxu0 %v3370
    %3496 = vmatprep.subr.bf16.mxu0 0
    %3497 = vmatpush1.bf16.msra.mxu0 %v3371
    %3498 = vmatprep.subr.bf16.mxu0 0
    %3499 = vmatpush1.bf16.msra.mxu0 %v3488
    %3500 = vmatprep.subr.bf16.mxu0 0
    %3501 = vmatpush1.bf16.msra.mxu0 0
    %3502 = vmatprep.subr.bf16.mxu0 0
    %3503 = vmatpush1.bf16.msra.mxu0 0
    %3504 = vmatprep.subr.bf16.mxu0 0
    %3505 = vmatpush1.bf16.msra.mxu0 0
    %3506 = vmatprep.subr.bf16.mxu0 0
    %3507 = vmatpush1.bf16.msra.mxu0 0
    %3508 = vmatprep.subr.bf16.mxu0 0
    %3509 = vmatpush1.bf16.msra.mxu0 0
    %3510 = vmatprep.subr.bf16.mxu0 0
    %3511 = vmatpush1.bf16.msra.mxu0 0
    %3512 = vmatprep.subr.bf16.mxu0 0
    %3513 = vmatpush1.bf16.msra.mxu0 0
    %3514 = vmatprep.subr.bf16.mxu0 0
    %3515 = vmatpush1.bf16.msra.mxu0 0
    %3516 = vmatprep.subr.bf16.mxu0 0
    %3517 = vmatpush1.bf16.msra.mxu0 0
    %3518 = vmatprep.subr.bf16.mxu0 0
    %3519 = vmatpush1.bf16.msra.mxu0 0
    %3520 = vmatprep.subr.bf16.mxu0 0
    %3521 = vmatpush1.bf16.msra.mxu0 0
    %3522 = vmatprep.mubr.bf16.mxu0 0
    %3523 = vmatmul.mubr.bf16.gmra.mrb[0].mxu0 %v3379
    %v3524 = vpop.f32.mrb[0].mxu0
    %v3525 = vadd.f32 %v3348, %v3524
    %v3526 = vpop.f32.mrb[0].mxu0
    %v3527 = vpop.f32.mrb[0].mxu0
    %v3528 = vadd.f32 %v3348, %v3527
    %v3529 = vpop.f32.mrb[0].mxu0
    %3530 = vmatprep.mubr.bf16.mxu0 0
    %3531 = vmatmul.mubr.bf16.gmra.mrb[0].mxu0 %v3382
    %v3532 = vpop.f32.mrb[0].mxu0
    %v3533 = vadd.f32 %v3348, %v3532
    %v3534 = vpop.f32.mrb[0].mxu0
    %v3535 = vpop.f32.mrb[0].mxu0
    %v3536 = vadd.f32 %v3348, %v3535
    %v3537 = vpop.f32.mrb[0].mxu0
    %3538 = vmatprep.mubr.bf16.mxu0 0
    %3539 = vmatmul.mubr.bf16.gmra.mrb[0].mxu0 %v3385
    %v3540 = vpop.f32.mrb[0].mxu0
    %v3541 = vadd.f32 %v3348, %v3540
    %v3542 = vpop.f32.mrb[0].mxu0
    %v3543 = vpop.f32.mrb[0].mxu0
    %v3544 = vadd.f32 %v3348, %v3543
    %v3545 = vpop.f32.mrb[0].mxu0
    %3546 = vmatprep.mubr.bf16.mxu0 0
    %3547 = vmatmul.mubr.bf16.gmra.mrb[0].mxu0 %v3388
    %v3548 = vpop.f32.mrb[0].mxu0
    %v3549 = vadd.f32 %v3348, %v3548
    %v3550 = vpop.f32.mrb[0].mxu0
    %v3551 = vpop.f32.mrb[0].mxu0
    %v3552 = vadd.f32 %v3348, %v3551
    %v3553 = vpop.f32.mrb[0].mxu0
    %3554 = vmatprep.mubr.bf16.mxu0 0
    %3555 = vmatmul.mubr.bf16.gmra.mrb[0].mxu0 %v3391
    %v3556 = vpop.f32.mrb[0].mxu0
    %v3557 = vadd.f32 %v3348, %v3556
    %v3558 = vpop.f32.mrb[0].mxu0
    %v3559 = vpop.f32.mrb[0].mxu0
    %v3560 = vadd.f32 %v3348, %v3559
    %v3561 = vpop.f32.mrb[0].mxu0
    %3562 = vmatprep.mubr.bf16.mxu0 0
    %3563 = vmatmul.mubr.bf16.gmra.mrb[0].mxu0 %v3394
    %v3564 = vpop.f32.mrb[0].mxu0
    %v3565 = vadd.f32 %v3348, %v3564
    %v3566 = vpop.f32.mrb[0].mxu0
    %v3567 = vpop.f32.mrb[0].mxu0
    %v3568 = vadd.f32 %v3348, %v3567
    %v3569 = vpop.f32.mrb[0].mxu0
    %3570 = vmatprep.mubr.bf16.mxu0 0
    %3571 = vmatmul.mubr.bf16.gmra.mrb[0].mxu0 %v3397
    %v3572 = vpop.f32.mrb[0].mxu0
    %v3573 = vadd.f32 %v3348, %v3572
    %v3574 = vpop.f32.mrb[0].mxu0
    %v3575 = vpop.f32.mrb[0].mxu0
    %v3576 = vadd.f32 %v3348, %v3575
    %v3577 = vpop.f32.mrb[0].mxu0
    %3578 = vmatprep.mubr.bf16.mxu0 0
    %3579 = vmatmul.mubr.bf16.gmra.mrb[0].mxu0 %v3400
    %v3580 = vpop.f32.mrb[0].mxu0
    %v3581 = vadd.f32 %v3348, %v3580
    %v3582 = vpop.f32.mrb[0].mxu0
    %v3583 = vpop.f32.mrb[0].mxu0
    %v3584 = vadd.f32 %v3348, %v3583
    %v3585 = vpop.f32.mrb[0].mxu0
    %3586 = vmatprep.mubr.bf16.mxu0 0
    %3587 = vmatmul.mubr.bf16.gmra.mrb[0].mxu0 %v3403
    %v3588 = vpop.f32.mrb[0].mxu0
    %v3589 = vadd.f32 %v3348, %v3588
    %v3590 = vpop.f32.mrb[0].mxu0
    %v3591 = vpop.f32.mrb[0].mxu0
    %v3592 = vadd.f32 %v3348, %v3591
    %v3593 = vpop.f32.mrb[0].mxu0
    %3594 = vmatprep.mubr.bf16.mxu0 0
    %3595 = vmatmul.mubr.bf16.gmra.mrb[0].mxu0 %v3406
    %v3596 = vpop.f32.mrb[0].mxu0
    %v3597 = vadd.f32 %v3348, %v3596
    %v3598 = vpop.f32.mrb[0].mxu0
    %v3599 = vpop.f32.mrb[0].mxu0
    %v3600 = vadd.f32 %v3348, %v3599
    %v3601 = vpop.f32.mrb[0].mxu0
    %3602 = vmatprep.mubr.bf16.mxu0 0
    %3603 = vmatmul.mubr.bf16.gmra.mrb[0].mxu0 %v3409
    %v3604 = vpop.f32.mrb[0].mxu0
    %v3605 = vadd.f32 %v3348, %v3604
    %v3606 = vpop.f32.mrb[0].mxu0
    %v3607 = vpop.f32.mrb[0].mxu0
    %v3608 = vadd.f32 %v3348, %v3607
    %v3609 = vpop.f32.mrb[0].mxu0
    %3610 = vmatprep.mubr.bf16.mxu0 0
    %3611 = vmatmul.mubr.bf16.gmra.mrb[0].mxu0 %v3412
    %v3612 = vpop.f32.mrb[0].mxu0
    %v3613 = vadd.f32 %v3348, %v3612
    %v3614 = vpop.f32.mrb[0].mxu0
    %v3615 = vpop.f32.mrb[0].mxu0
    %v3616 = vadd.f32 %v3348, %v3615
    %v3617 = vpop.f32.mrb[0].mxu0
    %3618 = vmatprep.mubr.bf16.mxu0 0
    %3619 = vmatmul.mubr.bf16.gmra.mrb[0].mxu0 %v3415
    %v3620 = vpop.f32.mrb[0].mxu0
    %v3621 = vadd.f32 %v3348, %v3620
    %v3622 = vpop.f32.mrb[0].mxu0
    %v3623 = vpop.f32.mrb[0].mxu0
    %v3624 = vadd.f32 %v3348, %v3623
    %v3625 = vpop.f32.mrb[0].mxu0
    %3626 = vmatprep.mubr.bf16.mxu0 0
    %3627 = vmatmul.mubr.bf16.gmra.mrb[0].mxu0 %v3418
    %v3628 = vpop.f32.mrb[0].mxu0
    %v3629 = vadd.f32 %v3348, %v3628
    %v3630 = vpop.f32.mrb[0].mxu0
    %v3631 = vpop.f32.mrb[0].mxu0
    %v3632 = vadd.f32 %v3348, %v3631
    %v3633 = vpop.f32.mrb[0].mxu0
    %3634 = vmatprep.mubr.bf16.mxu0 0
    %3635 = vmatmul.mubr.bf16.gmra.mrb[0].mxu0 %v3421
    %v3636 = vpop.f32.mrb[0].mxu0
    %v3637 = vadd.f32 %v3348, %v3636
    %v3638 = vpop.f32.mrb[0].mxu0
    %v3639 = vpop.f32.mrb[0].mxu0
    %v3640 = vadd.f32 %v3348, %v3639
    %v3641 = vpop.f32.mrb[0].mxu0
    %3642 = vmatprep.mubr.bf16.mxu0 0
    %3643 = vmatmul.mubr.bf16.gmra.mrb[0].mxu0 %v3424
    %v3644 = vpop.f32.mrb[0].mxu0
    %v3645 = vadd.f32 %v3348, %v3644
    %v3646 = vpop.f32.mrb[0].mxu0
    %v3647 = vpop.f32.mrb[0].mxu0
    %v3648 = vadd.f32 %v3348, %v3647
    %v3649 = vpop.f32.mrb[0].mxu0
    %3650 = vmatprep.mubr.bf16.mxu0 0
    %3651 = vmatmul.mubr.bf16.gmra.mrb[0].mxu0 %v3427
    %v3652 = vpop.f32.mrb[0].mxu0
    %v3653 = vadd.f32 %v3348, %v3652
    %v3654 = vpop.f32.mrb[0].mxu0
    %v3655 = vpop.f32.mrb[0].mxu0
    %v3656 = vadd.f32 %v3348, %v3655
    %v3657 = vpop.f32.mrb[0].mxu0
    %3658 = vmatprep.mubr.bf16.mxu0 0
    %3659 = vmatmul.mubr.bf16.gmra.mrb[0].mxu0 %v3430
    %v3660 = vpop.f32.mrb[0].mxu0
    %v3661 = vadd.f32 %v3348, %v3660
    %v3662 = vpop.f32.mrb[0].mxu0
    %v3663 = vpop.f32.mrb[0].mxu0
    %v3664 = vadd.f32 %v3348, %v3663
    %v3665 = vpop.f32.mrb[0].mxu0
    %3666 = vmatprep.mubr.bf16.mxu0 0
    %3667 = vmatmul.mubr.bf16.gmra.mrb[0].mxu0 %v3433
    %v3668 = vpop.f32.mrb[0].mxu0
    %v3669 = vadd.f32 %v3348, %v3668
    %v3670 = vpop.f32.mrb[0].mxu0
    %v3671 = vpop.f32.mrb[0].mxu0
    %v3672 = vadd.f32 %v3348, %v3671
    %v3673 = vpop.f32.mrb[0].mxu0
    %3674 = vmatprep.mubr.bf16.mxu0 0
    %3675 = vmatmul.mubr.bf16.gmra.mrb[0].mxu0 %v3436
    %v3676 = vpop.f32.mrb[0].mxu0
    %v3677 = vadd.f32 %v3348, %v3676
    %v3678 = vpop.f32.mrb[0].mxu0
    %v3679 = vpop.f32.mrb[0].mxu0
    %v3680 = vadd.f32 %v3348, %v3679
    %v3681 = vpop.f32.mrb[0].mxu0
    %3682 = vmatprep.mubr.bf16.mxu0 0
    %3683 = vmatmul.mubr.bf16.gmra.mrb[0].mxu0 %v3439
    %v3684 = vpop.f32.mrb[0].mxu0
    %v3685 = vadd.f32 %v3348, %v3684
    %v3686 = vpop.f32.mrb[0].mxu0
    %v3687 = vpop.f32.mrb[0].mxu0
    %v3688 = vadd.f32 %v3348, %v3687
    %v3689 = vpop.f32.mrb[0].mxu0
    %3690 = vmatprep.mubr.bf16.mxu0 0
    %3691 = vmatmul.mubr.bf16.gmra.mrb[0].mxu0 %v3442
    %v3692 = vpop.f32.mrb[0].mxu0
    %v3693 = vadd.f32 %v3348, %v3692
    %v3694 = vpop.f32.mrb[0].mxu0
    %v3695 = vpop.f32.mrb[0].mxu0
    %v3696 = vadd.f32 %v3348, %v3695
    %v3697 = vpop.f32.mrb[0].mxu0
    %3698 = vmatprep.mubr.bf16.mxu0 0
    %3699 = vmatmul.mubr.bf16.gmra.mrb[0].mxu0 %v3445
    %v3700 = vpop.f32.mrb[0].mxu0
    %v3701 = vadd.f32 %v3348, %v3700
    %v3702 = vpop.f32.mrb[0].mxu0
    %v3703 = vpop.f32.mrb[0].mxu0
    %v3704 = vadd.f32 %v3348, %v3703
    %v3705 = vpop.f32.mrb[0].mxu0
    %3706 = vmatprep.mubr.bf16.mxu0 0
    %3707 = vmatmul.mubr.bf16.gmra.mrb[0].mxu0 %v3448
    %v3708 = vpop.f32.mrb[0].mxu0
    %v3709 = vadd.f32 %v3348, %v3708
    %v3710 = vpop.f32.mrb[0].mxu0
    %v3711 = vpop.f32.mrb[0].mxu0
    %v3712 = vadd.f32 %v3348, %v3711
    %v3713 = vpop.f32.mrb[0].mxu0
    %3714 = vmatprep.mubr.bf16.mxu0 0
    %3715 = vmatmul.mubr.bf16.gmra.mrb[0].mxu0 %v3451
    %v3716 = vpop.f32.mrb[0].mxu0
    %v3717 = vadd.f32 %v3348, %v3716
    %v3718 = vpop.f32.mrb[0].mxu0
    %v3719 = vpop.f32.mrb[0].mxu0
    %v3720 = vadd.f32 %v3348, %v3719
    %v3721 = vpop.f32.mrb[0].mxu0
    %3722 = vmatprep.mubr.bf16.mxu0 0
    %3723 = vmatmul.mubr.bf16.gmra.mrb[0].mxu0 %v3454
    %v3724 = vpop.f32.mrb[0].mxu0
    %v3725 = vadd.f32 %v3348, %v3724
    %v3726 = vpop.f32.mrb[0].mxu0
    %v3727 = vpop.f32.mrb[0].mxu0
    %v3728 = vadd.f32 %v3348, %v3727
    %v3729 = vpop.f32.mrb[0].mxu0
    %3730 = vmatprep.mubr.bf16.mxu0 0
    %3731 = vmatmul.mubr.bf16.gmra.mrb[0].mxu0 %v3457
    %v3732 = vpop.f32.mrb[0].mxu0
    %v3733 = vadd.f32 %v3348, %v3732
    %v3734 = vpop.f32.mrb[0].mxu0
    %v3735 = vpop.f32.mrb[0].mxu0
    %v3736 = vadd.f32 %v3348, %v3735
    %v3737 = vpop.f32.mrb[0].mxu0
    %3738 = vmatprep.mubr.bf16.mxu0 0
    %3739 = vmatmul.mubr.bf16.gmra.mrb[0].mxu0 %v3460
    %v3740 = vpop.f32.mrb[0].mxu0
    %v3741 = vadd.f32 %v3348, %v3740
    %v3742 = vpop.f32.mrb[0].mxu0
    %v3743 = vpop.f32.mrb[0].mxu0
    %v3744 = vadd.f32 %v3348, %v3743
    %v3745 = vpop.f32.mrb[0].mxu0
    %3746 = vmatprep.mubr.bf16.mxu0 0
    %3747 = vmatmul.mubr.bf16.gmra.mrb[0].mxu0 %v3463
    %v3748 = vpop.f32.mrb[0].mxu0
    %v3749 = vadd.f32 %v3348, %v3748
    %v3750 = vpop.f32.mrb[0].mxu0
    %v3751 = vpop.f32.mrb[0].mxu0
    %v3752 = vadd.f32 %v3348, %v3751
    %v3753 = vpop.f32.mrb[0].mxu0
    %3754 = vmatprep.mubr.bf16.mxu0 0
    %3755 = vmatmul.mubr.bf16.gmra.mrb[0].mxu0 %v3466
    %v3756 = vpop.f32.mrb[0].mxu0
    %v3757 = vadd.f32 %v3348, %v3756
    %v3758 = vpop.f32.mrb[0].mxu0
    %v3759 = vpop.f32.mrb[0].mxu0
    %v3760 = vadd.f32 %v3348, %v3759
    %v3761 = vpop.f32.mrb[0].mxu0
    %3762 = vmatprep.mubr.bf16.mxu0 0
    %3763 = vmatmul.mubr.bf16.gmra.mrb[0].mxu0 %v3469
    %v3764 = vpop.f32.mrb[0].mxu0
    %v3765 = vadd.f32 %v3348, %v3764
    %v3766 = vpop.f32.mrb[0].mxu0
    %v3767 = vpop.f32.mrb[0].mxu0
    %v3768 = vadd.f32 %v3348, %v3767
    %v3769 = vpop.f32.mrb[0].mxu0
    %3770 = vmatprep.mubr.bf16.mxu0 0
    %3771 = vmatmul.mubr.bf16.gmra.mrb[0].mxu0 %v3472
    %v3772 = vpop.f32.mrb[0].mxu0
    %v3773 = vadd.f32 %v3348, %v3772
    %v3774 = vpop.f32.mrb[0].mxu0
    %v3775 = vpop.f32.mrb[0].mxu0
    %v3776 = vadd.f32 %v3348, %v3775
    %v3777 = vpop.f32.mrb[0].mxu0
    %3778 = vmatprep.mubr.bf16.mxu0 0
    %3779 = vmatmul.mubr.bf16.gmra.mrb[0].mxu0 %v3475
    %v3780 = vpop.f32.mrb[0].mxu0
    %v3781 = vadd.f32 %v3348, %v3780
    %v3782 = vpop.f32.mrb[0].mxu0
    %v3783 = vpop.f32.mrb[0].mxu0
    %v3784 = vadd.f32 %v3348, %v3783
    %v3785 = vpop.f32.mrb[0].mxu0
    %3786 = vmatprep.mubr.bf16.mxu0 0
    %3787 = vmatmul.mubr.bf16.gmra.mrb[0].mxu0 %v3478
    %v3788 = vpop.f32.mrb[0].mxu0
    %v3789 = vadd.f32 %v3348, %v3788
    %v3790 = vpop.f32.mrb[0].mxu0
    %v3791 = vpop.f32.mrb[0].mxu0
    %v3792 = vadd.f32 %v3348, %v3791
    %v3793 = vpop.f32.mrb[0].mxu0
    %3794 = vmatprep.mubr.bf16.mxu0 0
    %3795 = vmatmul.mubr.bf16.gmra.mrb[0].mxu0 %v3481
    %v3796 = vpop.f32.mrb[0].mxu0
    %v3797 = vadd.f32 %v3348, %v3796
    %v3798 = vpop.f32.mrb[0].mxu0
    %v3799 = vpop.f32.mrb[0].mxu0
    %v3800 = vadd.f32 %v3348, %v3799
    %v3801 = vpop.f32.mrb[0].mxu0
    %3802 = vmatprep.mubr.bf16.mxu0 0
    %3803 = vmatmul.mubr.bf16.gmra.mrb[0].mxu0 %v3484
    %v3804 = vpop.f32.mrb[0].mxu0
    %v3805 = vadd.f32 %v3348, %v3804
    %v3806 = vpop.f32.mrb[0].mxu0
    %v3807 = vpop.f32.mrb[0].mxu0
    %v3808 = vadd.f32 %v3348, %v3807
    %v3809 = vpop.f32.mrb[0].mxu0
    %3810 = vdwg.mxu0
    %v3811 = vmax.f32 %v3525, 0.0
    %v3812 = vmax.f32 %v3528, 0.0
    %v3813 = vmax.f32 %v3533, 0.0
    %v3814 = vmax.f32 %v3536, 0.0
    %v3815 = vmax.f32 %v3541, 0.0
    %v3816 = vmax.f32 %v3544, 0.0
    %v3817 = vmax.f32 %v3549, 0.0
    %v3818 = vmax.f32 %v3552, 0.0
    %v3819 = vmax.f32 %v3557, 0.0
    %v3820 = vmax.f32 %v3560, 0.0
    %v3821 = vmax.f32 %v3565, 0.0
    %v3822 = vmax.f32 %v3568, 0.0
    %v3823 = vmax.f32 %v3573, 0.0
    %v3824 = vmax.f32 %v3576, 0.0
    %v3825 = vmax.f32 %v3581, 0.0
    %v3826 = vmax.f32 %v3584, 0.0
    %v3827 = vmax.f32 %v3589, 0.0
    %v3828 = vmax.f32 %v3592, 0.0
    %v3829 = vmax.f32 %v3597, 0.0
    %v3830 = vmax.f32 %v3600, 0.0
    %v3831 = vmax.f32 %v3605, 0.0
    %v3832 = vmax.f32 %v3608, 0.0
    %v3833 = vmax.f32 %v3613, 0.0
    %v3834 = vmax.f32 %v3616, 0.0
    %v3835 = vmax.f32 %v3621, 0.0
    %v3836 = vmax.f32 %v3624, 0.0
    %v3837 = vmax.f32 %v3629, 0.0
    %v3838 = vmax.f32 %v3632, 0.0
    %v3839 = vmax.f32 %v3637, 0.0
    %v3840 = vmax.f32 %v3640, 0.0
    %v3841 = vmax.f32 %v3645, 0.0
    %v3842 = vmax.f32 %v3648, 0.0
    %v3843 = vmax.f32 %v3653, 0.0
    %v3844 = vmax.f32 %v3656, 0.0
    %v3845 = vmax.f32 %v3661, 0.0
    %v3846 = vmax.f32 %v3664, 0.0
    %v3847 = vmax.f32 %v3669, 0.0
    %v3848 = vmax.f32 %v3672, 0.0
    %v3849 = vmax.f32 %v3677, 0.0
    %v3850 = vmax.f32 %v3680, 0.0
    %v3851 = vmax.f32 %v3685, 0.0
    %v3852 = vmax.f32 %v3688, 0.0
    %v3853 = vmax.f32 %v3693, 0.0
    %v3854 = vmax.f32 %v3696, 0.0
    %v3855 = vmax.f32 %v3701, 0.0
    %v3856 = vmax.f32 %v3704, 0.0
    %v3857 = vmax.f32 %v3709, 0.0
    %v3858 = vmax.f32 %v3712, 0.0
    %v3859 = vmax.f32 %v3717, 0.0
    %v3860 = vmax.f32 %v3720, 0.0
    %v3861 = vmax.f32 %v3725, 0.0
    %v3862 = vmax.f32 %v3728, 0.0
    %v3863 = vmax.f32 %v3733, 0.0
    %v3864 = vmax.f32 %v3736, 0.0
    %v3865 = vmax.f32 %v3741, 0.0
    %v3866 = vmax.f32 %v3744, 0.0
    %v3867 = vmax.f32 %v3749, 0.0
    %v3868 = vmax.f32 %v3752, 0.0
    %v3869 = vmax.f32 %v3757, 0.0
    %v3870 = vmax.f32 %v3760, 0.0
    %v3871 = vmax.f32 %v3765, 0.0
    %v3872 = vmax.f32 %v3768, 0.0
    %v3873 = vmax.f32 %v3773, 0.0
    %v3874 = vmax.f32 %v3776, 0.0
    %v3875 = vmax.f32 %v3781, 0.0
    %v3876 = vmax.f32 %v3784, 0.0
    %v3877 = vmax.f32 %v3789, 0.0
    %v3878 = vmax.f32 %v3792, 0.0
    %v3879 = vmax.f32 %v3797, 0.0
    %v3880 = vmax.f32 %v3800, 0.0
    %v3881 = vmax.f32 %v3805, 0.0
    %v3882 = vmax.f32 %v3808, 0.0
    %v3883 = vld [vmem:[%s1] sm:$0xff]
    %v3884 = vld [vmem:[%s1 + $0x8] sm:$0xff]
    %v3885 = vld [vmem:[%s1 + $0x10] sm:$0xff]
    %v3886 = vld [vmem:[%s1 + $0x18] sm:$0xff]
    %v3887 = vld [vmem:[%s1 + $0x20] sm:$0xff]
    %v3888 = vld [vmem:[%s1 + $0x28] sm:$0xff]
    %v3889 = vld [vmem:[%s1 + $0x30] sm:$0xff]
    %v3890 = vld [vmem:[%s1 + $0x38] sm:$0xff]
    %v3891 = vld [vmem:[%s1 + $0x40] sm:$0xff]
    %v3892 = vld [vmem:[%s1 + $0x48] sm:$0xff]
    %v3893 = vld [vmem:[%s1 + $0x50] sm:$0xff]
    %v3894 = vld [vmem:[%s1 + $0x58] sm:$0xff]
    %v3895 = vld [vmem:[%s1 + $0x60] sm:$0xff]
    %v3896 = vld [vmem:[%s1 + $0x68] sm:$0xff]
    %v3897 = vld [vmem:[%s1 + $0x70] sm:$0xff]
    %v3898 = vld [vmem:[%s1 + $0x78] sm:$0xff]
    %v3899 = vld [vmem:[%s1 + $0x80] sm:$0xff]
    %v3900 = vld [vmem:[%s1 + $0x88] sm:$0xff]
    %v3901 = vld [vmem:[%s1 + $0x90] sm:$0xff]
    %v3902 = vld [vmem:[%s1 + $0x98] sm:$0xff]
    %v3903 = vld [vmem:[%s1 + $0xa0] sm:$0xff]
    %v3904 = vld [vmem:[%s1 + $0xa8] sm:$0xff]
    %v3905 = vld [vmem:[%s1 + $0xb0] sm:$0xff]
    %v3906 = vld [vmem:[%s1 + $0xb8] sm:$0xff]
    %v3907 = vld [vmem:[%s1 + $0xc0] sm:$0xff]
    %v3908 = vld [vmem:[%s1 + $0xc8] sm:$0xff]
    %v3909 = vld [vmem:[%s1 + $0xd0] sm:$0xff]
    %v3910 = vld [vmem:[%s1 + $0xd8] sm:$0xff]
    %v3911 = vld [vmem:[%s1 + $0xe0] sm:$0xff]
    %v3912 = vld [vmem:[%s1 + $0xe8] sm:$0xff]
    %v3913 = vld [vmem:[%s1 + $0xf0] sm:$0xff]
    %v3914 = vld [vmem:[%s1 + $0xf8] sm:$0xff]
    %v3915 = vld [vmem:[%s1 + $0x100] sm:$0xff]
    %v3916 = vld [vmem:[%s1 + $0x108] sm:$0xff]
    %v3917 = vld [vmem:[%s1 + $0x110] sm:$0xff]
    %v3918 = vld [vmem:[%s1 + $0x118] sm:$0xff]
    %3920 = vset.pattern.permute.xlu0 0
    %3921 = vperm.xlu0 %3920, %v3883
    %v3922 = vpop.permute.xlu0 %3921
    %3925 = vset.pattern.permute.xlu0 0
    %3926 = vperm.xlu0 %3925, %v3884
    %v3927 = vpop.permute.xlu0 %3926
    %3930 = vset.pattern.permute.xlu0 0
    %3931 = vperm.xlu0 %3930, %v3885
    %v3932 = vpop.permute.xlu0 %3931
    %3935 = vset.pattern.permute.xlu0 0
    %3936 = vperm.xlu0 %3935, %v3886
    %v3937 = vpop.permute.xlu0 %3936
    %3940 = vset.pattern.permute.xlu0 0
    %3941 = vperm.xlu0 %3940, %v3887
    %v3942 = vpop.permute.xlu0 %3941
    %3945 = vset.pattern.permute.xlu0 0
    %3946 = vperm.xlu0 %3945, %v3888
    %v3947 = vpop.permute.xlu0 %3946
    %3950 = vset.pattern.permute.xlu0 0
    %3951 = vperm.xlu0 %3950, %v3889
    %v3952 = vpop.permute.xlu0 %3951
    %3955 = vset.pattern.permute.xlu0 0
    %3956 = vperm.xlu0 %3955, %v3890
    %v3957 = vpop.permute.xlu0 %3956
    %3960 = vset.pattern.permute.xlu0 0
    %3961 = vperm.xlu0 %3960, %v3891
    %v3962 = vpop.permute.xlu0 %3961
    %3965 = vset.pattern.permute.xlu0 0
    %3966 = vperm.xlu0 %3965, %v3892
    %v3967 = vpop.permute.xlu0 %3966
    %3970 = vset.pattern.permute.xlu0 0
    %3971 = vperm.xlu0 %3970, %v3893
    %v3972 = vpop.permute.xlu0 %3971
    %3975 = vset.pattern.permute.xlu0 0
    %3976 = vperm.xlu0 %3975, %v3894
    %v3977 = vpop.permute.xlu0 %3976
    %3980 = vset.pattern.permute.xlu0 0
    %3981 = vperm.xlu0 %3980, %v3895
    %v3982 = vpop.permute.xlu0 %3981
    %3985 = vset.pattern.permute.xlu0 0
    %3986 = vperm.xlu0 %3985, %v3896
    %v3987 = vpop.permute.xlu0 %3986
    %3990 = vset.pattern.permute.xlu0 0
    %3991 = vperm.xlu0 %3990, %v3897
    %v3992 = vpop.permute.xlu0 %3991
    %3995 = vset.pattern.permute.xlu0 0
    %3996 = vperm.xlu0 %3995, %v3898
    %v3997 = vpop.permute.xlu0 %3996
    %4000 = vset.pattern.permute.xlu0 0
    %4001 = vperm.xlu0 %4000, %v3899
    %v4002 = vpop.permute.xlu0 %4001
    %4005 = vset.pattern.permute.xlu0 0
    %4006 = vperm.xlu0 %4005, %v3900
    %v4007 = vpop.permute.xlu0 %4006
    %4010 = vset.pattern.permute.xlu0 0
    %4011 = vperm.xlu0 %4010, %v3901
    %v4012 = vpop.permute.xlu0 %4011
    %4015 = vset.pattern.permute.xlu0 0
    %4016 = vperm.xlu0 %4015, %v3902
    %v4017 = vpop.permute.xlu0 %4016
    %4020 = vset.pattern.permute.xlu0 0
    %4021 = vperm.xlu0 %4020, %v3903
    %v4022 = vpop.permute.xlu0 %4021
    %4025 = vset.pattern.permute.xlu0 0
    %4026 = vperm.xlu0 %4025, %v3904
    %v4027 = vpop.permute.xlu0 %4026
    %4030 = vset.pattern.permute.xlu0 0
    %4031 = vperm.xlu0 %4030, %v3905
    %v4032 = vpop.permute.xlu0 %4031
    %4035 = vset.pattern.permute.xlu0 0
    %4036 = vperm.xlu0 %4035, %v3906
    %v4037 = vpop.permute.xlu0 %4036
    %4040 = vset.pattern.permute.xlu0 0
    %4041 = vperm.xlu0 %4040, %v3907
    %v4042 = vpop.permute.xlu0 %4041
    %4045 = vset.pattern.permute.xlu0 0
    %4046 = vperm.xlu0 %4045, %v3908
    %v4047 = vpop.permute.xlu0 %4046
    %4050 = vset.pattern.permute.xlu0 0
    %4051 = vperm.xlu0 %4050, %v3909
    %v4052 = vpop.permute.xlu0 %4051
    %4055 = vset.pattern.permute.xlu0 0
    %4056 = vperm.xlu0 %4055, %v3910
    %v4057 = vpop.permute.xlu0 %4056
    %4060 = vset.pattern.permute.xlu0 0
    %4061 = vperm.xlu0 %4060, %v3911
    %v4062 = vpop.permute.xlu0 %4061
    %4065 = vset.pattern.permute.xlu0 0
    %4066 = vperm.xlu0 %4065, %v3912
    %v4067 = vpop.permute.xlu0 %4066
    %4070 = vset.pattern.permute.xlu0 0
    %4071 = vperm.xlu0 %4070, %v3913
    %v4072 = vpop.permute.xlu0 %4071
    %4075 = vset.pattern.permute.xlu0 0
    %4076 = vperm.xlu0 %4075, %v3914
    %v4077 = vpop.permute.xlu0 %4076
    %4080 = vset.pattern.permute.xlu0 0
    %4081 = vperm.xlu0 %4080, %v3915
    %v4082 = vpop.permute.xlu0 %4081
    %4085 = vset.pattern.permute.xlu0 0
    %4086 = vperm.xlu0 %4085, %v3916
    %v4087 = vpop.permute.xlu0 %4086
    %4090 = vset.pattern.permute.xlu0 0
    %4091 = vperm.xlu0 %4090, %v3917
    %v4092 = vpop.permute.xlu0 %4091
    %4095 = vset.pattern.permute.xlu0 0
    %4096 = vperm.xlu0 %4095, %v3918
    %v4097 = vpop.permute.xlu0 %4096
    %v4099 = vmul.f32 %v3811, %v3922
    %v4100 = vmul.f32 %v3812, %v3927
    %v4101 = vmul.f32 %v3813, %v3932
    %v4102 = vmul.f32 %v3814, %v3937
    %v4103 = vmul.f32 %v3815, %v3942
    %v4104 = vmul.f32 %v3816, %v3947
    %v4105 = vmul.f32 %v3817, %v3952
    %v4106 = vmul.f32 %v3818, %v3957
    %v4107 = vmul.f32 %v3819, %v3962
    %v4108 = vmul.f32 %v3820, %v3967
    %v4109 = vmul.f32 %v3821, %v3972
    %v4110 = vmul.f32 %v3822, %v3977
    %v4111 = vmul.f32 %v3823, %v3982
    %v4112 = vmul.f32 %v3824, %v3987
    %v4113 = vmul.f32 %v3825, %v3992
    %v4114 = vmul.f32 %v3826, %v3997
    %v4115 = vmul.f32 %v3827, %v4002
    %v4116 = vmul.f32 %v3828, %v4007
    %v4117 = vmul.f32 %v3829, %v4012
    %v4118 = vmul.f32 %v3830, %v4017
    %v4119 = vmul.f32 %v3831, %v4022
    %v4120 = vmul.f32 %v3832, %v4027
    %v4121 = vmul.f32 %v3833, %v4032
    %v4122 = vmul.f32 %v3834, %v4037
    %v4123 = vmul.f32 %v3835, %v4042
    %v4124 = vmul.f32 %v3836, %v4047
    %v4125 = vmul.f32 %v3837, %v4052
    %v4126 = vmul.f32 %v3838, %v4057
    %v4127 = vmul.f32 %v3839, %v4062
    %v4128 = vmul.f32 %v3840, %v4067
    %v4129 = vmul.f32 %v3841, %v4072
    %v4130 = vmul.f32 %v3842, %v4077
    %v4131 = vmul.f32 %v3843, %v4082
    %v4132 = vmul.f32 %v3844, %v4087
    %v4133 = vmul.f32 %v3845, %v4092
    %v4134 = vmul.f32 %v3846, %v4097
    %v4135 = vmul.f32 %v3847, %v3922
    %v4136 = vmul.f32 %v3848, %v3927
    %v4137 = vmul.f32 %v3849, %v3932
    %v4138 = vmul.f32 %v3850, %v3937
    %v4139 = vmul.f32 %v3851, %v3942
    %v4140 = vmul.f32 %v3852, %v3947
    %v4141 = vmul.f32 %v3853, %v3952
    %v4142 = vmul.f32 %v3854, %v3957
    %v4143 = vmul.f32 %v3855, %v3962
    %v4144 = vmul.f32 %v3856, %v3967
    %v4145 = vmul.f32 %v3857, %v3972
    %v4146 = vmul.f32 %v3858, %v3977
    %v4147 = vmul.f32 %v3859, %v3982
    %v4148 = vmul.f32 %v3860, %v3987
    %v4149 = vmul.f32 %v3861, %v3992
    %v4150 = vmul.f32 %v3862, %v3997
    %v4151 = vmul.f32 %v3863, %v4002
    %v4152 = vmul.f32 %v3864, %v4007
    %v4153 = vmul.f32 %v3865, %v4012
    %v4154 = vmul.f32 %v3866, %v4017
    %v4155 = vmul.f32 %v3867, %v4022
    %v4156 = vmul.f32 %v3868, %v4027
    %v4157 = vmul.f32 %v3869, %v4032
    %v4158 = vmul.f32 %v3870, %v4037
    %v4159 = vmul.f32 %v3871, %v4042
    %v4160 = vmul.f32 %v3872, %v4047
    %v4161 = vmul.f32 %v3873, %v4052
    %v4162 = vmul.f32 %v3874, %v4057
    %v4163 = vmul.f32 %v3875, %v4062
    %v4164 = vmul.f32 %v3876, %v4067
    %v4165 = vmul.f32 %v3877, %v4072
    %v4166 = vmul.f32 %v3878, %v4077
    %v4167 = vmul.f32 %v3879, %v4082
    %v4168 = vmul.f32 %v3880, %v4087
    %v4169 = vmul.f32 %v3881, %v4092
    %v4170 = vmul.f32 %v3882, %v4097
    %v4171 = vadd.f32 %v4099, %v4100
    %v4172 = vadd.f32 %v4171, %v4101
    %v4173 = vadd.f32 %v4172, %v4102
    %v4174 = vadd.f32 %v4173, %v4103
    %v4175 = vadd.f32 %v4174, %v4104
    %v4176 = vadd.f32 %v4175, %v4105
    %v4177 = vadd.f32 %v4176, %v4106
    %v4178 = vadd.f32 %v4177, %v4107
    %v4179 = vadd.f32 %v4178, %v4108
    %v4180 = vadd.f32 %v4179, %v4109
    %v4181 = vadd.f32 %v4180, %v4110
    %v4182 = vadd.f32 %v4181, %v4111
    %v4183 = vadd.f32 %v4182, %v4112
    %v4184 = vadd.f32 %v4183, %v4113
    %v4185 = vadd.f32 %v4184, %v4114
    %v4186 = vadd.f32 %v4185, %v4115
    %v4187 = vadd.f32 %v4186, %v4116
    %v4188 = vadd.f32 %v4187, %v4117
    %v4189 = vadd.f32 %v4188, %v4118
    %v4190 = vadd.f32 %v4189, %v4119
    %v4191 = vadd.f32 %v4190, %v4120
    %v4192 = vadd.f32 %v4191, %v4121
    %v4193 = vadd.f32 %v4192, %v4122
    %v4194 = vadd.f32 %v4193, %v4123
    %v4195 = vadd.f32 %v4194, %v4124
    %v4196 = vadd.f32 %v4195, %v4125
    %v4197 = vadd.f32 %v4196, %v4126
    %v4198 = vadd.f32 %v4197, %v4127
    %v4199 = vadd.f32 %v4198, %v4128
    %v4200 = vadd.f32 %v4199, %v4129
    %v4201 = vadd.f32 %v4200, %v4130
    %v4202 = vadd.f32 %v4201, %v4131
    %v4203 = vadd.f32 %v4202, %v4132
    %v4204 = vadd.f32 %v4203, %v4133
    %v4205 = vadd.f32 %v4204, %v4134
    %v4206 = vrot.slane %v4205, 4
    %v4207 = vadd.f32 %v4205, %v4206
    %v4208 = vrot.slane %v4207, 2
    %v4209 = vadd.f32 %v4207, %v4208
    %v4210 = vrot.slane %v4209, 1
    %v4211 = vadd.f32 %v4209, %v4210
    %v4212 = vadd.f32 %v4135, %v4136
    %v4213 = vadd.f32 %v4212, %v4137
    %v4214 = vadd.f32 %v4213, %v4138
    %v4215 = vadd.f32 %v4214, %v4139
    %v4216 = vadd.f32 %v4215, %v4140
    %v4217 = vadd.f32 %v4216, %v4141
    %v4218 = vadd.f32 %v4217, %v4142
    %v4219 = vadd.f32 %v4218, %v4143
    %v4220 = vadd.f32 %v4219, %v4144
    %v4221 = vadd.f32 %v4220, %v4145
    %v4222 = vadd.f32 %v4221, %v4146
    %v4223 = vadd.f32 %v4222, %v4147
    %v4224 = vadd.f32 %v4223, %v4148
    %v4225 = vadd.f32 %v4224, %v4149
    %v4226 = vadd.f32 %v4225, %v4150
    %v4227 = vadd.f32 %v4226, %v4151
    %v4228 = vadd.f32 %v4227, %v4152
    %v4229 = vadd.f32 %v4228, %v4153
    %v4230 = vadd.f32 %v4229, %v4154
    %v4231 = vadd.f32 %v4230, %v4155
    %v4232 = vadd.f32 %v4231, %v4156
    %v4233 = vadd.f32 %v4232, %v4157
    %v4234 = vadd.f32 %v4233, %v4158
    %v4235 = vadd.f32 %v4234, %v4159
    %v4236 = vadd.f32 %v4235, %v4160
    %v4237 = vadd.f32 %v4236, %v4161
    %v4238 = vadd.f32 %v4237, %v4162
    %v4239 = vadd.f32 %v4238, %v4163
    %v4240 = vadd.f32 %v4239, %v4164
    %v4241 = vadd.f32 %v4240, %v4165
    %v4242 = vadd.f32 %v4241, %v4166
    %v4243 = vadd.f32 %v4242, %v4167
    %v4244 = vadd.f32 %v4243, %v4168
    %v4245 = vadd.f32 %v4244, %v4169
    %v4246 = vadd.f32 %v4245, %v4170
    %v4247 = vrot.slane %v4246, 4
    %v4248 = vadd.f32 %v4246, %v4247
    %v4249 = vrot.slane %v4248, 2
    %v4250 = vadd.f32 %v4248, %v4249
    %v4251 = vrot.slane %v4250, 1
    %v4252 = vadd.f32 %v4250, %v4251
    %v4253 = vpack.c.bf16 %v4211, %v4211
    %v4254 = vpack.c.bf16 %v4252, %v4252
    %v4255 = vld [vmem:[%s4] sm:$0xf]
    %v4256 = vld [vmem:[%s4 + $0x4] sm:$0xf]
    %v4257 = vld [vmem:[%s4 + $0x8] sm:$0xf]
    %v4258 = vld [vmem:[%s4 + $0xc] sm:$0xf]
    %v4259 = vld [vmem:[%s4 + $0x10] sm:$0xf]
    %v4260 = vld [vmem:[%s4 + $0x14] sm:$0xf]
    %v4261 = vld [vmem:[%s4 + $0x18] sm:$0xf]
    %v4262 = vld [vmem:[%s4 + $0x1c] sm:$0xf]
    %v4263 = vld [vmem:[%s4 + $0x20] sm:$0xf]
    %v4264 = vld [vmem:[%s4 + $0x24] sm:$0xf]
    %v4265 = vld [vmem:[%s4 + $0x28] sm:$0xf]
    %v4266 = vld [vmem:[%s4 + $0x2c] sm:$0xf]
    %v4267 = vld [vmem:[%s4 + $0x30] sm:$0xf]
    %v4268 = vld [vmem:[%s4 + $0x34] sm:$0xf]
    %v4269 = vld [vmem:[%s4 + $0x38] sm:$0xf]
    %v4270 = vld [vmem:[%s4 + $0x3c] sm:$0xf]
    %v4271 = vld [vmem:[%s5] sm:$0x1]
    %v4273 = vlaneseq
    %v4274 = vshrl.u32 %v4273, 7
    %v4275 = vsub.s32 0, %v4274
    %v4276 = vrot.slane %v4271, %v4275
    %v4280 = vunpack.c.l.b16 %v4253
    %v4281 = vunpack.c.l.b16 %v4254
    %vm4282 = vcmask 1041409
    %v4283 = vsel %vm4282, %v4281, %v4280
    %v4284 = vpack.c.b16 %v4283, %v4283
    %v4302 = vunpack.c.l.b16 %v4255
    %v4303 = vunpack.c.l.b16 %v4256
    %v4304 = vunpack.c.l.b16 %v4257
    %v4305 = vunpack.c.l.b16 %v4258
    %v4306 = vunpack.c.l.b16 %v4259
    %v4307 = vunpack.c.l.b16 %v4260
    %v4308 = vunpack.c.l.b16 %v4261
    %v4309 = vunpack.c.l.b16 %v4262
    %v4310 = vunpack.c.l.b16 %v4263
    %v4311 = vunpack.c.l.b16 %v4264
    %v4312 = vunpack.c.l.b16 %v4265
    %v4313 = vunpack.c.l.b16 %v4266
    %v4314 = vunpack.c.l.b16 %v4267
    %v4315 = vunpack.c.l.b16 %v4268
    %v4316 = vunpack.c.l.b16 %v4269
    %v4317 = vunpack.c.l.b16 %v4270
    %v4318 = vpack.c.b16 %v4303, %v4302
    %v4319 = vpack.c.b16 %v4305, %v4304
    %v4320 = vpack.c.b16 %v4307, %v4306
    %v4321 = vpack.c.b16 %v4309, %v4308
    %v4322 = vpack.c.b16 %v4311, %v4310
    %v4323 = vpack.c.b16 %v4313, %v4312
    %v4324 = vpack.c.b16 %v4315, %v4314
    %v4325 = vpack.c.b16 %v4317, %v4316
    %4334 = vmatprep.subr.bf16.mxu0 0
    %4335 = vmatpush1.bf16.msra.mxu0 %v4318
    %4336 = vmatprep.subr.bf16.mxu0 0
    %4337 = vmatpush1.bf16.msra.mxu0 %v4319
    %4338 = vmatprep.subr.bf16.mxu0 0
    %4339 = vmatpush1.bf16.msra.mxu0 %v4320
    %4340 = vmatprep.subr.bf16.mxu0 0
    %4341 = vmatpush1.bf16.msra.mxu0 %v4321
    %4342 = vmatprep.subr.bf16.mxu0 0
    %4343 = vmatpush1.bf16.msra.mxu0 %v4322
    %4344 = vmatprep.subr.bf16.mxu0 0
    %4345 = vmatpush1.bf16.msra.mxu0 %v4323
    %4346 = vmatprep.subr.bf16.mxu0 0
    %4347 = vmatpush1.bf16.msra.mxu0 %v4324
    %4348 = vmatprep.subr.bf16.mxu0 0
    %4349 = vmatpush1.bf16.msra.mxu0 %v4325
    %4350 = vmatprep.subr.bf16.mxu0 0
    %4351 = vmatpush1.bf16.msra.mxu0 0
    %4352 = vmatprep.subr.bf16.mxu0 0
    %4353 = vmatpush1.bf16.msra.mxu0 0
    %4354 = vmatprep.subr.bf16.mxu0 0
    %4355 = vmatpush1.bf16.msra.mxu0 0
    %4356 = vmatprep.subr.bf16.mxu0 0
    %4357 = vmatpush1.bf16.msra.mxu0 0
    %4358 = vmatprep.subr.bf16.mxu0 0
    %4359 = vmatpush1.bf16.msra.mxu0 0
    %4360 = vmatprep.subr.bf16.mxu0 0
    %4361 = vmatpush1.bf16.msra.mxu0 0
    %4362 = vmatprep.subr.bf16.mxu0 0
    %4363 = vmatpush1.bf16.msra.mxu0 0
    %4364 = vmatprep.subr.bf16.mxu0 0
    %4365 = vmatpush1.bf16.msra.mxu0 0
    %4366 = vmatprep.mubr.bf16.mxu0 0
    %4367 = vmatmul.mubr.bf16.gmra.mrb[0].mxu0 %v4284
    %v4368 = vpop.f32.mrb[0].mxu0
    %v4369 = vadd.f32 %v4276, %v4368
    %v4370 = vpop.f32.mrb[0].mxu0
    %v4371 = vpop.f32.mrb[0].mxu0
    %v4372 = vpop.f32.mrb[0].mxu0
    %4373 = vdwg.mxu0
    %v4374 = vmax.f32 %v4369, 0.0
    %v4375 = vpack.c.bf16 %v4374, %v4374
    %v4376 = vld [vmem:[%s6] sm:$0xf]
    %v4377 = vld [vmem:[%s6 + $0x4] sm:$0xf]
    %v4378 = vld [vmem:[%s6 + $0x8] sm:$0xf]
    %v4379 = vld [vmem:[%s6 + $0xc] sm:$0xf]
    %v4380 = vld [vmem:[%s6 + $0x10] sm:$0xf]
    %v4381 = vld [vmem:[%s6 + $0x14] sm:$0xf]
    %v4382 = vld [vmem:[%s6 + $0x18] sm:$0xf]
    %v4383 = vld [vmem:[%s6 + $0x1c] sm:$0xf]
    %v4384 = vld [vmem:[%s6 + $0x20] sm:$0xf]
    %v4385 = vld [vmem:[%s6 + $0x24] sm:$0xf]
    %v4386 = vld [vmem:[%s6 + $0x28] sm:$0xf]
    %v4387 = vld [vmem:[%s6 + $0x2c] sm:$0xf]
    %v4388 = vld [vmem:[%s6 + $0x30] sm:$0xf]
    %v4389 = vld [vmem:[%s6 + $0x34] sm:$0xf]
    %v4390 = vld [vmem:[%s6 + $0x38] sm:$0xf]
    %v4391 = vld [vmem:[%s6 + $0x3c] sm:$0xf]
    %v4392 = vld [vmem:[%s7] sm:$0x1]
    %v4394 = vlaneseq
    %v4395 = vshrl.u32 %v4394, 7
    %v4396 = vsub.s32 0, %v4395
    %v4397 = vrot.slane %v4392, %v4396
    %v4415 = vunpack.c.l.b16 %v4376
    %v4416 = vunpack.c.l.b16 %v4377
    %v4417 = vunpack.c.l.b16 %v4378
    %v4418 = vunpack.c.l.b16 %v4379
    %v4419 = vunpack.c.l.b16 %v4380
    %v4420 = vunpack.c.l.b16 %v4381
    %v4421 = vunpack.c.l.b16 %v4382
    %v4422 = vunpack.c.l.b16 %v4383
    %v4423 = vunpack.c.l.b16 %v4384
    %v4424 = vunpack.c.l.b16 %v4385
    %v4425 = vunpack.c.l.b16 %v4386
    %v4426 = vunpack.c.l.b16 %v4387
    %v4427 = vunpack.c.l.b16 %v4388
    %v4428 = vunpack.c.l.b16 %v4389
    %v4429 = vunpack.c.l.b16 %v4390
    %v4430 = vunpack.c.l.b16 %v4391
    %v4431 = vpack.c.b16 %v4416, %v4415
    %v4432 = vpack.c.b16 %v4418, %v4417
    %v4433 = vpack.c.b16 %v4420, %v4419
    %v4434 = vpack.c.b16 %v4422, %v4421
    %v4435 = vpack.c.b16 %v4424, %v4423
    %v4436 = vpack.c.b16 %v4426, %v4425
    %v4437 = vpack.c.b16 %v4428, %v4427
    %v4438 = vpack.c.b16 %v4430, %v4429
    %4447 = vmatprep.subr.bf16.mxu0 0
    %4448 = vmatpush1.bf16.msra.mxu0 %v4431
    %4449 = vmatprep.subr.bf16.mxu0 0
    %4450 = vmatpush1.bf16.msra.mxu0 %v4432
    %4451 = vmatprep.subr.bf16.mxu0 0
    %4452 = vmatpush1.bf16.msra.mxu0 %v4433
    %4453 = vmatprep.subr.bf16.mxu0 0
    %4454 = vmatpush1.bf16.msra.mxu0 %v4434
    %4455 = vmatprep.subr.bf16.mxu0 0
    %4456 = vmatpush1.bf16.msra.mxu0 %v4435
    %4457 = vmatprep.subr.bf16.mxu0 0
    %4458 = vmatpush1.bf16.msra.mxu0 %v4436
    %4459 = vmatprep.subr.bf16.mxu0 0
    %4460 = vmatpush1.bf16.msra.mxu0 %v4437
    %4461 = vmatprep.subr.bf16.mxu0 0
    %4462 = vmatpush1.bf16.msra.mxu0 %v4438
    %4463 = vmatprep.subr.bf16.mxu0 0
    %4464 = vmatpush1.bf16.msra.mxu0 0
    %4465 = vmatprep.subr.bf16.mxu0 0
    %4466 = vmatpush1.bf16.msra.mxu0 0
    %4467 = vmatprep.subr.bf16.mxu0 0
    %4468 = vmatpush1.bf16.msra.mxu0 0
    %4469 = vmatprep.subr.bf16.mxu0 0
    %4470 = vmatpush1.bf16.msra.mxu0 0
    %4471 = vmatprep.subr.bf16.mxu0 0
    %4472 = vmatpush1.bf16.msra.mxu0 0
    %4473 = vmatprep.subr.bf16.mxu0 0
    %4474 = vmatpush1.bf16.msra.mxu0 0
    %4475 = vmatprep.subr.bf16.mxu0 0
    %4476 = vmatpush1.bf16.msra.mxu0 0
    %4477 = vmatprep.subr.bf16.mxu0 0
    %4478 = vmatpush1.bf16.msra.mxu0 0
    %4479 = vmatprep.mubr.bf16.mxu0 0
    %4480 = vmatmul.mubr.bf16.gmra.mrb[0].mxu0 %v4375
    %v4481 = vpop.f32.mrb[0].mxu0
    %v4482 = vadd.f32 %v4397, %v4481
    %v4483 = vpop.f32.mrb[0].mxu0
    %v4484 = vpop.f32.mrb[0].mxu0
    %v4485 = vpop.f32.mrb[0].mxu0
    %4486 = vdwg.mxu0
    %v4489 = vsel %vm4282, %v4252, %v4211
    %4491 = vst [vmem:[#allocation2] sm:$0x3] %v4489
    %4492 = vst [vmem:[#allocation4] sm:$0x3] %v4482
    // Predicated region
    $region34: #{simclr_forward_fused.1} parent=1 // pred_check
      _
    $region35: #{simclr_forward_fused.1} parent=1 // pred_check_branch
      %4494 = sbr.rel (0) target = $region37
    $region36: #{simclr_forward_fused.1} parent=1 // pred_region
      %s4496 = ssub.s32 32, 32
      %4497 = vsyncadd [#allocation3], %s4496
      %s4499 = sshll.u32 [#allocation2], 4
      %s4500 = int_to_ptr.vmem [resolvable:$true] %s4499
      %4502 = dma.vmem_to_hbm [thread:$0]  %s4500, 32, %s8, [#allocation3]
    $region37: #{simclr_forward_fused.1} parent=1 // pred_fallthru
      _
    // Predicated region
    $region38: #{simclr_forward_fused.1} parent=1 // pred_check
      _
    $region39: #{simclr_forward_fused.1} parent=1 // pred_check_branch
      %4504 = sbr.rel (0) target = $region41
    $region40: #{simclr_forward_fused.1} parent=1 // pred_region
      %s4506 = ssub.s32 32, 32
      %4507 = vsyncadd [#allocation5], %s4506
      %s4509 = sshll.u32 [#allocation4], 4
      %s4510 = int_to_ptr.vmem [resolvable:$true] %s4509
      %4512 = dma.vmem_to_hbm [thread:$0]  %s4510, 32, %s9, [#allocation5]
    $region41: #{simclr_forward_fused.1} parent=1 // pred_fallthru
      _
    // Predicated region
    $region42: #{simclr_forward_fused.1} parent=1 // pred_check
      _
    $region43: #{simclr_forward_fused.1} parent=1 // pred_check_branch
      %4514 = sbr.rel (0) target = $region45
    $region44: #{simclr_forward_fused.1} parent=1 // pred_region
      %4515 = dma.done [#allocation3], 32
    $region45: #{simclr_forward_fused.1} parent=1 // pred_fallthru
      _
    // Predicated region
    $region46: #{simclr_forward_fused.1} parent=1 // pred_check
      _
    $region47: #{simclr_forward_fused.1} parent=1 // pred_check_branch
      %4517 = sbr.rel (0) target = $region49
    $region48: #{simclr_forward_fused.1} parent=1 // pred_region
      %4518 = dma.done [#allocation5], 32
    $region49: #{simclr_forward_fused.1} parent=1 // pred_fallthru
      _
    %4519 = vsyncpa [#allocation3], 1
    %4520 = vsyncpa [#allocation5], 1

</llo_original>
